<compile_context>
chip_gen: v6e
topology: v6e:2x2x1
jax: 0.10.0
libtpu: 0.0.40
codegen_flags: <defaults>
</compile_context>

<pallas_src>
import functools
import math

import jax
import jax.numpy as jnp
from jax.experimental import pallas as pl
from jax.experimental.pallas import tpu as pltpu

EPS = 1e-5  # PyTorch LayerNorm default eps


def _layernorm(x, w, b):
    x = x.astype(jnp.float32)
    mu = jnp.mean(x, axis=-1, keepdims=True)
    var = jnp.mean((x - mu) ** 2, axis=-1, keepdims=True)
    return (x - mu) * jax.lax.rsqrt(var + EPS) * w + b


# --------------------------------------------------------------------------
# Fused kernel: grid = (depth,).  Layer 0 also does the patch embedding,
# the last layer also does pooling + classification head.
# --------------------------------------------------------------------------
def _vit_kernel(patches_ref, valid_ref, pe_ln1w_ref, pe_ln1b_ref, pe_w_ref,
                pe_b_ref, pe_ln2w_ref, pe_ln2b_ref, clspos_ref,
                wqkv_ref, bqkv_ref, wo_ref, bo_ref, ln1w_ref, ln1b_ref,
                w1_ref, b1_ref, w2_ref, b2_ref, ln2w_ref, ln2b_ref,
                head_lnw_ref, head_lnb_ref, head_w_ref, head_b_ref,
                hidden_ref, logits_ref, x_vmem, xb_vmem, attn_vmem,
                *, B, S, heads, pool):
    layer = pl.program_id(0)
    D = x_vmem.shape[1]
    hd = D // heads

    # ---- layer 0 only: LayerNorm -> Linear -> LayerNorm patch embedding,
    #      prepend cls token, add positional embedding.  The patch slab is
    #      padded with a zero row at every cls position (wrapper), so this is
    #      a single dense (B*S, D) add + store.
    @pl.when(layer == 0)
    def _init():
        pat = patches_ref[...].astype(jnp.float32)                    # (B*S, P)
        pn = _layernorm(pat, pe_ln1w_ref[...], pe_ln1b_ref[...])
        emb = jnp.dot(pn.astype(jnp.bfloat16), pe_w_ref[...],
                      preferred_element_type=jnp.float32) + pe_b_ref[...]
        emb = _layernorm(emb, pe_ln2w_ref[...], pe_ln2b_ref[...])     # (B*S, D)
        x0 = clspos_ref[...] + emb * valid_ref[...]   # zero out cls-placeholder rows
        x_vmem[...] = x0
        xb_vmem[...] = x0.astype(jnp.bfloat16)

    # ---- transformer encoder layer `layer` (post-norm, ReLU FFN) ---------
    x = x_vmem[...]        # (B*S, D) f32 residual stream
    xb = xb_vmem[...]      # bf16 copy for the MXU (no per-layer re-cast)

    qkv = jnp.dot(xb, wqkv_ref[0],
                  preferred_element_type=jnp.float32) + bqkv_ref[0]    # (B*S, 3D)

    # Attention per batch element (scores are (S,S), no cross-batch work, no
    # mask) and per head; each head's output is written directly into the
    # (B*S, D) VMEM scratch instead of a lane-wise concatenate.
    for bi in range(B):                                                # static, tiny B
        r0 = bi * S
        for h in range(heads):                                         # static unroll
            c0 = h * hd
            q = qkv[r0:r0 + S, c0:c0 + hd].astype(jnp.bfloat16)
            k = qkv[r0:r0 + S, D + c0:D + c0 + hd].astype(jnp.bfloat16)
            v = qkv[r0:r0 + S, 2 * D + c0:2 * D + c0 + hd].astype(jnp.bfloat16)
            s = jax.lax.dot_general(q, k, (((1,), (1,)), ((), ())),
                                    preferred_element_type=jnp.float32)  # (S, S)
            s = s - jnp.max(s, axis=-1, keepdims=True)
            p = jnp.exp(s)
            p = p * pl.reciprocal(jnp.sum(p, axis=-1, keepdims=True), approx=True)
            attn_vmem[r0:r0 + S, c0:c0 + hd] = jnp.dot(
                p.astype(jnp.bfloat16), v, preferred_element_type=jnp.float32)

    attn = jnp.dot(attn_vmem[...].astype(jnp.bfloat16), wo_ref[0],
                   preferred_element_type=jnp.float32) + bo_ref[0]     # (B*S, D)

    h1 = _layernorm(x + attn, ln1w_ref[0], ln1b_ref[0])
    ff = jnp.dot(h1.astype(jnp.bfloat16), w1_ref[0],
                 preferred_element_type=jnp.float32) + b1_ref[0]
    ff = jnp.maximum(ff, 0.0)                                          # ReLU
    ff = jnp.dot(ff.astype(jnp.bfloat16), w2_ref[0],
                 preferred_element_type=jnp.float32) + b2_ref[0]
    out = _layernorm(h1 + ff, ln2w_ref[0], ln2b_ref[0])                # (B*S, D)

    out_b = out.astype(jnp.bfloat16)
    x_vmem[...] = out                  # f32 carry to next layer (stays in VMEM)
    xb_vmem[...] = out_b               # bf16 carry for next layer's matmuls
    hidden_ref[0] = out_b              # per-layer hidden state, bf16 (half HBM traffic)

    # ---- last layer only: pool + LayerNorm + Linear head -----------------
    @pl.when(layer == pl.num_programs(0) - 1)
    def _head():
        rows = []
        for bi in range(B):            # static unroll, tiny B
            if pool == "mean":
                rows.append(jnp.mean(out[bi * S:(bi + 1) * S, :], axis=0,
                                     keepdims=True))
            else:                      # 'cls'
                rows.append(out[bi * S:bi * S + 1, :])
        pooled = jnp.concatenate(rows, axis=0)                         # (B, D)
        pn = _layernorm(pooled, head_lnw_ref[...], head_lnb_ref[...])
        logits_ref[...] = (jnp.dot(pn.astype(jnp.bfloat16), head_w_ref[...],
                                   preferred_element_type=jnp.float32)
                           + head_b_ref[...])


# --------------------------------------------------------------------------
# Parameter construction (deterministic, synthetic, PyTorch-shaped) & packing
# --------------------------------------------------------------------------
def init_params(key, *, patch_dim, dim, depth, heads, mlp_dim, num_patches,
                num_classes):
    ks = iter(jax.random.split(key, 8 + depth * 6))

    def randn(shape, scale=0.02):
        return jax.random.normal(next(ks), shape, jnp.float32) * scale

    params = {
        "cls_token": jax.random.normal(next(ks), (1, 1, dim), jnp.float32),
        "pos_embedding": jax.random.normal(next(ks), (1, num_patches + 1, dim),
                                           jnp.float32),
        "pe_ln1w": jnp.ones((1, patch_dim), jnp.float32),
        "pe_ln1b": jnp.zeros((1, patch_dim), jnp.float32),
        "pe_w_t": randn((patch_dim, dim)),              # (in, out)
        "pe_b": jnp.zeros((1, dim), jnp.float32),
        "pe_ln2w": jnp.ones((1, dim), jnp.float32),
        "pe_ln2b": jnp.zeros((1, dim), jnp.float32),
        "head_lnw": jnp.ones((1, dim), jnp.float32),
        "head_lnb": jnp.zeros((1, dim), jnp.float32),
        "head_w_t": randn((dim, num_classes)),
        "head_b": jnp.zeros((1, num_classes), jnp.float32),
        "layers": [],
    }
    for _ in range(depth):
        params["layers"].append({
            "wqkv_t": randn((dim, 3 * dim)),            # in_proj_weight.T
            "bqkv": jnp.zeros((1, 3 * dim), jnp.float32),
            "wo_t": randn((dim, dim)),                  # out_proj.weight.T
            "bo": jnp.zeros((1, dim), jnp.float32),
            "ln1w": jnp.ones((1, dim), jnp.float32),
            "ln1b": jnp.zeros((1, dim), jnp.float32),
            "w1_t": randn((dim, mlp_dim)),
            "b1": jnp.zeros((1, mlp_dim), jnp.float32),
            "w2_t": randn((mlp_dim, dim)),
            "b2": jnp.zeros((1, dim), jnp.float32),
            "ln2w": jnp.ones((1, dim), jnp.float32),
            "ln2b": jnp.zeros((1, dim), jnp.float32),
        })
    return params


def _pack_layer_params(layers, dim, heads):
    """Stack per-layer weights along a leading `depth` axis, fold the
    1/sqrt(head_dim) query scale into the QKV weights, cast matmul weights to
    bf16 (f32 accumulation happens on the MXU)."""
    hd = dim // heads
    scale = 1.0 / math.sqrt(hd)
    qscale = jnp.concatenate([jnp.full((dim,), scale, jnp.float32),
                              jnp.ones((2 * dim,), jnp.float32)])

    def stack(name):
        return jnp.stack([lyr[name] for lyr in layers], axis=0)

    wqkv = stack("wqkv_t") * qscale[None, None, :]
    bqkv = stack("bqkv") * qscale[None, None, :]
    return dict(
        wqkv=wqkv.astype(jnp.bfloat16), bqkv=bqkv,
        wo=stack("wo_t").astype(jnp.bfloat16), bo=stack("bo"),
        ln1w=stack("ln1w"), ln1b=stack("ln1b"),
        w1=stack("w1_t").astype(jnp.bfloat16), b1=stack("b1"),
        w2=stack("w2_t").astype(jnp.bfloat16), b2=stack("b2"),
        ln2w=stack("ln2w"), ln2b=stack("ln2b"),
    )


# --------------------------------------------------------------------------
# Full forward pass
# --------------------------------------------------------------------------
@functools.partial(jax.jit, static_argnames=("patch_hw", "frame_patch", "heads",
                                             "pool"))
def vit_forward(video, params, *, patch_hw, frame_patch, heads, pool="cls"):
    b, c, F_, H_, W_ = video.shape
    ph = pw = patch_hw
    pf = frame_patch
    f, h, w = F_ // pf, H_ // ph, W_ // pw

    # einops 'b c (f pf) (h p1) (w p2) -> b (f h w) (p1 p2 pf c)'  (XLA glue)
    x = video.reshape(b, c, f, pf, h, ph, w, pw)
    x = jnp.transpose(x, (0, 2, 4, 6, 5, 7, 3, 1))
    n = f * h * w
    patch_dim = ph * pw * pf * c
    patches = x.reshape(b, n, patch_dim)

    dim = params["pe_w_t"].shape[1]
    depth = len(params["layers"])
    mlp_dim = params["layers"][0]["w1_t"].shape[1]
    num_classes = params["head_w_t"].shape[1]
    S = n + 1
    M = b * S

    # zero "cls placeholder" row in front of every batch element's patches so
    # the in-kernel patch-embed output aligns row-for-row with the hidden slab
    patches_padded = jnp.concatenate(
        [jnp.zeros((b, 1, patch_dim), jnp.float32), patches], axis=1
    ).reshape(M, patch_dim)
    # valid = 0.0 at cls rows, 1.0 at patch rows (tiny (M,1) column)
    valid = jnp.tile(
        jnp.concatenate([jnp.zeros((1, 1), jnp.float32),
                         jnp.ones((S - 1, 1), jnp.float32)], axis=0), (b, 1))
    # row s = pos[s] (+ cls token at s == 0), tiled per batch -> (B*S, D)
    clspos = params["pos_embedding"][0, :S, :].at[0, :].add(
        params["cls_token"][0, 0, :])
    clspos_full = jnp.tile(clspos, (b, 1))

    packed = _pack_layer_params(params["layers"], dim, heads)

    def const(shape):
        return pl.BlockSpec(shape, lambda l: (0,) * len(shape))

    def perlayer(shape):
        return pl.BlockSpec((1,) + shape, lambda l: (l, 0, 0))

    in_specs = [
        const((M, patch_dim)),                           # patches (padded)
        const((M, 1)),                                   # cls-row mask
        const((1, patch_dim)), const((1, patch_dim)),    # pe LN1
        const((patch_dim, dim)), const((1, dim)),        # pe linear
        const((1, dim)), const((1, dim)),                # pe LN2
        const((M, dim)),                                 # cls + pos, tiled
        perlayer((dim, 3 * dim)), perlayer((1, 3 * dim)),
        perlayer((dim, dim)), perlayer((1, dim)),
        perlayer((1, dim)), perlayer((1, dim)),
        perlayer((dim, mlp_dim)), perlayer((1, mlp_dim)),
        perlayer((mlp_dim, dim)), perlayer((1, dim)),
        perlayer((1, dim)), perlayer((1, dim)),
        const((1, dim)), const((1, dim)),                # head LN
        const((dim, num_classes)), const((1, num_classes)),
    ]
    out_specs = [
        pl.BlockSpec((1, M, dim), lambda l: (l, 0, 0)),    # per-layer hidden (bf16)
        pl.BlockSpec((b, num_classes), lambda l: (0, 0)),  # logits (resident)
    ]
    out_shape = [
        jax.ShapeDtypeStruct((depth, M, dim), jnp.bfloat16),
        jax.ShapeDtypeStruct((b, num_classes), jnp.float32),
    ]

    kernel = functools.partial(_vit_kernel, B=b, S=S, heads=heads, pool=pool)
    hidden_all, logits = pl.pallas_call(
        kernel,
        grid=(depth,),
        in_specs=in_specs,
        out_specs=out_specs,
        out_shape=out_shape,
        scratch_shapes=[
            pltpu.VMEM((M, dim), jnp.float32),    # resident f32 hidden state
            pltpu.VMEM((M, dim), jnp.bfloat16),   # resident bf16 copy for MXU
            pltpu.VMEM((M, dim), jnp.float32),    # per-head attention output slab
        ],
        compiler_params=pltpu.CompilerParams(
            dimension_semantics=("arbitrary",),   # layers are sequential
            # plenty for this config; recompute from buffer sizes at production
            # dims (<= ~56 MiB on v7x, up to ~110 MiB on v6e)
            vmem_limit_bytes=32 * 1024 * 1024,
        ),
    )(patches_padded, valid,
      params["pe_ln1w"], params["pe_ln1b"],
      params["pe_w_t"].astype(jnp.bfloat16), params["pe_b"],
      params["pe_ln2w"], params["pe_ln2b"],
      clspos_full,
      packed["wqkv"], packed["bqkv"], packed["wo"], packed["bo"],
      packed["ln1w"], packed["ln1b"], packed["w1"], packed["b1"],
      packed["w2"], packed["b2"], packed["ln2w"], packed["ln2b"],
      params["head_lnw"], params["head_lnb"],
      params["head_w_t"].astype(jnp.bfloat16), params["head_b"])

    hidden_states_out = [hidden_all[i].reshape(b, S, dim) for i in range(depth)]
    return logits, hidden_states_out


# --------------------------------------------------------------------------
if __name__ == "__main__":
    # Small config consistent with the module's constructor
    image_size = 16
    image_patch_size = 8
    frames = 4
    frame_patch_size = 2
    channels = 3
    num_classes = 5
    dim = 32
    depth = 2
    heads = 4
    mlp_dim = 64
    batch = 2

    num_patches = (image_size // image_patch_size) ** 2 * (frames // frame_patch_size)
    patch_dim = channels * image_patch_size * image_patch_size * frame_patch_size

    key = jax.random.PRNGKey(0)
    k_video, k_params = jax.random.split(key)
    video = jax.random.normal(
        k_video, (batch, channels, frames, image_size, image_size), jnp.float32)

    params = init_params(k_params, patch_dim=patch_dim, dim=dim, depth=depth,
                         heads=heads, mlp_dim=mlp_dim, num_patches=num_patches,
                         num_classes=num_classes)

    logits, hidden = vit_forward(video, params,
                                 patch_hw=image_patch_size,
                                 frame_patch=frame_patch_size,
                                 heads=heads, pool="cls")
    jax.block_until_ready(logits)
    for hs in hidden:
        jax.block_until_ready(hs)

    assert logits.shape == (batch, num_classes)
    assert len(hidden) == depth
    assert all(hs.shape == (batch, num_patches + 1, dim) for hs in hidden)
    assert bool(jnp.all(jnp.isfinite(logits)))
    print("KERNEL_OK")
</pallas_src>

<mosaic_0001>
module attributes {stable_mosaic.version = 11 : i64} {
  func.func @_vit_kernel(%arg0: i32, %arg1: memref<18x384xf32, #tpu.memory_space<vmem>>, %arg2: memref<18x1xf32, #tpu.memory_space<vmem>>, %arg3: memref<1x384xf32, #tpu.memory_space<vmem>>, %arg4: memref<1x384xf32, #tpu.memory_space<vmem>>, %arg5: memref<384x32xbf16, #tpu.memory_space<vmem>>, %arg6: memref<1x32xf32, #tpu.memory_space<vmem>>, %arg7: memref<1x32xf32, #tpu.memory_space<vmem>>, %arg8: memref<1x32xf32, #tpu.memory_space<vmem>>, %arg9: memref<18x32xf32, #tpu.memory_space<vmem>>, %arg10: memref<1x32x96xbf16, #tpu.memory_space<vmem>>, %arg11: memref<1x1x96xf32, #tpu.memory_space<vmem>>, %arg12: memref<1x32x32xbf16, #tpu.memory_space<vmem>>, %arg13: memref<1x1x32xf32, #tpu.memory_space<vmem>>, %arg14: memref<1x1x32xf32, #tpu.memory_space<vmem>>, %arg15: memref<1x1x32xf32, #tpu.memory_space<vmem>>, %arg16: memref<1x32x64xbf16, #tpu.memory_space<vmem>>, %arg17: memref<1x1x64xf32, #tpu.memory_space<vmem>>, %arg18: memref<1x64x32xbf16, #tpu.memory_space<vmem>>, %arg19: memref<1x1x32xf32, #tpu.memory_space<vmem>>, %arg20: memref<1x1x32xf32, #tpu.memory_space<vmem>>, %arg21: memref<1x1x32xf32, #tpu.memory_space<vmem>>, %arg22: memref<1x32xf32, #tpu.memory_space<vmem>>, %arg23: memref<1x32xf32, #tpu.memory_space<vmem>>, %arg24: memref<32x5xbf16, #tpu.memory_space<vmem>>, %arg25: memref<1x5xf32, #tpu.memory_space<vmem>>, %arg26: memref<1x18x32xbf16, #tpu.memory_space<vmem>>, %arg27: memref<2x5xf32, #tpu.memory_space<vmem>>, %arg28: memref<18x32xf32, #tpu.memory_space<vmem>>, %arg29: memref<18x32xbf16, #tpu.memory_space<vmem>>, %arg30: memref<18x32xf32, #tpu.memory_space<vmem>>) attributes {dimension_semantics = [#tpu.dimension_semantics<arbitrary>], iteration_bounds = array<i64: 2>, scalar_prefetch = 0 : i64, scratch_operands = 3 : i64, tpu.core_type = #tpu.core_type<tc>, window_params = [{pipeline_mode = #tpu.pipeline_mode<synchronous>, transform_indices = @transform_0, window_bounds = array<i64: 18, 384>}, {pipeline_mode = #tpu.pipeline_mode<synchronous>, transform_indices = @transform_1, window_bounds = array<i64: 18, 1>}, {pipeline_mode = #tpu.pipeline_mode<synchronous>, transform_indices = @transform_2, window_bounds = array<i64: 1, 384>}, {pipeline_mode = #tpu.pipeline_mode<synchronous>, transform_indices = @transform_3, window_bounds = array<i64: 1, 384>}, {pipeline_mode = #tpu.pipeline_mode<synchronous>, transform_indices = @transform_4, window_bounds = array<i64: 384, 32>}, {pipeline_mode = #tpu.pipeline_mode<synchronous>, transform_indices = @transform_5, window_bounds = array<i64: 1, 32>}, {pipeline_mode = #tpu.pipeline_mode<synchronous>, transform_indices = @transform_6, window_bounds = array<i64: 1, 32>}, {pipeline_mode = #tpu.pipeline_mode<synchronous>, transform_indices = @transform_7, window_bounds = array<i64: 1, 32>}, {pipeline_mode = #tpu.pipeline_mode<synchronous>, transform_indices = @transform_8, window_bounds = array<i64: 18, 32>}, {transform_indices = @transform_9, window_bounds = array<i64: 1, 32, 96>}, {transform_indices = @transform_10, window_bounds = array<i64: 1, 1, 96>}, {transform_indices = @transform_11, window_bounds = array<i64: 1, 32, 32>}, {transform_indices = @transform_12, window_bounds = array<i64: 1, 1, 32>}, {transform_indices = @transform_13, window_bounds = array<i64: 1, 1, 32>}, {transform_indices = @transform_14, window_bounds = array<i64: 1, 1, 32>}, {transform_indices = @transform_15, window_bounds = array<i64: 1, 32, 64>}, {transform_indices = @transform_16, window_bounds = array<i64: 1, 1, 64>}, {transform_indices = @transform_17, window_bounds = array<i64: 1, 64, 32>}, {transform_indices = @transform_18, window_bounds = array<i64: 1, 1, 32>}, {transform_indices = @transform_19, window_bounds = array<i64: 1, 1, 32>}, {transform_indices = @transform_20, window_bounds = array<i64: 1, 1, 32>}, {pipeline_mode = #tpu.pipeline_mode<synchronous>, transform_indices = @transform_21, window_bounds = array<i64: 1, 32>}, {pipeline_mode = #tpu.pipeline_mode<synchronous>, transform_indices = @transform_22, window_bounds = array<i64: 1, 32>}, {pipeline_mode = #tpu.pipeline_mode<synchronous>, transform_indices = @transform_23, window_bounds = array<i64: 32, 5>}, {pipeline_mode = #tpu.pipeline_mode<synchronous>, transform_indices = @transform_24, window_bounds = array<i64: 1, 5>}, {transform_indices = @transform_25, window_bounds = array<i64: 1, 18, 32>}, {pipeline_mode = #tpu.pipeline_mode<synchronous>, transform_indices = @transform_26, window_bounds = array<i64: 2, 5>}]} {
    %c0_i32 = arith.constant 0 : i32
    %0 = arith.cmpi eq, %arg0, %c0_i32 : i32
    %1 = arith.extui %0 : i1 to i32
    %c0_i32_0 = arith.constant 0 : i32
    %2 = arith.cmpi ne, %1, %c0_i32_0 : i32
    scf.if %2 {
      %c0_108 = arith.constant 0 : index
      %c0_109 = arith.constant 0 : index
      %262 = vector.load %arg1[%c0_108, %c0_109] : memref<18x384xf32, #tpu.memory_space<vmem>>, vector<18x384xf32>
      %c0_110 = arith.constant 0 : index
      %c0_111 = arith.constant 0 : index
      %263 = vector.load %arg3[%c0_110, %c0_111] : memref<1x384xf32, #tpu.memory_space<vmem>>, vector<1x384xf32>
      %c0_112 = arith.constant 0 : index
      %c0_113 = arith.constant 0 : index
      %264 = vector.load %arg4[%c0_112, %c0_113] : memref<1x384xf32, #tpu.memory_space<vmem>>, vector<1x384xf32>
      %cst_114 = arith.constant dense<0.000000e+00> : vector<18xf32>
      %265 = vector.multi_reduction <add>, %262, %cst_114 [1] : vector<18x384xf32> to vector<18xf32>
      %266 = vector.shape_cast %265 : vector<18xf32> to vector<18x1xf32>
      %cst_115 = arith.constant 3.840000e+02 : f32
      %267 = vector.broadcast %cst_115 : f32 to vector<18x1xf32>
      %268 = arith.divf %266, %267 : vector<18x1xf32>
      %269 = vector.broadcast %268 : vector<18x1xf32> to vector<18x384xf32>
      %270 = arith.subf %262, %269 : vector<18x384xf32>
      %271 = arith.mulf %270, %270 : vector<18x384xf32>
      %cst_116 = arith.constant dense<0.000000e+00> : vector<18xf32>
      %272 = vector.multi_reduction <add>, %271, %cst_116 [1] : vector<18x384xf32> to vector<18xf32>
      %273 = vector.shape_cast %272 : vector<18xf32> to vector<18x1xf32>
      %cst_117 = arith.constant 3.840000e+02 : f32
      %274 = vector.broadcast %cst_117 : f32 to vector<18x1xf32>
      %275 = arith.divf %273, %274 : vector<18x1xf32>
      %276 = vector.broadcast %268 : vector<18x1xf32> to vector<18x384xf32>
      %277 = arith.subf %262, %276 : vector<18x384xf32>
      %cst_118 = arith.constant 9.99999974E-6 : f32
      %278 = vector.broadcast %cst_118 : f32 to vector<18x1xf32>
      %279 = arith.addf %275, %278 : vector<18x1xf32>
      %280 = math.rsqrt %279 : vector<18x1xf32>
      %281 = vector.broadcast %280 : vector<18x1xf32> to vector<18x384xf32>
      %282 = arith.mulf %277, %281 : vector<18x384xf32>
      %283 = vector.broadcast %263 : vector<1x384xf32> to vector<18x384xf32>
      %284 = arith.mulf %282, %283 : vector<18x384xf32>
      %285 = vector.broadcast %264 : vector<1x384xf32> to vector<18x384xf32>
      %286 = arith.addf %284, %285 : vector<18x384xf32>
      %287 = arith.truncf %286 : vector<18x384xf32> to vector<18x384xbf16>
      %c0_119 = arith.constant 0 : index
      %c0_120 = arith.constant 0 : index
      %288 = vector.load %arg5[%c0_119, %c0_120] : memref<384x32xbf16, #tpu.memory_space<vmem>>, vector<384x32xbf16>
      %cst_121 = arith.constant dense<0.000000e+00> : vector<18x32xf32>
      %289 = tpu.matmul %287, %288, %cst_121 {dimension_numbers = #tpu.dot_dimension_numbers<[1], [0], [0], [1], [0, 0, 1, 1], [], []>} : vector<18x384xbf16>, vector<384x32xbf16>, vector<18x32xf32> -> vector<18x32xf32>
      %c0_122 = arith.constant 0 : index
      %c0_123 = arith.constant 0 : index
      %290 = vector.load %arg6[%c0_122, %c0_123] : memref<1x32xf32, #tpu.memory_space<vmem>>, vector<1x32xf32>
      %291 = vector.broadcast %290 : vector<1x32xf32> to vector<18x32xf32>
      %292 = arith.addf %289, %291 : vector<18x32xf32>
      %c0_124 = arith.constant 0 : index
      %c0_125 = arith.constant 0 : index
      %293 = vector.load %arg7[%c0_124, %c0_125] : memref<1x32xf32, #tpu.memory_space<vmem>>, vector<1x32xf32>
      %c0_126 = arith.constant 0 : index
      %c0_127 = arith.constant 0 : index
      %294 = vector.load %arg8[%c0_126, %c0_127] : memref<1x32xf32, #tpu.memory_space<vmem>>, vector<1x32xf32>
      %cst_128 = arith.constant dense<0.000000e+00> : vector<18xf32>
      %295 = vector.multi_reduction <add>, %292, %cst_128 [1] : vector<18x32xf32> to vector<18xf32>
      %296 = vector.shape_cast %295 : vector<18xf32> to vector<18x1xf32>
      %cst_129 = arith.constant 3.200000e+01 : f32
      %297 = vector.broadcast %cst_129 : f32 to vector<18x1xf32>
      %298 = arith.divf %296, %297 : vector<18x1xf32>
      %299 = vector.broadcast %298 : vector<18x1xf32> to vector<18x32xf32>
      %300 = arith.subf %292, %299 : vector<18x32xf32>
      %301 = arith.mulf %300, %300 : vector<18x32xf32>
      %cst_130 = arith.constant dense<0.000000e+00> : vector<18xf32>
      %302 = vector.multi_reduction <add>, %301, %cst_130 [1] : vector<18x32xf32> to vector<18xf32>
      %303 = vector.shape_cast %302 : vector<18xf32> to vector<18x1xf32>
      %cst_131 = arith.constant 3.200000e+01 : f32
      %304 = vector.broadcast %cst_131 : f32 to vector<18x1xf32>
      %305 = arith.divf %303, %304 : vector<18x1xf32>
      %306 = vector.broadcast %298 : vector<18x1xf32> to vector<18x32xf32>
      %307 = arith.subf %292, %306 : vector<18x32xf32>
      %cst_132 = arith.constant 9.99999974E-6 : f32
      %308 = vector.broadcast %cst_132 : f32 to vector<18x1xf32>
      %309 = arith.addf %305, %308 : vector<18x1xf32>
      %310 = math.rsqrt %309 : vector<18x1xf32>
      %311 = vector.broadcast %310 : vector<18x1xf32> to vector<18x32xf32>
      %312 = arith.mulf %307, %311 : vector<18x32xf32>
      %313 = vector.broadcast %293 : vector<1x32xf32> to vector<18x32xf32>
      %314 = arith.mulf %312, %313 : vector<18x32xf32>
      %315 = vector.broadcast %294 : vector<1x32xf32> to vector<18x32xf32>
      %316 = arith.addf %314, %315 : vector<18x32xf32>
      %c0_133 = arith.constant 0 : index
      %c0_134 = arith.constant 0 : index
      %317 = vector.load %arg9[%c0_133, %c0_134] : memref<18x32xf32, #tpu.memory_space<vmem>>, vector<18x32xf32>
      %c0_135 = arith.constant 0 : index
      %c0_136 = arith.constant 0 : index
      %318 = vector.load %arg2[%c0_135, %c0_136] : memref<18x1xf32, #tpu.memory_space<vmem>>, vector<18x1xf32>
      %319 = vector.broadcast %318 : vector<18x1xf32> to vector<18x32xf32>
      %320 = arith.mulf %316, %319 : vector<18x32xf32>
      %321 = arith.addf %317, %320 : vector<18x32xf32>
      %c0_137 = arith.constant 0 : index
      %c0_138 = arith.constant 0 : index
      %322 = vector.load %arg28[%c0_137, %c0_138] : memref<18x32xf32, #tpu.memory_space<vmem>>, vector<18x32xf32>
      tpu.vector_store %arg28[%c0_137, %c0_138], %321 {strides = array<i32>} : memref<18x32xf32, #tpu.memory_space<vmem>>, vector<18x32xf32>,
      %323 = arith.truncf %321 : vector<18x32xf32> to vector<18x32xbf16>
      %c0_139 = arith.constant 0 : index
      %c0_140 = arith.constant 0 : index
      %324 = vector.load %arg29[%c0_139, %c0_140] : memref<18x32xbf16, #tpu.memory_space<vmem>>, vector<18x32xbf16>
      tpu.vector_store %arg29[%c0_139, %c0_140], %323 {strides = array<i32>} : memref<18x32xbf16, #tpu.memory_space<vmem>>, vector<18x32xbf16>,
    } else {
    }
    %c0 = arith.constant 0 : index
    %c0_1 = arith.constant 0 : index
    %3 = vector.load %arg28[%c0, %c0_1] : memref<18x32xf32, #tpu.memory_space<vmem>>, vector<18x32xf32>
    %c0_2 = arith.constant 0 : index
    %c0_3 = arith.constant 0 : index
    %4 = vector.load %arg29[%c0_2, %c0_3] : memref<18x32xbf16, #tpu.memory_space<vmem>>, vector<18x32xbf16>
    %c0_4 = arith.constant 0 : index
    %c0_5 = arith.constant 0 : index
    %c0_6 = arith.constant 0 : index
    %5 = vector.load %arg10[%c0_4, %c0_5, %c0_6] : memref<1x32x96xbf16, #tpu.memory_space<vmem>>, vector<1x32x96xbf16>
    %6 = vector.shape_cast %5 : vector<1x32x96xbf16> to vector<32x96xbf16>
    %cst = arith.constant dense<0.000000e+00> : vector<18x96xf32>
    %7 = tpu.matmul %4, %6, %cst {dimension_numbers = #tpu.dot_dimension_numbers<[1], [0], [0], [1], [0, 0, 1, 1], [], []>} : vector<18x32xbf16>, vector<32x96xbf16>, vector<18x96xf32> -> vector<18x96xf32>
    %c0_7 = arith.constant 0 : index
    %c0_8 = arith.constant 0 : index
    %c0_9 = arith.constant 0 : index
    %8 = vector.load %arg11[%c0_7, %c0_8, %c0_9] : memref<1x1x96xf32, #tpu.memory_space<vmem>>, vector<1x1x96xf32>
    %9 = vector.shape_cast %8 : vector<1x1x96xf32> to vector<1x96xf32>
    %10 = vector.broadcast %9 : vector<1x96xf32> to vector<18x96xf32>
    %11 = arith.addf %7, %10 : vector<18x96xf32>
    %12 = vector.extract_strided_slice %11 {offsets = [0, 0], sizes = [9, 8], strides = [1, 1]} : vector<18x96xf32> to vector<9x8xf32>
    %13 = arith.truncf %12 : vector<9x8xf32> to vector<9x8xbf16>
    %14 = vector.extract_strided_slice %11 {offsets = [0, 32], sizes = [9, 8], strides = [1, 1]} : vector<18x96xf32> to vector<9x8xf32>
    %15 = arith.truncf %14 : vector<9x8xf32> to vector<9x8xbf16>
    %16 = vector.extract_strided_slice %11 {offsets = [0, 64], sizes = [9, 8], strides = [1, 1]} : vector<18x96xf32> to vector<9x8xf32>
    %17 = arith.truncf %16 : vector<9x8xf32> to vector<9x8xbf16>
    %cst_10 = arith.constant dense<0.000000e+00> : vector<9x9xf32>
    %18 = tpu.matmul %13, %15, %cst_10 {dimension_numbers = #tpu.dot_dimension_numbers<[1], [1], [0], [0], [0, 0, 1, 0], [], []>} : vector<9x8xbf16>, vector<9x8xbf16>, vector<9x9xf32> -> vector<9x9xf32>
    %cst_11 = arith.constant dense<0xFF800000> : vector<9xf32>
    %19 = vector.multi_reduction <maximumf>, %18, %cst_11 [1] : vector<9x9xf32> to vector<9xf32>
    %20 = vector.shape_cast %19 : vector<9xf32> to vector<9x1xf32>
    %21 = vector.broadcast %20 : vector<9x1xf32> to vector<9x9xf32>
    %22 = arith.subf %18, %21 : vector<9x9xf32>
    %23 = math.exp %22 : vector<9x9xf32>
    %cst_12 = arith.constant dense<0.000000e+00> : vector<9xf32>
    %24 = vector.multi_reduction <add>, %23, %cst_12 [1] : vector<9x9xf32> to vector<9xf32>
    %25 = vector.shape_cast %24 : vector<9xf32> to vector<9x1xf32>
    %26 = tpu.reciprocal %25 {approx = true} : vector<9x1xf32> -> vector<9x1xf32>
    %27 = vector.broadcast %26 : vector<9x1xf32> to vector<9x9xf32>
    %28 = arith.mulf %23, %27 : vector<9x9xf32>
    %29 = arith.truncf %28 : vector<9x9xf32> to vector<9x9xbf16>
    %cst_13 = arith.constant dense<0.000000e+00> : vector<9x8xf32>
    %30 = tpu.matmul %29, %17, %cst_13 {dimension_numbers = #tpu.dot_dimension_numbers<[1], [0], [0], [1], [0, 0, 1, 1], [], []>} : vector<9x9xbf16>, vector<9x8xbf16>, vector<9x8xf32> -> vector<9x8xf32>
    %c0_14 = arith.constant 0 : index
    %c0_15 = arith.constant 0 : index
    %31 = vector.load %arg30[%c0_14, %c0_15] : memref<18x32xf32, #tpu.memory_space<vmem>>, vector<9x8xf32>
    tpu.vector_store %arg30[%c0_14, %c0_15], %30 {strides = array<i32>} : memref<18x32xf32, #tpu.memory_space<vmem>>, vector<9x8xf32>,
    %32 = vector.extract_strided_slice %11 {offsets = [0, 8], sizes = [9, 8], strides = [1, 1]} : vector<18x96xf32> to vector<9x8xf32>
    %33 = arith.truncf %32 : vector<9x8xf32> to vector<9x8xbf16>
    %34 = vector.extract_strided_slice %11 {offsets = [0, 40], sizes = [9, 8], strides = [1, 1]} : vector<18x96xf32> to vector<9x8xf32>
    %35 = arith.truncf %34 : vector<9x8xf32> to vector<9x8xbf16>
    %36 = vector.extract_strided_slice %11 {offsets = [0, 72], sizes = [9, 8], strides = [1, 1]} : vector<18x96xf32> to vector<9x8xf32>
    %37 = arith.truncf %36 : vector<9x8xf32> to vector<9x8xbf16>
    %cst_16 = arith.constant dense<0.000000e+00> : vector<9x9xf32>
    %38 = tpu.matmul %33, %35, %cst_16 {dimension_numbers = #tpu.dot_dimension_numbers<[1], [1], [0], [0], [0, 0, 1, 0], [], []>} : vector<9x8xbf16>, vector<9x8xbf16>, vector<9x9xf32> -> vector<9x9xf32>
    %cst_17 = arith.constant dense<0xFF800000> : vector<9xf32>
    %39 = vector.multi_reduction <maximumf>, %38, %cst_17 [1] : vector<9x9xf32> to vector<9xf32>
    %40 = vector.shape_cast %39 : vector<9xf32> to vector<9x1xf32>
    %41 = vector.broadcast %40 : vector<9x1xf32> to vector<9x9xf32>
    %42 = arith.subf %38, %41 : vector<9x9xf32>
    %43 = math.exp %42 : vector<9x9xf32>
    %cst_18 = arith.constant dense<0.000000e+00> : vector<9xf32>
    %44 = vector.multi_reduction <add>, %43, %cst_18 [1] : vector<9x9xf32> to vector<9xf32>
    %45 = vector.shape_cast %44 : vector<9xf32> to vector<9x1xf32>
    %46 = tpu.reciprocal %45 {approx = true} : vector<9x1xf32> -> vector<9x1xf32>
    %47 = vector.broadcast %46 : vector<9x1xf32> to vector<9x9xf32>
    %48 = arith.mulf %43, %47 : vector<9x9xf32>
    %49 = arith.truncf %48 : vector<9x9xf32> to vector<9x9xbf16>
    %cst_19 = arith.constant dense<0.000000e+00> : vector<9x8xf32>
    %50 = tpu.matmul %49, %37, %cst_19 {dimension_numbers = #tpu.dot_dimension_numbers<[1], [0], [0], [1], [0, 0, 1, 1], [], []>} : vector<9x9xbf16>, vector<9x8xbf16>, vector<9x8xf32> -> vector<9x8xf32>
    %c0_20 = arith.constant 0 : index
    %c8 = arith.constant 8 : index
    %51 = vector.load %arg30[%c0_20, %c8] : memref<18x32xf32, #tpu.memory_space<vmem>>, vector<9x8xf32>
    tpu.vector_store %arg30[%c0_20, %c8], %50 {strides = array<i32>} : memref<18x32xf32, #tpu.memory_space<vmem>>, vector<9x8xf32>,
    %52 = vector.extract_strided_slice %11 {offsets = [0, 16], sizes = [9, 8], strides = [1, 1]} : vector<18x96xf32> to vector<9x8xf32>
    %53 = arith.truncf %52 : vector<9x8xf32> to vector<9x8xbf16>
    %54 = vector.extract_strided_slice %11 {offsets = [0, 48], sizes = [9, 8], strides = [1, 1]} : vector<18x96xf32> to vector<9x8xf32>
    %55 = arith.truncf %54 : vector<9x8xf32> to vector<9x8xbf16>
    %56 = vector.extract_strided_slice %11 {offsets = [0, 80], sizes = [9, 8], strides = [1, 1]} : vector<18x96xf32> to vector<9x8xf32>
    %57 = arith.truncf %56 : vector<9x8xf32> to vector<9x8xbf16>
    %cst_21 = arith.constant dense<0.000000e+00> : vector<9x9xf32>
    %58 = tpu.matmul %53, %55, %cst_21 {dimension_numbers = #tpu.dot_dimension_numbers<[1], [1], [0], [0], [0, 0, 1, 0], [], []>} : vector<9x8xbf16>, vector<9x8xbf16>, vector<9x9xf32> -> vector<9x9xf32>
    %cst_22 = arith.constant dense<0xFF800000> : vector<9xf32>
    %59 = vector.multi_reduction <maximumf>, %58, %cst_22 [1] : vector<9x9xf32> to vector<9xf32>
    %60 = vector.shape_cast %59 : vector<9xf32> to vector<9x1xf32>
    %61 = vector.broadcast %60 : vector<9x1xf32> to vector<9x9xf32>
    %62 = arith.subf %58, %61 : vector<9x9xf32>
    %63 = math.exp %62 : vector<9x9xf32>
    %cst_23 = arith.constant dense<0.000000e+00> : vector<9xf32>
    %64 = vector.multi_reduction <add>, %63, %cst_23 [1] : vector<9x9xf32> to vector<9xf32>
    %65 = vector.shape_cast %64 : vector<9xf32> to vector<9x1xf32>
    %66 = tpu.reciprocal %65 {approx = true} : vector<9x1xf32> -> vector<9x1xf32>
    %67 = vector.broadcast %66 : vector<9x1xf32> to vector<9x9xf32>
    %68 = arith.mulf %63, %67 : vector<9x9xf32>
    %69 = arith.truncf %68 : vector<9x9xf32> to vector<9x9xbf16>
    %cst_24 = arith.constant dense<0.000000e+00> : vector<9x8xf32>
    %70 = tpu.matmul %69, %57, %cst_24 {dimension_numbers = #tpu.dot_dimension_numbers<[1], [0], [0], [1], [0, 0, 1, 1], [], []>} : vector<9x9xbf16>, vector<9x8xbf16>, vector<9x8xf32> -> vector<9x8xf32>
    %c0_25 = arith.constant 0 : index
    %c16 = arith.constant 16 : index
    %71 = vector.load %arg30[%c0_25, %c16] : memref<18x32xf32, #tpu.memory_space<vmem>>, vector<9x8xf32>
    tpu.vector_store %arg30[%c0_25, %c16], %70 {strides = array<i32>} : memref<18x32xf32, #tpu.memory_space<vmem>>, vector<9x8xf32>,
    %72 = vector.extract_strided_slice %11 {offsets = [0, 24], sizes = [9, 8], strides = [1, 1]} : vector<18x96xf32> to vector<9x8xf32>
    %73 = arith.truncf %72 : vector<9x8xf32> to vector<9x8xbf16>
    %74 = vector.extract_strided_slice %11 {offsets = [0, 56], sizes = [9, 8], strides = [1, 1]} : vector<18x96xf32> to vector<9x8xf32>
    %75 = arith.truncf %74 : vector<9x8xf32> to vector<9x8xbf16>
    %76 = vector.extract_strided_slice %11 {offsets = [0, 88], sizes = [9, 8], strides = [1, 1]} : vector<18x96xf32> to vector<9x8xf32>
    %77 = arith.truncf %76 : vector<9x8xf32> to vector<9x8xbf16>
    %cst_26 = arith.constant dense<0.000000e+00> : vector<9x9xf32>
    %78 = tpu.matmul %73, %75, %cst_26 {dimension_numbers = #tpu.dot_dimension_numbers<[1], [1], [0], [0], [0, 0, 1, 0], [], []>} : vector<9x8xbf16>, vector<9x8xbf16>, vector<9x9xf32> -> vector<9x9xf32>
    %cst_27 = arith.constant dense<0xFF800000> : vector<9xf32>
    %79 = vector.multi_reduction <maximumf>, %78, %cst_27 [1] : vector<9x9xf32> to vector<9xf32>
    %80 = vector.shape_cast %79 : vector<9xf32> to vector<9x1xf32>
    %81 = vector.broadcast %80 : vector<9x1xf32> to vector<9x9xf32>
    %82 = arith.subf %78, %81 : vector<9x9xf32>
    %83 = math.exp %82 : vector<9x9xf32>
    %cst_28 = arith.constant dense<0.000000e+00> : vector<9xf32>
    %84 = vector.multi_reduction <add>, %83, %cst_28 [1] : vector<9x9xf32> to vector<9xf32>
    %85 = vector.shape_cast %84 : vector<9xf32> to vector<9x1xf32>
    %86 = tpu.reciprocal %85 {approx = true} : vector<9x1xf32> -> vector<9x1xf32>
    %87 = vector.broadcast %86 : vector<9x1xf32> to vector<9x9xf32>
    %88 = arith.mulf %83, %87 : vector<9x9xf32>
    %89 = arith.truncf %88 : vector<9x9xf32> to vector<9x9xbf16>
    %cst_29 = arith.constant dense<0.000000e+00> : vector<9x8xf32>
    %90 = tpu.matmul %89, %77, %cst_29 {dimension_numbers = #tpu.dot_dimension_numbers<[1], [0], [0], [1], [0, 0, 1, 1], [], []>} : vector<9x9xbf16>, vector<9x8xbf16>, vector<9x8xf32> -> vector<9x8xf32>
    %c0_30 = arith.constant 0 : index
    %c24 = arith.constant 24 : index
    %91 = vector.load %arg30[%c0_30, %c24] : memref<18x32xf32, #tpu.memory_space<vmem>>, vector<9x8xf32>
    tpu.vector_store %arg30[%c0_30, %c24], %90 {strides = array<i32>} : memref<18x32xf32, #tpu.memory_space<vmem>>, vector<9x8xf32>,
    %92 = vector.extract_strided_slice %11 {offsets = [9, 0], sizes = [9, 8], strides = [1, 1]} : vector<18x96xf32> to vector<9x8xf32>
    %93 = arith.truncf %92 : vector<9x8xf32> to vector<9x8xbf16>
    %94 = vector.extract_strided_slice %11 {offsets = [9, 32], sizes = [9, 8], strides = [1, 1]} : vector<18x96xf32> to vector<9x8xf32>
    %95 = arith.truncf %94 : vector<9x8xf32> to vector<9x8xbf16>
    %96 = vector.extract_strided_slice %11 {offsets = [9, 64], sizes = [9, 8], strides = [1, 1]} : vector<18x96xf32> to vector<9x8xf32>
    %97 = arith.truncf %96 : vector<9x8xf32> to vector<9x8xbf16>
    %cst_31 = arith.constant dense<0.000000e+00> : vector<9x9xf32>
    %98 = tpu.matmul %93, %95, %cst_31 {dimension_numbers = #tpu.dot_dimension_numbers<[1], [1], [0], [0], [0, 0, 1, 0], [], []>} : vector<9x8xbf16>, vector<9x8xbf16>, vector<9x9xf32> -> vector<9x9xf32>
    %cst_32 = arith.constant dense<0xFF800000> : vector<9xf32>
    %99 = vector.multi_reduction <maximumf>, %98, %cst_32 [1] : vector<9x9xf32> to vector<9xf32>
    %100 = vector.shape_cast %99 : vector<9xf32> to vector<9x1xf32>
    %101 = vector.broadcast %100 : vector<9x1xf32> to vector<9x9xf32>
    %102 = arith.subf %98, %101 : vector<9x9xf32>
    %103 = math.exp %102 : vector<9x9xf32>
    %cst_33 = arith.constant dense<0.000000e+00> : vector<9xf32>
    %104 = vector.multi_reduction <add>, %103, %cst_33 [1] : vector<9x9xf32> to vector<9xf32>
    %105 = vector.shape_cast %104 : vector<9xf32> to vector<9x1xf32>
    %106 = tpu.reciprocal %105 {approx = true} : vector<9x1xf32> -> vector<9x1xf32>
    %107 = vector.broadcast %106 : vector<9x1xf32> to vector<9x9xf32>
    %108 = arith.mulf %103, %107 : vector<9x9xf32>
    %109 = arith.truncf %108 : vector<9x9xf32> to vector<9x9xbf16>
    %cst_34 = arith.constant dense<0.000000e+00> : vector<9x8xf32>
    %110 = tpu.matmul %109, %97, %cst_34 {dimension_numbers = #tpu.dot_dimension_numbers<[1], [0], [0], [1], [0, 0, 1, 1], [], []>} : vector<9x9xbf16>, vector<9x8xbf16>, vector<9x8xf32> -> vector<9x8xf32>
    %c9 = arith.constant 9 : index
    %c0_35 = arith.constant 0 : index
    %111 = vector.load %arg30[%c9, %c0_35] : memref<18x32xf32, #tpu.memory_space<vmem>>, vector<9x8xf32>
    tpu.vector_store %arg30[%c9, %c0_35], %110 {strides = array<i32>} : memref<18x32xf32, #tpu.memory_space<vmem>>, vector<9x8xf32>,
    %112 = vector.extract_strided_slice %11 {offsets = [9, 8], sizes = [9, 8], strides = [1, 1]} : vector<18x96xf32> to vector<9x8xf32>
    %113 = arith.truncf %112 : vector<9x8xf32> to vector<9x8xbf16>
    %114 = vector.extract_strided_slice %11 {offsets = [9, 40], sizes = [9, 8], strides = [1, 1]} : vector<18x96xf32> to vector<9x8xf32>
    %115 = arith.truncf %114 : vector<9x8xf32> to vector<9x8xbf16>
    %116 = vector.extract_strided_slice %11 {offsets = [9, 72], sizes = [9, 8], strides = [1, 1]} : vector<18x96xf32> to vector<9x8xf32>
    %117 = arith.truncf %116 : vector<9x8xf32> to vector<9x8xbf16>
    %cst_36 = arith.constant dense<0.000000e+00> : vector<9x9xf32>
    %118 = tpu.matmul %113, %115, %cst_36 {dimension_numbers = #tpu.dot_dimension_numbers<[1], [1], [0], [0], [0, 0, 1, 0], [], []>} : vector<9x8xbf16>, vector<9x8xbf16>, vector<9x9xf32> -> vector<9x9xf32>
    %cst_37 = arith.constant dense<0xFF800000> : vector<9xf32>
    %119 = vector.multi_reduction <maximumf>, %118, %cst_37 [1] : vector<9x9xf32> to vector<9xf32>
    %120 = vector.shape_cast %119 : vector<9xf32> to vector<9x1xf32>
    %121 = vector.broadcast %120 : vector<9x1xf32> to vector<9x9xf32>
    %122 = arith.subf %118, %121 : vector<9x9xf32>
    %123 = math.exp %122 : vector<9x9xf32>
    %cst_38 = arith.constant dense<0.000000e+00> : vector<9xf32>
    %124 = vector.multi_reduction <add>, %123, %cst_38 [1] : vector<9x9xf32> to vector<9xf32>
    %125 = vector.shape_cast %124 : vector<9xf32> to vector<9x1xf32>
    %126 = tpu.reciprocal %125 {approx = true} : vector<9x1xf32> -> vector<9x1xf32>
    %127 = vector.broadcast %126 : vector<9x1xf32> to vector<9x9xf32>
    %128 = arith.mulf %123, %127 : vector<9x9xf32>
    %129 = arith.truncf %128 : vector<9x9xf32> to vector<9x9xbf16>
    %cst_39 = arith.constant dense<0.000000e+00> : vector<9x8xf32>
    %130 = tpu.matmul %129, %117, %cst_39 {dimension_numbers = #tpu.dot_dimension_numbers<[1], [0], [0], [1], [0, 0, 1, 1], [], []>} : vector<9x9xbf16>, vector<9x8xbf16>, vector<9x8xf32> -> vector<9x8xf32>
    %c9_40 = arith.constant 9 : index
    %c8_41 = arith.constant 8 : index
    %131 = vector.load %arg30[%c9_40, %c8_41] : memref<18x32xf32, #tpu.memory_space<vmem>>, vector<9x8xf32>
    tpu.vector_store %arg30[%c9_40, %c8_41], %130 {strides = array<i32>} : memref<18x32xf32, #tpu.memory_space<vmem>>, vector<9x8xf32>,
    %132 = vector.extract_strided_slice %11 {offsets = [9, 16], sizes = [9, 8], strides = [1, 1]} : vector<18x96xf32> to vector<9x8xf32>
    %133 = arith.truncf %132 : vector<9x8xf32> to vector<9x8xbf16>
    %134 = vector.extract_strided_slice %11 {offsets = [9, 48], sizes = [9, 8], strides = [1, 1]} : vector<18x96xf32> to vector<9x8xf32>
    %135 = arith.truncf %134 : vector<9x8xf32> to vector<9x8xbf16>
    %136 = vector.extract_strided_slice %11 {offsets = [9, 80], sizes = [9, 8], strides = [1, 1]} : vector<18x96xf32> to vector<9x8xf32>
    %137 = arith.truncf %136 : vector<9x8xf32> to vector<9x8xbf16>
    %cst_42 = arith.constant dense<0.000000e+00> : vector<9x9xf32>
    %138 = tpu.matmul %133, %135, %cst_42 {dimension_numbers = #tpu.dot_dimension_numbers<[1], [1], [0], [0], [0, 0, 1, 0], [], []>} : vector<9x8xbf16>, vector<9x8xbf16>, vector<9x9xf32> -> vector<9x9xf32>
    %cst_43 = arith.constant dense<0xFF800000> : vector<9xf32>
    %139 = vector.multi_reduction <maximumf>, %138, %cst_43 [1] : vector<9x9xf32> to vector<9xf32>
    %140 = vector.shape_cast %139 : vector<9xf32> to vector<9x1xf32>
    %141 = vector.broadcast %140 : vector<9x1xf32> to vector<9x9xf32>
    %142 = arith.subf %138, %141 : vector<9x9xf32>
    %143 = math.exp %142 : vector<9x9xf32>
    %cst_44 = arith.constant dense<0.000000e+00> : vector<9xf32>
    %144 = vector.multi_reduction <add>, %143, %cst_44 [1] : vector<9x9xf32> to vector<9xf32>
    %145 = vector.shape_cast %144 : vector<9xf32> to vector<9x1xf32>
    %146 = tpu.reciprocal %145 {approx = true} : vector<9x1xf32> -> vector<9x1xf32>
    %147 = vector.broadcast %146 : vector<9x1xf32> to vector<9x9xf32>
    %148 = arith.mulf %143, %147 : vector<9x9xf32>
    %149 = arith.truncf %148 : vector<9x9xf32> to vector<9x9xbf16>
    %cst_45 = arith.constant dense<0.000000e+00> : vector<9x8xf32>
    %150 = tpu.matmul %149, %137, %cst_45 {dimension_numbers = #tpu.dot_dimension_numbers<[1], [0], [0], [1], [0, 0, 1, 1], [], []>} : vector<9x9xbf16>, vector<9x8xbf16>, vector<9x8xf32> -> vector<9x8xf32>
    %c9_46 = arith.constant 9 : index
    %c16_47 = arith.constant 16 : index
    %151 = vector.load %arg30[%c9_46, %c16_47] : memref<18x32xf32, #tpu.memory_space<vmem>>, vector<9x8xf32>
    tpu.vector_store %arg30[%c9_46, %c16_47], %150 {strides = array<i32>} : memref<18x32xf32, #tpu.memory_space<vmem>>, vector<9x8xf32>,
    %152 = vector.extract_strided_slice %11 {offsets = [9, 24], sizes = [9, 8], strides = [1, 1]} : vector<18x96xf32> to vector<9x8xf32>
    %153 = arith.truncf %152 : vector<9x8xf32> to vector<9x8xbf16>
    %154 = vector.extract_strided_slice %11 {offsets = [9, 56], sizes = [9, 8], strides = [1, 1]} : vector<18x96xf32> to vector<9x8xf32>
    %155 = arith.truncf %154 : vector<9x8xf32> to vector<9x8xbf16>
    %156 = vector.extract_strided_slice %11 {offsets = [9, 88], sizes = [9, 8], strides = [1, 1]} : vector<18x96xf32> to vector<9x8xf32>
    %157 = arith.truncf %156 : vector<9x8xf32> to vector<9x8xbf16>
    %cst_48 = arith.constant dense<0.000000e+00> : vector<9x9xf32>
    %158 = tpu.matmul %153, %155, %cst_48 {dimension_numbers = #tpu.dot_dimension_numbers<[1], [1], [0], [0], [0, 0, 1, 0], [], []>} : vector<9x8xbf16>, vector<9x8xbf16>, vector<9x9xf32> -> vector<9x9xf32>
    %cst_49 = arith.constant dense<0xFF800000> : vector<9xf32>
    %159 = vector.multi_reduction <maximumf>, %158, %cst_49 [1] : vector<9x9xf32> to vector<9xf32>
    %160 = vector.shape_cast %159 : vector<9xf32> to vector<9x1xf32>
    %161 = vector.broadcast %160 : vector<9x1xf32> to vector<9x9xf32>
    %162 = arith.subf %158, %161 : vector<9x9xf32>
    %163 = math.exp %162 : vector<9x9xf32>
    %cst_50 = arith.constant dense<0.000000e+00> : vector<9xf32>
    %164 = vector.multi_reduction <add>, %163, %cst_50 [1] : vector<9x9xf32> to vector<9xf32>
    %165 = vector.shape_cast %164 : vector<9xf32> to vector<9x1xf32>
    %166 = tpu.reciprocal %165 {approx = true} : vector<9x1xf32> -> vector<9x1xf32>
    %167 = vector.broadcast %166 : vector<9x1xf32> to vector<9x9xf32>
    %168 = arith.mulf %163, %167 : vector<9x9xf32>
    %169 = arith.truncf %168 : vector<9x9xf32> to vector<9x9xbf16>
    %cst_51 = arith.constant dense<0.000000e+00> : vector<9x8xf32>
    %170 = tpu.matmul %169, %157, %cst_51 {dimension_numbers = #tpu.dot_dimension_numbers<[1], [0], [0], [1], [0, 0, 1, 1], [], []>} : vector<9x9xbf16>, vector<9x8xbf16>, vector<9x8xf32> -> vector<9x8xf32>
    %c9_52 = arith.constant 9 : index
    %c24_53 = arith.constant 24 : index
    %171 = vector.load %arg30[%c9_52, %c24_53] : memref<18x32xf32, #tpu.memory_space<vmem>>, vector<9x8xf32>
    tpu.vector_store %arg30[%c9_52, %c24_53], %170 {strides = array<i32>} : memref<18x32xf32, #tpu.memory_space<vmem>>, vector<9x8xf32>,
    %c0_54 = arith.constant 0 : index
    %c0_55 = arith.constant 0 : index
    %172 = vector.load %arg30[%c0_54, %c0_55] : memref<18x32xf32, #tpu.memory_space<vmem>>, vector<18x32xf32>
    %173 = arith.truncf %172 : vector<18x32xf32> to vector<18x32xbf16>
    %c0_56 = arith.constant 0 : index
    %c0_57 = arith.constant 0 : index
    %c0_58 = arith.constant 0 : index
    %174 = vector.load %arg12[%c0_56, %c0_57, %c0_58] : memref<1x32x32xbf16, #tpu.memory_space<vmem>>, vector<1x32x32xbf16>
    %175 = vector.shape_cast %174 : vector<1x32x32xbf16> to vector<32x32xbf16>
    %cst_59 = arith.constant dense<0.000000e+00> : vector<18x32xf32>
    %176 = tpu.matmul %173, %175, %cst_59 {dimension_numbers = #tpu.dot_dimension_numbers<[1], [0], [0], [1], [0, 0, 1, 1], [], []>} : vector<18x32xbf16>, vector<32x32xbf16>, vector<18x32xf32> -> vector<18x32xf32>
    %c0_60 = arith.constant 0 : index
    %c0_61 = arith.constant 0 : index
    %c0_62 = arith.constant 0 : index
    %177 = vector.load %arg13[%c0_60, %c0_61, %c0_62] : memref<1x1x32xf32, #tpu.memory_space<vmem>>, vector<1x1x32xf32>
    %178 = vector.shape_cast %177 : vector<1x1x32xf32> to vector<1x32xf32>
    %179 = vector.broadcast %178 : vector<1x32xf32> to vector<18x32xf32>
    %180 = arith.addf %176, %179 : vector<18x32xf32>
    %181 = arith.addf %3, %180 : vector<18x32xf32>
    %c0_63 = arith.constant 0 : index
    %c0_64 = arith.constant 0 : index
    %c0_65 = arith.constant 0 : index
    %182 = vector.load %arg14[%c0_63, %c0_64, %c0_65] : memref<1x1x32xf32, #tpu.memory_space<vmem>>, vector<1x1x32xf32>
    %183 = vector.shape_cast %182 : vector<1x1x32xf32> to vector<1x32xf32>
    %c0_66 = arith.constant 0 : index
    %c0_67 = arith.constant 0 : index
    %c0_68 = arith.constant 0 : index
    %184 = vector.load %arg15[%c0_66, %c0_67, %c0_68] : memref<1x1x32xf32, #tpu.memory_space<vmem>>, vector<1x1x32xf32>
    %185 = vector.shape_cast %184 : vector<1x1x32xf32> to vector<1x32xf32>
    %cst_69 = arith.constant dense<0.000000e+00> : vector<18xf32>
    %186 = vector.multi_reduction <add>, %181, %cst_69 [1] : vector<18x32xf32> to vector<18xf32>
    %187 = vector.shape_cast %186 : vector<18xf32> to vector<18x1xf32>
    %cst_70 = arith.constant 3.200000e+01 : f32
    %188 = vector.broadcast %cst_70 : f32 to vector<18x1xf32>
    %189 = arith.divf %187, %188 : vector<18x1xf32>
    %190 = vector.broadcast %189 : vector<18x1xf32> to vector<18x32xf32>
    %191 = arith.subf %181, %190 : vector<18x32xf32>
    %192 = arith.mulf %191, %191 : vector<18x32xf32>
    %cst_71 = arith.constant dense<0.000000e+00> : vector<18xf32>
    %193 = vector.multi_reduction <add>, %192, %cst_71 [1] : vector<18x32xf32> to vector<18xf32>
    %194 = vector.shape_cast %193 : vector<18xf32> to vector<18x1xf32>
    %cst_72 = arith.constant 3.200000e+01 : f32
    %195 = vector.broadcast %cst_72 : f32 to vector<18x1xf32>
    %196 = arith.divf %194, %195 : vector<18x1xf32>
    %197 = vector.broadcast %189 : vector<18x1xf32> to vector<18x32xf32>
    %198 = arith.subf %181, %197 : vector<18x32xf32>
    %cst_73 = arith.constant 9.99999974E-6 : f32
    %199 = vector.broadcast %cst_73 : f32 to vector<18x1xf32>
    %200 = arith.addf %196, %199 : vector<18x1xf32>
    %201 = math.rsqrt %200 : vector<18x1xf32>
    %202 = vector.broadcast %201 : vector<18x1xf32> to vector<18x32xf32>
    %203 = arith.mulf %198, %202 : vector<18x32xf32>
    %204 = vector.broadcast %183 : vector<1x32xf32> to vector<18x32xf32>
    %205 = arith.mulf %203, %204 : vector<18x32xf32>
    %206 = vector.broadcast %185 : vector<1x32xf32> to vector<18x32xf32>
    %207 = arith.addf %205, %206 : vector<18x32xf32>
    %208 = arith.truncf %207 : vector<18x32xf32> to vector<18x32xbf16>
    %c0_74 = arith.constant 0 : index
    %c0_75 = arith.constant 0 : index
    %c0_76 = arith.constant 0 : index
    %209 = vector.load %arg16[%c0_74, %c0_75, %c0_76] : memref<1x32x64xbf16, #tpu.memory_space<vmem>>, vector<1x32x64xbf16>
    %210 = vector.shape_cast %209 : vector<1x32x64xbf16> to vector<32x64xbf16>
    %cst_77 = arith.constant dense<0.000000e+00> : vector<18x64xf32>
    %211 = tpu.matmul %208, %210, %cst_77 {dimension_numbers = #tpu.dot_dimension_numbers<[1], [0], [0], [1], [0, 0, 1, 1], [], []>} : vector<18x32xbf16>, vector<32x64xbf16>, vector<18x64xf32> -> vector<18x64xf32>
    %c0_78 = arith.constant 0 : index
    %c0_79 = arith.constant 0 : index
    %c0_80 = arith.constant 0 : index
    %212 = vector.load %arg17[%c0_78, %c0_79, %c0_80] : memref<1x1x64xf32, #tpu.memory_space<vmem>>, vector<1x1x64xf32>
    %213 = vector.shape_cast %212 : vector<1x1x64xf32> to vector<1x64xf32>
    %214 = vector.broadcast %213 : vector<1x64xf32> to vector<18x64xf32>
    %215 = arith.addf %211, %214 : vector<18x64xf32>
    %cst_81 = arith.constant 0.000000e+00 : f32
    %216 = vector.broadcast %cst_81 : f32 to vector<18x64xf32>
    %217 = arith.maximumf %215, %216 : vector<18x64xf32>
    %218 = arith.truncf %217 : vector<18x64xf32> to vector<18x64xbf16>
    %c0_82 = arith.constant 0 : index
    %c0_83 = arith.constant 0 : index
    %c0_84 = arith.constant 0 : index
    %219 = vector.load %arg18[%c0_82, %c0_83, %c0_84] : memref<1x64x32xbf16, #tpu.memory_space<vmem>>, vector<1x64x32xbf16>
    %220 = vector.shape_cast %219 : vector<1x64x32xbf16> to vector<64x32xbf16>
    %cst_85 = arith.constant dense<0.000000e+00> : vector<18x32xf32>
    %221 = tpu.matmul %218, %220, %cst_85 {dimension_numbers = #tpu.dot_dimension_numbers<[1], [0], [0], [1], [0, 0, 1, 1], [], []>} : vector<18x64xbf16>, vector<64x32xbf16>, vector<18x32xf32> -> vector<18x32xf32>
    %c0_86 = arith.constant 0 : index
    %c0_87 = arith.constant 0 : index
    %c0_88 = arith.constant 0 : index
    %222 = vector.load %arg19[%c0_86, %c0_87, %c0_88] : memref<1x1x32xf32, #tpu.memory_space<vmem>>, vector<1x1x32xf32>
    %223 = vector.shape_cast %222 : vector<1x1x32xf32> to vector<1x32xf32>
    %224 = vector.broadcast %223 : vector<1x32xf32> to vector<18x32xf32>
    %225 = arith.addf %221, %224 : vector<18x32xf32>
    %226 = arith.addf %207, %225 : vector<18x32xf32>
    %c0_89 = arith.constant 0 : index
    %c0_90 = arith.constant 0 : index
    %c0_91 = arith.constant 0 : index
    %227 = vector.load %arg20[%c0_89, %c0_90, %c0_91] : memref<1x1x32xf32, #tpu.memory_space<vmem>>, vector<1x1x32xf32>
    %228 = vector.shape_cast %227 : vector<1x1x32xf32> to vector<1x32xf32>
    %c0_92 = arith.constant 0 : index
    %c0_93 = arith.constant 0 : index
    %c0_94 = arith.constant 0 : index
    %229 = vector.load %arg21[%c0_92, %c0_93, %c0_94] : memref<1x1x32xf32, #tpu.memory_space<vmem>>, vector<1x1x32xf32>
    %230 = vector.shape_cast %229 : vector<1x1x32xf32> to vector<1x32xf32>
    %cst_95 = arith.constant dense<0.000000e+00> : vector<18xf32>
    %231 = vector.multi_reduction <add>, %226, %cst_95 [1] : vector<18x32xf32> to vector<18xf32>
    %232 = vector.shape_cast %231 : vector<18xf32> to vector<18x1xf32>
    %cst_96 = arith.constant 3.200000e+01 : f32
    %233 = vector.broadcast %cst_96 : f32 to vector<18x1xf32>
    %234 = arith.divf %232, %233 : vector<18x1xf32>
    %235 = vector.broadcast %234 : vector<18x1xf32> to vector<18x32xf32>
    %236 = arith.subf %226, %235 : vector<18x32xf32>
    %237 = arith.mulf %236, %236 : vector<18x32xf32>
    %cst_97 = arith.constant dense<0.000000e+00> : vector<18xf32>
    %238 = vector.multi_reduction <add>, %237, %cst_97 [1] : vector<18x32xf32> to vector<18xf32>
    %239 = vector.shape_cast %238 : vector<18xf32> to vector<18x1xf32>
    %cst_98 = arith.constant 3.200000e+01 : f32
    %240 = vector.broadcast %cst_98 : f32 to vector<18x1xf32>
    %241 = arith.divf %239, %240 : vector<18x1xf32>
    %242 = vector.broadcast %234 : vector<18x1xf32> to vector<18x32xf32>
    %243 = arith.subf %226, %242 : vector<18x32xf32>
    %cst_99 = arith.constant 9.99999974E-6 : f32
    %244 = vector.broadcast %cst_99 : f32 to vector<18x1xf32>
    %245 = arith.addf %241, %244 : vector<18x1xf32>
    %246 = math.rsqrt %245 : vector<18x1xf32>
    %247 = vector.broadcast %246 : vector<18x1xf32> to vector<18x32xf32>
    %248 = arith.mulf %243, %247 : vector<18x32xf32>
    %249 = vector.broadcast %228 : vector<1x32xf32> to vector<18x32xf32>
    %250 = arith.mulf %248, %249 : vector<18x32xf32>
    %251 = vector.broadcast %230 : vector<1x32xf32> to vector<18x32xf32>
    %252 = arith.addf %250, %251 : vector<18x32xf32>
    %253 = arith.truncf %252 : vector<18x32xf32> to vector<18x32xbf16>
    %c0_100 = arith.constant 0 : index
    %c0_101 = arith.constant 0 : index
    %254 = vector.load %arg28[%c0_100, %c0_101] : memref<18x32xf32, #tpu.memory_space<vmem>>, vector<18x32xf32>
    tpu.vector_store %arg28[%c0_100, %c0_101], %252 {strides = array<i32>} : memref<18x32xf32, #tpu.memory_space<vmem>>, vector<18x32xf32>,
    %c0_102 = arith.constant 0 : index
    %c0_103 = arith.constant 0 : index
    %255 = vector.load %arg29[%c0_102, %c0_103] : memref<18x32xbf16, #tpu.memory_space<vmem>>, vector<18x32xbf16>
    tpu.vector_store %arg29[%c0_102, %c0_103], %253 {strides = array<i32>} : memref<18x32xbf16, #tpu.memory_space<vmem>>, vector<18x32xbf16>,
    %c0_104 = arith.constant 0 : index
    %c0_105 = arith.constant 0 : index
    %c0_106 = arith.constant 0 : index
    %256 = vector.load %arg26[%c0_104, %c0_105, %c0_106] : memref<1x18x32xbf16, #tpu.memory_space<vmem>>, vector<1x18x32xbf16>
    %257 = vector.shape_cast %256 : vector<1x18x32xbf16> to vector<18x32xbf16>
    %258 = vector.shape_cast %253 : vector<18x32xbf16> to vector<1x18x32xbf16>
    tpu.vector_store %arg26[%c0_104, %c0_105, %c0_106], %258 {strides = array<i32>} : memref<1x18x32xbf16, #tpu.memory_space<vmem>>, vector<1x18x32xbf16>,
    %c1_i32 = arith.constant 1 : i32
    %259 = arith.cmpi eq, %arg0, %c1_i32 : i32
    %260 = arith.extui %259 : i1 to i32
    %c0_i32_107 = arith.constant 0 : i32
    %261 = arith.cmpi ne, %260, %c0_i32_107 : i32
    scf.if %261 {
      %262 = vector.extract_strided_slice %252 {offsets = [0, 0], sizes = [1, 32], strides = [1, 1]} : vector<18x32xf32> to vector<1x32xf32>
      %263 = vector.extract_strided_slice %252 {offsets = [9, 0], sizes = [1, 32], strides = [1, 1]} : vector<18x32xf32> to vector<1x32xf32>
      %264 = tpu.concatenate %262, %263 in 0 : vector<1x32xf32>, vector<1x32xf32> -> vector<2x32xf32>
      %c0_108 = arith.constant 0 : index
      %c0_109 = arith.constant 0 : index
      %265 = vector.load %arg22[%c0_108, %c0_109] : memref<1x32xf32, #tpu.memory_space<vmem>>, vector<1x32xf32>
      %c0_110 = arith.constant 0 : index
      %c0_111 = arith.constant 0 : index
      %266 = vector.load %arg23[%c0_110, %c0_111] : memref<1x32xf32, #tpu.memory_space<vmem>>, vector<1x32xf32>
      %cst_112 = arith.constant dense<0.000000e+00> : vector<2xf32>
      %267 = vector.multi_reduction <add>, %264, %cst_112 [1] : vector<2x32xf32> to vector<2xf32>
      %268 = vector.shape_cast %267 : vector<2xf32> to vector<2x1xf32>
      %cst_113 = arith.constant 3.200000e+01 : f32
      %269 = vector.broadcast %cst_113 : f32 to vector<2x1xf32>
      %270 = arith.divf %268, %269 : vector<2x1xf32>
      %271 = vector.broadcast %270 : vector<2x1xf32> to vector<2x32xf32>
      %272 = arith.subf %264, %271 : vector<2x32xf32>
      %273 = arith.mulf %272, %272 : vector<2x32xf32>
      %cst_114 = arith.constant dense<0.000000e+00> : vector<2xf32>
      %274 = vector.multi_reduction <add>, %273, %cst_114 [1] : vector<2x32xf32> to vector<2xf32>
      %275 = vector.shape_cast %274 : vector<2xf32> to vector<2x1xf32>
      %cst_115 = arith.constant 3.200000e+01 : f32
      %276 = vector.broadcast %cst_115 : f32 to vector<2x1xf32>
      %277 = arith.divf %275, %276 : vector<2x1xf32>
      %278 = vector.broadcast %270 : vector<2x1xf32> to vector<2x32xf32>
      %279 = arith.subf %264, %278 : vector<2x32xf32>
      %cst_116 = arith.constant 9.99999974E-6 : f32
      %280 = vector.broadcast %cst_116 : f32 to vector<2x1xf32>
      %281 = arith.addf %277, %280 : vector<2x1xf32>
      %282 = math.rsqrt %281 : vector<2x1xf32>
      %283 = vector.broadcast %282 : vector<2x1xf32> to vector<2x32xf32>
      %284 = arith.mulf %279, %283 : vector<2x32xf32>
      %285 = vector.broadcast %265 : vector<1x32xf32> to vector<2x32xf32>
      %286 = arith.mulf %284, %285 : vector<2x32xf32>
      %287 = vector.broadcast %266 : vector<1x32xf32> to vector<2x32xf32>
      %288 = arith.addf %286, %287 : vector<2x32xf32>
      %289 = arith.truncf %288 : vector<2x32xf32> to vector<2x32xbf16>
      %c0_117 = arith.constant 0 : index
      %c0_118 = arith.constant 0 : index
      %290 = vector.load %arg24[%c0_117, %c0_118] : memref<32x5xbf16, #tpu.memory_space<vmem>>, vector<32x5xbf16>
      %cst_119 = arith.constant dense<0.000000e+00> : vector<2x5xf32>
      %291 = tpu.matmul %289, %290, %cst_119 {dimension_numbers = #tpu.dot_dimension_numbers<[1], [0], [0], [1], [0, 0, 1, 1], [], []>} : vector<2x32xbf16>, vector<32x5xbf16>, vector<2x5xf32> -> vector<2x5xf32>
      %c0_120 = arith.constant 0 : index
      %c0_121 = arith.constant 0 : index
      %292 = vector.load %arg25[%c0_120, %c0_121] : memref<1x5xf32, #tpu.memory_space<vmem>>, vector<1x5xf32>
      %293 = vector.broadcast %292 : vector<1x5xf32> to vector<2x5xf32>
      %294 = arith.addf %291, %293 : vector<2x5xf32>
      %c0_122 = arith.constant 0 : index
      %c0_123 = arith.constant 0 : index
      %295 = vector.load %arg27[%c0_122, %c0_123] : memref<2x5xf32, #tpu.memory_space<vmem>>, vector<2x5xf32>
      tpu.vector_store %arg27[%c0_122, %c0_123], %294 {strides = array<i32>} : memref<2x5xf32, #tpu.memory_space<vmem>>, vector<2x5xf32>,
    } else {
    }
    return
  }
  func.func @transform_0(%arg0: i32) -> (i32, i32) {
    %c0_i32 = arith.constant 0 : i32
    %c0_i32_0 = arith.constant 0 : i32
    %c0_i32_1 = arith.constant 0 : i32
    return %c0_i32, %c0_i32_0 : i32, i32
  }
  func.func @transform_1(%arg0: i32) -> (i32, i32) {
    %c0_i32 = arith.constant 0 : i32
    %c0_i32_0 = arith.constant 0 : i32
    %c0_i32_1 = arith.constant 0 : i32
    return %c0_i32, %c0_i32_0 : i32, i32
  }
  func.func @transform_2(%arg0: i32) -> (i32, i32) {
    %c0_i32 = arith.constant 0 : i32
    %c0_i32_0 = arith.constant 0 : i32
    %c0_i32_1 = arith.constant 0 : i32
    return %c0_i32, %c0_i32_0 : i32, i32
  }
  func.func @transform_3(%arg0: i32) -> (i32, i32) {
    %c0_i32 = arith.constant 0 : i32
    %c0_i32_0 = arith.constant 0 : i32
    %c0_i32_1 = arith.constant 0 : i32
    return %c0_i32, %c0_i32_0 : i32, i32
  }
  func.func @transform_4(%arg0: i32) -> (i32, i32) {
    %c0_i32 = arith.constant 0 : i32
    %c0_i32_0 = arith.constant 0 : i32
    %c0_i32_1 = arith.constant 0 : i32
    return %c0_i32, %c0_i32_0 : i32, i32
  }
  func.func @transform_5(%arg0: i32) -> (i32, i32) {
    %c0_i32 = arith.constant 0 : i32
    %c0_i32_0 = arith.constant 0 : i32
    %c0_i32_1 = arith.constant 0 : i32
    return %c0_i32, %c0_i32_0 : i32, i32
  }
  func.func @transform_6(%arg0: i32) -> (i32, i32) {
    %c0_i32 = arith.constant 0 : i32
    %c0_i32_0 = arith.constant 0 : i32
    %c0_i32_1 = arith.constant 0 : i32
    return %c0_i32, %c0_i32_0 : i32, i32
  }
  func.func @transform_7(%arg0: i32) -> (i32, i32) {
    %c0_i32 = arith.constant 0 : i32
    %c0_i32_0 = arith.constant 0 : i32
    %c0_i32_1 = arith.constant 0 : i32
    return %c0_i32, %c0_i32_0 : i32, i32
  }
  func.func @transform_8(%arg0: i32) -> (i32, i32) {
    %c0_i32 = arith.constant 0 : i32
    %c0_i32_0 = arith.constant 0 : i32
    %c0_i32_1 = arith.constant 0 : i32
    return %c0_i32, %c0_i32_0 : i32, i32
  }
  func.func @transform_9(%arg0: i32) -> (i32, i32, i32) {
    %c0_i32 = arith.constant 0 : i32
    %c0_i32_0 = arith.constant 0 : i32
    %c0_i32_1 = arith.constant 0 : i32
    return %arg0, %c0_i32, %c0_i32_0 : i32, i32, i32
  }
  func.func @transform_10(%arg0: i32) -> (i32, i32, i32) {
    %c0_i32 = arith.constant 0 : i32
    %c0_i32_0 = arith.constant 0 : i32
    %c0_i32_1 = arith.constant 0 : i32
    return %arg0, %c0_i32, %c0_i32_0 : i32, i32, i32
  }
  func.func @transform_11(%arg0: i32) -> (i32, i32, i32) {
    %c0_i32 = arith.constant 0 : i32
    %c0_i32_0 = arith.constant 0 : i32
    %c0_i32_1 = arith.constant 0 : i32
    return %arg0, %c0_i32, %c0_i32_0 : i32, i32, i32
  }
  func.func @transform_12(%arg0: i32) -> (i32, i32, i32) {
    %c0_i32 = arith.constant 0 : i32
    %c0_i32_0 = arith.constant 0 : i32
    %c0_i32_1 = arith.constant 0 : i32
    return %arg0, %c0_i32, %c0_i32_0 : i32, i32, i32
  }
  func.func @transform_13(%arg0: i32) -> (i32, i32, i32) {
    %c0_i32 = arith.constant 0 : i32
    %c0_i32_0 = arith.constant 0 : i32
    %c0_i32_1 = arith.constant 0 : i32
    return %arg0, %c0_i32, %c0_i32_0 : i32, i32, i32
  }
  func.func @transform_14(%arg0: i32) -> (i32, i32, i32) {
    %c0_i32 = arith.constant 0 : i32
    %c0_i32_0 = arith.constant 0 : i32
    %c0_i32_1 = arith.constant 0 : i32
    return %arg0, %c0_i32, %c0_i32_0 : i32, i32, i32
  }
  func.func @transform_15(%arg0: i32) -> (i32, i32, i32) {
    %c0_i32 = arith.constant 0 : i32
    %c0_i32_0 = arith.constant 0 : i32
    %c0_i32_1 = arith.constant 0 : i32
    return %arg0, %c0_i32, %c0_i32_0 : i32, i32, i32
  }
  func.func @transform_16(%arg0: i32) -> (i32, i32, i32) {
    %c0_i32 = arith.constant 0 : i32
    %c0_i32_0 = arith.constant 0 : i32
    %c0_i32_1 = arith.constant 0 : i32
    return %arg0, %c0_i32, %c0_i32_0 : i32, i32, i32
  }
  func.func @transform_17(%arg0: i32) -> (i32, i32, i32) {
    %c0_i32 = arith.constant 0 : i32
    %c0_i32_0 = arith.constant 0 : i32
    %c0_i32_1 = arith.constant 0 : i32
    return %arg0, %c0_i32, %c0_i32_0 : i32, i32, i32
  }
  func.func @transform_18(%arg0: i32) -> (i32, i32, i32) {
    %c0_i32 = arith.constant 0 : i32
    %c0_i32_0 = arith.constant 0 : i32
    %c0_i32_1 = arith.constant 0 : i32
    return %arg0, %c0_i32, %c0_i32_0 : i32, i32, i32
  }
  func.func @transform_19(%arg0: i32) -> (i32, i32, i32) {
    %c0_i32 = arith.constant 0 : i32
    %c0_i32_0 = arith.constant 0 : i32
    %c0_i32_1 = arith.constant 0 : i32
    return %arg0, %c0_i32, %c0_i32_0 : i32, i32, i32
  }
  func.func @transform_20(%arg0: i32) -> (i32, i32, i32) {
    %c0_i32 = arith.constant 0 : i32
    %c0_i32_0 = arith.constant 0 : i32
    %c0_i32_1 = arith.constant 0 : i32
    return %arg0, %c0_i32, %c0_i32_0 : i32, i32, i32
  }
  func.func @transform_21(%arg0: i32) -> (i32, i32) {
    %c0_i32 = arith.constant 0 : i32
    %c0_i32_0 = arith.constant 0 : i32
    %c0_i32_1 = arith.constant 0 : i32
    return %c0_i32, %c0_i32_0 : i32, i32
  }
  func.func @transform_22(%arg0: i32) -> (i32, i32) {
    %c0_i32 = arith.constant 0 : i32
    %c0_i32_0 = arith.constant 0 : i32
    %c0_i32_1 = arith.constant 0 : i32
    return %c0_i32, %c0_i32_0 : i32, i32
  }
  func.func @transform_23(%arg0: i32) -> (i32, i32) {
    %c0_i32 = arith.constant 0 : i32
    %c0_i32_0 = arith.constant 0 : i32
    %c0_i32_1 = arith.constant 0 : i32
    return %c0_i32, %c0_i32_0 : i32, i32
  }
  func.func @transform_24(%arg0: i32) -> (i32, i32) {
    %c0_i32 = arith.constant 0 : i32
    %c0_i32_0 = arith.constant 0 : i32
    %c0_i32_1 = arith.constant 0 : i32
    return %c0_i32, %c0_i32_0 : i32, i32
  }
  func.func @transform_25(%arg0: i32) -> (i32, i32, i32) {
    %c0_i32 = arith.constant 0 : i32
    %c0_i32_0 = arith.constant 0 : i32
    %c0_i32_1 = arith.constant 0 : i32
    return %arg0, %c0_i32, %c0_i32_0 : i32, i32, i32
  }
  func.func @transform_26(%arg0: i32) -> (i32, i32) {
    %c0_i32 = arith.constant 0 : i32
    %c0_i32_0 = arith.constant 0 : i32
    %c0_i32_1 = arith.constant 0 : i32
    return %c0_i32, %c0_i32_0 : i32, i32
  }
}

</mosaic_0001>

<llo_original>
// kernel: tile.17
$region0: #{tile.17}
  %s0 = inlined_call_operand.vmem [shape: f32[2,9,32], index: 0, kind: input, shape index: {}]
  %s1 = inlined_call_operand.vmem [shape: f32[18,32], index: 1, kind: output, shape index: {}]
  %v2 = vld [vmem:[%s0] sm:$0xff]
  %vm3 = vcmask 261120
  %4 = vst.msk [vmem:[%s1] sm:$0xff] %vm3, %v2
  %s5 = scalar_lea.vmem %s0, 8
  %s6 = smov 3
  %v7 = vld [vmem:[%s5] ss:$8 sm:%s6]
  %vm8 = vcmask 261120
  %s9 = scalar_lea.vmem %s1, 8
  %10 = vst.msk [vmem:[%s9] sm:$0x3] %vm8, %v7
  %s11 = scalar_lea.vmem %s0, 17
  %v12 = vld [vmem:[%s11] sm:$0xff]
  %vm13 = vcmask 261120
  %s14 = scalar_lea.vmem %s1, 10
  %15 = vst.msk [vmem:[%s14] sm:$0xff] %vm13, %v12

// kernel: squeeze.6
$region0: #{squeeze.6}
  %s0 = inlined_call_operand.vmem [shape: bf16[1,18,32], index: 0, kind: input, shape index: {}]
  %s1 = inlined_call_operand.vmem [shape: bf16[2,9,32], index: 1, kind: output, shape index: {}]
  $region1: #{squeeze.6} parent=0
    #allocation0 [shape = 'u8[16384]{0}', space=vmem, size = 0x4000, scoped, tag = 'scoped mem for output reshape']
    #allocation1 [shape = 'u8[12288]{0}', space=vmem, size = 0x3000, scoped, tag = 'scoped mem for input reshape']
    %s3 = smul.u32 4, 2
    %s4 = sshll.u32 1, %s3
    %s5 = ssub.s32 %s4, 1
    %s6 = smul.addr 4, 2
    %s7 = scalar_lea.vmem %s0, %s6
    %s8 = sshrl.u32 %s5, 1
    %s9 = sor.u32 %s5, %s8
    %s10 = sand.u32 %s9, 85
    %s11 = sshrl.u32 %s10, 1
    %s12 = sor.u32 %s10, %s11
    %s13 = sand.u32 51, %s12
    %s14 = sshrl.u32 %s13, 2
    %s15 = sor.u32 %s13, %s14
    %s16 = sand.u32 15, %s15
    %v17 = vld [vmem:[%s7] sm:%s16]
    %v18 = vunpack.c.l.bf16 %v17
    %v19 = vunpack.c.h.bf16 %v17
    %s20 = scalar_lea.vmem [#allocation1], 16
    %21 = vst [vmem:[%s20] sm:%s5] %v18
    %s22 = scalar_lea.vmem %s0, 4
    %s23 = sshrl.u32 %s5, 1
    %s24 = sor.u32 %s5, %s23
    %s25 = sand.u32 %s24, 85
    %s26 = sshrl.u32 %s25, 1
    %s27 = sor.u32 %s25, %s26
    %s28 = sand.u32 51, %s27
    %s29 = sshrl.u32 %s28, 2
    %s30 = sor.u32 %s28, %s29
    %s31 = sand.u32 15, %s30
    %v32 = vld [vmem:[%s22] sm:%s31]
    %v33 = vunpack.c.l.bf16 %v32
    %v34 = vunpack.c.h.bf16 %v32
    %s35 = scalar_lea.vmem [#allocation1], 8
    %36 = vst [vmem:[%s35] sm:%s5] %v33
    %s37 = sshrl.u32 %s5, 1
    %s38 = sor.u32 %s5, %s37
    %s39 = sand.u32 %s38, 85
    %s40 = sshrl.u32 %s39, 1
    %s41 = sor.u32 %s39, %s40
    %s42 = sand.u32 51, %s41
    %s43 = sshrl.u32 %s42, 2
    %s44 = sor.u32 %s42, %s43
    %s45 = sand.u32 15, %s44
    %v46 = vld [vmem:[%s0] sm:%s45]
    %v47 = vunpack.c.l.bf16 %v46
    %v48 = vunpack.c.h.bf16 %v46
    %49 = vst [vmem:[#allocation1] sm:%s5] %v47
    %v50 = vld [vmem:[#allocation1] sm:$0xff]
    %vm51 = vcmask 261120
    %52 = vst.msk [vmem:[#allocation0] sm:$0xff] %vm51, %v50
    %s53 = scalar_lea.vmem [#allocation1], 8
    %v54 = vld [vmem:[%s53] sm:$0xff]
    %vm55 = vcmask 261120
    %s56 = scalar_lea.vmem [#allocation0], 8
    %57 = vst.msk [vmem:[%s56] ss:$8 sm:$0x3] %vm55, %v54
    %s58 = scalar_lea.vmem [#allocation0], 15
    %59 = vst.msk [vmem:[%s58] sm:$0xfc] %vm55, %v54
    %s60 = scalar_lea.vmem [#allocation1], 16
    %v61 = vld [vmem:[%s60] sm:$0x3]
    %vm62 = vcmask 261120
    %s63 = scalar_lea.vmem [#allocation0], 23
    %64 = vst.msk [vmem:[%s63] sm:$0x3] %vm62, %v61
    %s66 = smul.u32 4, 2
    %s67 = sshll.u32 1, %s66
    %s68 = ssub.s32 %s67, 1
    %s69 = sshrl.u32 %s66, 1
    %v70 = vld [vmem:[#allocation0] sm:%s68]
    %v71 = vpack.c.bf16 0.0, %v70
    %s72 = sshll.u32 1, %s69
    %s73 = ssub.s32 %s72, 1
    %74 = vst [vmem:[%s1] sm:%s73] %v71
    %s75 = scalar_lea.vmem [#allocation0], 8
    %v76 = vld [vmem:[%s75] sm:%s68]
    %v77 = vpack.c.bf16 0.0, %v76
    %s78 = sshll.u32 1, %s69
    %s79 = ssub.s32 %s78, 1
    %s80 = scalar_lea.vmem %s1, 4
    %81 = vst [vmem:[%s80] sm:%s79] %v77
    %s82 = scalar_lea.vmem [#allocation0], 16
    %v83 = vld [vmem:[%s82] sm:%s68]
    %v84 = vpack.c.bf16 0.0, %v83
    %s85 = sshll.u32 1, %s69
    %s86 = ssub.s32 %s85, 1
    %s87 = smul.addr 4, 2
    %s88 = scalar_lea.vmem %s1, %s87
    %89 = vst [vmem:[%s88] sm:%s86] %v84
    %s90 = scalar_lea.vmem [#allocation0], 24
    %v91 = vld [vmem:[%s90] sm:%s68]
    %v92 = vpack.c.bf16 0.0, %v91
    %s93 = sshll.u32 1, %s69
    %s94 = ssub.s32 %s93, 1
    %s95 = smul.addr 4, 3
    %s96 = scalar_lea.vmem %s1, %s95
    %97 = vst [vmem:[%s96] sm:%s94] %v92

// kernel: vit_forward.1
$region0: #{vit_forward.1}
  #allocation0 [shape = 'u32[]', space=smem, size = 0x4, offset = 0x4, fixed_abs, tag = 'smem constant byte address 0x4 - core index']
  #allocation1 [shape = 'u32[144,128]{1,0:T(1,128)}', space=vmem, size = 0x12000, scoped, tag = 'internal scratch']
  #allocation2 [shape = 'f32[18,32]{1,0:T(8,128)}', space=vmem, size = 0x3000, scoped, tag = 'scratch operand']
  #allocation3 [shape = 'bf16[18,32]{1,0:T(8,128)(2,1)}', space=vmem, size = 0x1800, scoped, tag = 'scratch operand']
  #allocation4 [shape = 'f32[18,32]{1,0:T(8,128)}', space=vmem, size = 0x3000, scoped, tag = 'scratch operand']
  %s0 = inlined_call_operand.vmem [shape: f32[18,384], index: 0, kind: input, shape index: {}]
  %s1 = inlined_call_operand.vmem [shape: f32[18,1], index: 1, kind: input, shape index: {}]
  %s2 = inlined_call_operand.vmem [shape: f32[1,384], index: 2, kind: input, shape index: {}]
  %s3 = inlined_call_operand.vmem [shape: f32[1,384], index: 3, kind: input, shape index: {}]
  %s4 = inlined_call_operand.vmem [shape: bf16[384,32], index: 4, kind: input, shape index: {}]
  %s5 = inlined_call_operand.vmem [shape: f32[1,32], index: 5, kind: input, shape index: {}]
  %s6 = inlined_call_operand.vmem [shape: f32[1,32], index: 6, kind: input, shape index: {}]
  %s7 = inlined_call_operand.vmem [shape: f32[1,32], index: 7, kind: input, shape index: {}]
  %s8 = inlined_call_operand.vmem [shape: f32[18,32], index: 8, kind: input, shape index: {}]
  %s9 = inlined_call_operand.vmem [shape: bf16[2,32,96], index: 9, kind: input, shape index: {}]
  %s10 = inlined_call_operand.vmem [shape: f32[2,1,96], index: 10, kind: input, shape index: {}]
  %s11 = inlined_call_operand.vmem [shape: bf16[2,32,32], index: 11, kind: input, shape index: {}]
  %s12 = inlined_call_operand.vmem [shape: f32[2,1,32], index: 12, kind: input, shape index: {}]
  %s13 = inlined_call_operand.vmem [shape: f32[2,1,32], index: 13, kind: input, shape index: {}]
  %s14 = inlined_call_operand.vmem [shape: f32[2,1,32], index: 14, kind: input, shape index: {}]
  %s15 = inlined_call_operand.vmem [shape: bf16[2,32,64], index: 15, kind: input, shape index: {}]
  %s16 = inlined_call_operand.vmem [shape: f32[2,1,64], index: 16, kind: input, shape index: {}]
  %s17 = inlined_call_operand.vmem [shape: bf16[2,64,32], index: 17, kind: input, shape index: {}]
  %s18 = inlined_call_operand.vmem [shape: f32[2,1,32], index: 18, kind: input, shape index: {}]
  %s19 = inlined_call_operand.vmem [shape: f32[2,1,32], index: 19, kind: input, shape index: {}]
  %s20 = inlined_call_operand.vmem [shape: f32[2,1,32], index: 20, kind: input, shape index: {}]
  %s21 = inlined_call_operand.vmem [shape: f32[1,32], index: 21, kind: input, shape index: {}]
  %s22 = inlined_call_operand.vmem [shape: f32[1,32], index: 22, kind: input, shape index: {}]
  %s23 = inlined_call_operand.vmem [shape: bf16[32,5], index: 23, kind: input, shape index: {}]
  %s24 = inlined_call_operand.vmem [shape: f32[1,5], index: 24, kind: input, shape index: {}]
  %s25 = inlined_call_operand.vmem [shape: bf16[2,18,32], index: 25, kind: output, shape index: {0}]
  %s26 = inlined_call_operand.hbm [shape: f32[2,5], index: 26, kind: output, shape index: {1}]
  %27 = xla_tuple %s25, %s26
  %s28 = sld [smem:[#allocation0]]
  $region149: #{vit_forward.1} parent=0
    _
  %s30 = ssub.s32 1, %s28
  %s31 = scalar_select 0, %s30, %s28
  $region1: #{vit_forward.1} parent=0
    #allocation5 [shape = 'u8[1024]{0}', space=vmem, size = 0x400, scoped, tag = 'output window, operand 1, single buffered']
    #allocation6 [shape = 's32[2]{0}', space=sflag, size = 0x8, scoped, tag = 'scoped memory for vit_forward.1']
    %32 = vsyncpa [#allocation6], 0
    loop: start=0, step=1, limit=4
    $region2: #{vit_forward.1} parent=1 // loop_pre_header
      _
    $region3: #{vit_forward.1} parent=1 // loop_header
      %s34 = sphi 0, %s38
      %p35 = scmp.ge.s32.totalorder %s34, 4
      %s42 = sphi 0, %s42
      %s44 = sphi 0, %s42
      %s45 = sphi 0, %s44
      %s59 = sphi 0, %s45
      %s63 = sphi 0, %s63
      %s65 = sphi 0, %s63
      %s66 = sphi 0, %s65
      %s80 = sphi 0, %s66
      %s84 = sphi 0, %s84
      %s86 = sphi 0, %s84
      %s87 = sphi 0, %s86
      %s101 = sphi 0, %s87
      %s105 = sphi 0, %s105
      %s107 = sphi 0, %s105
      %s108 = sphi 0, %s107
      %s122 = sphi 0, %s108
      %s126 = sphi 0, %s126
      %s128 = sphi 0, %s126
      %s129 = sphi 0, %s128
      %s143 = sphi 0, %s129
      %s147 = sphi 0, %s147
      %s149 = sphi 0, %s147
      %s150 = sphi 0, %s149
      %s164 = sphi 0, %s150
      %s168 = sphi 0, %s168
      %s170 = sphi 0, %s168
      %s171 = sphi 0, %s170
      %s185 = sphi 0, %s171
      %s189 = sphi 0, %s189
      %s191 = sphi 0, %s189
      %s192 = sphi 0, %s191
      %s206 = sphi 0, %s192
      %s210 = sphi 0, %s210
      %s212 = sphi 0, %s210
      %s213 = sphi 0, %s212
      %s227 = sphi 0, %s213
      %s233 = sphi 0, %s235
      %s236 = sphi 0, %s233
      %s237 = sphi 0, %s236
      %s253 = sphi 0, %s237
      %s259 = sphi 0, %s261
      %s262 = sphi 0, %s259
      %s263 = sphi 0, %s262
      %s279 = sphi 0, %s263
      %s285 = sphi 0, %s287
      %s288 = sphi 0, %s285
      %s289 = sphi 0, %s288
      %s305 = sphi 0, %s289
      %s311 = sphi 0, %s313
      %s314 = sphi 0, %s311
      %s315 = sphi 0, %s314
      %s331 = sphi 0, %s315
      %s337 = sphi 0, %s339
      %s340 = sphi 0, %s337
      %s341 = sphi 0, %s340
      %s357 = sphi 0, %s341
      %s363 = sphi 0, %s365
      %s366 = sphi 0, %s363
      %s367 = sphi 0, %s366
      %s383 = sphi 0, %s367
      %s389 = sphi 0, %s391
      %s392 = sphi 0, %s389
      %s393 = sphi 0, %s392
      %s409 = sphi 0, %s393
      %s415 = sphi 0, %s417
      %s418 = sphi 0, %s415
      %s419 = sphi 0, %s418
      %s435 = sphi 0, %s419
      %s441 = sphi 0, %s443
      %s444 = sphi 0, %s441
      %s445 = sphi 0, %s444
      %s461 = sphi 0, %s445
      %s467 = sphi 0, %s469
      %s470 = sphi 0, %s467
      %s471 = sphi 0, %s470
      %s487 = sphi 0, %s471
      %s493 = sphi 0, %s495
      %s496 = sphi 0, %s493
      %s497 = sphi 0, %s496
      %s513 = sphi 0, %s497
      %s519 = sphi 0, %s521
      %s522 = sphi 0, %s519
      %s523 = sphi 0, %s522
      %s539 = sphi 0, %s523
      %s543 = sphi 0, %s543
      %s545 = sphi 0, %s543
      %s546 = sphi 0, %s545
      %s560 = sphi 0, %s546
      %s564 = sphi 0, %s564
      %s566 = sphi 0, %s564
      %s567 = sphi 0, %s566
      %s581 = sphi 0, %s567
      %s585 = sphi 0, %s585
      %s587 = sphi 0, %s585
      %s588 = sphi 0, %s587
      %s602 = sphi 0, %s588
      %s606 = sphi 0, %s606
      %s608 = sphi 0, %s606
      %s609 = sphi 0, %s608
      %s623 = sphi 0, %s609
      %s629 = sphi 0, %s631
      %s632 = sphi 0, %s629
      %s633 = sphi 0, %s632
      %s649 = sphi 0, %s633
      %s653 = sphi 0, %s653
      %s655 = sphi 0, %s653
      %s656 = sphi 0, %s655
      %s670 = sphi 0, %s656
    $region4: #{vit_forward.1} parent=1 // loop_header_branch
      %37 = sbr.rel (%p35) target = $region8
    $region5: #{vit_forward.1} parent=1 // loop_body
      %s39 = ssub.s32 %s34, 1
      %s40 = ssub.s32 %s34, 2
      %s41 = sadd.s32 %s34, 1
      %s43 = sadd.s32 %s42, 1
      %p46 = scmp.eq.s32.totalorder %s34, 1
      %p47 = scmp.ne.s32.totalorder %s42, %s44
      %p48 = scmp.eq.s32.totalorder %s34, 0
      %p49 = por %p47, %p48
      %p50 = scmp.ne.s32.totalorder %s42, %s44
      %p51 = scmp.eq.s32.totalorder %s39, 1
      %p52 = por %p50, %p51
      %p53 = scmp.ne.s32.totalorder %s44, %s45
      %p54 = scmp.eq.s32.totalorder %s39, 0
      %p55 = por %p53, %p54
      %p56 = scmp.ne.s32.totalorder %s44, %s45
      %p57 = scmp.eq.s32.totalorder %s40, 1
      %p58 = por %p56, %p57
      %p60 = scmp.ne.s32.totalorder %s45, %s59
      %p61 = scmp.eq.s32.totalorder %s40, 0
      %p62 = por %p60, %p61
      %s64 = sadd.s32 %s63, 1
      %p67 = scmp.eq.s32.totalorder %s34, 1
      %p68 = scmp.ne.s32.totalorder %s63, %s65
      %p69 = scmp.eq.s32.totalorder %s34, 0
      %p70 = por %p68, %p69
      %p71 = scmp.ne.s32.totalorder %s63, %s65
      %p72 = scmp.eq.s32.totalorder %s39, 1
      %p73 = por %p71, %p72
      %p74 = scmp.ne.s32.totalorder %s65, %s66
      %p75 = scmp.eq.s32.totalorder %s39, 0
      %p76 = por %p74, %p75
      %p77 = scmp.ne.s32.totalorder %s65, %s66
      %p78 = scmp.eq.s32.totalorder %s40, 1
      %p79 = por %p77, %p78
      %p81 = scmp.ne.s32.totalorder %s66, %s80
      %p82 = scmp.eq.s32.totalorder %s40, 0
      %p83 = por %p81, %p82
      %s85 = sadd.s32 %s84, 1
      %p88 = scmp.eq.s32.totalorder %s34, 1
      %p89 = scmp.ne.s32.totalorder %s84, %s86
      %p90 = scmp.eq.s32.totalorder %s34, 0
      %p91 = por %p89, %p90
      %p92 = scmp.ne.s32.totalorder %s84, %s86
      %p93 = scmp.eq.s32.totalorder %s39, 1
      %p94 = por %p92, %p93
      %p95 = scmp.ne.s32.totalorder %s86, %s87
      %p96 = scmp.eq.s32.totalorder %s39, 0
      %p97 = por %p95, %p96
      %p98 = scmp.ne.s32.totalorder %s86, %s87
      %p99 = scmp.eq.s32.totalorder %s40, 1
      %p100 = por %p98, %p99
      %p102 = scmp.ne.s32.totalorder %s87, %s101
      %p103 = scmp.eq.s32.totalorder %s40, 0
      %p104 = por %p102, %p103
      %s106 = sadd.s32 %s105, 1
      %p109 = scmp.eq.s32.totalorder %s34, 1
      %p110 = scmp.ne.s32.totalorder %s105, %s107
      %p111 = scmp.eq.s32.totalorder %s34, 0
      %p112 = por %p110, %p111
      %p113 = scmp.ne.s32.totalorder %s105, %s107
      %p114 = scmp.eq.s32.totalorder %s39, 1
      %p115 = por %p113, %p114
      %p116 = scmp.ne.s32.totalorder %s107, %s108
      %p117 = scmp.eq.s32.totalorder %s39, 0
      %p118 = por %p116, %p117
      %p119 = scmp.ne.s32.totalorder %s107, %s108
      %p120 = scmp.eq.s32.totalorder %s40, 1
      %p121 = por %p119, %p120
      %p123 = scmp.ne.s32.totalorder %s108, %s122
      %p124 = scmp.eq.s32.totalorder %s40, 0
      %p125 = por %p123, %p124
      %s127 = sadd.s32 %s126, 1
      %p130 = scmp.eq.s32.totalorder %s34, 1
      %p131 = scmp.ne.s32.totalorder %s126, %s128
      %p132 = scmp.eq.s32.totalorder %s34, 0
      %p133 = por %p131, %p132
      %p134 = scmp.ne.s32.totalorder %s126, %s128
      %p135 = scmp.eq.s32.totalorder %s39, 1
      %p136 = por %p134, %p135
      %p137 = scmp.ne.s32.totalorder %s128, %s129
      %p138 = scmp.eq.s32.totalorder %s39, 0
      %p139 = por %p137, %p138
      %p140 = scmp.ne.s32.totalorder %s128, %s129
      %p141 = scmp.eq.s32.totalorder %s40, 1
      %p142 = por %p140, %p141
      %p144 = scmp.ne.s32.totalorder %s129, %s143
      %p145 = scmp.eq.s32.totalorder %s40, 0
      %p146 = por %p144, %p145
      %s148 = sadd.s32 %s147, 1
      %p151 = scmp.eq.s32.totalorder %s34, 1
      %p152 = scmp.ne.s32.totalorder %s147, %s149
      %p153 = scmp.eq.s32.totalorder %s34, 0
      %p154 = por %p152, %p153
      %p155 = scmp.ne.s32.totalorder %s147, %s149
      %p156 = scmp.eq.s32.totalorder %s39, 1
      %p157 = por %p155, %p156
      %p158 = scmp.ne.s32.totalorder %s149, %s150
      %p159 = scmp.eq.s32.totalorder %s39, 0
      %p160 = por %p158, %p159
      %p161 = scmp.ne.s32.totalorder %s149, %s150
      %p162 = scmp.eq.s32.totalorder %s40, 1
      %p163 = por %p161, %p162
      %p165 = scmp.ne.s32.totalorder %s150, %s164
      %p166 = scmp.eq.s32.totalorder %s40, 0
      %p167 = por %p165, %p166
      %s169 = sadd.s32 %s168, 1
      %p172 = scmp.eq.s32.totalorder %s34, 1
      %p173 = scmp.ne.s32.totalorder %s168, %s170
      %p174 = scmp.eq.s32.totalorder %s34, 0
      %p175 = por %p173, %p174
      %p176 = scmp.ne.s32.totalorder %s168, %s170
      %p177 = scmp.eq.s32.totalorder %s39, 1
      %p178 = por %p176, %p177
      %p179 = scmp.ne.s32.totalorder %s170, %s171
      %p180 = scmp.eq.s32.totalorder %s39, 0
      %p181 = por %p179, %p180
      %p182 = scmp.ne.s32.totalorder %s170, %s171
      %p183 = scmp.eq.s32.totalorder %s40, 1
      %p184 = por %p182, %p183
      %p186 = scmp.ne.s32.totalorder %s171, %s185
      %p187 = scmp.eq.s32.totalorder %s40, 0
      %p188 = por %p186, %p187
      %s190 = sadd.s32 %s189, 1
      %p193 = scmp.eq.s32.totalorder %s34, 1
      %p194 = scmp.ne.s32.totalorder %s189, %s191
      %p195 = scmp.eq.s32.totalorder %s34, 0
      %p196 = por %p194, %p195
      %p197 = scmp.ne.s32.totalorder %s189, %s191
      %p198 = scmp.eq.s32.totalorder %s39, 1
      %p199 = por %p197, %p198
      %p200 = scmp.ne.s32.totalorder %s191, %s192
      %p201 = scmp.eq.s32.totalorder %s39, 0
      %p202 = por %p200, %p201
      %p203 = scmp.ne.s32.totalorder %s191, %s192
      %p204 = scmp.eq.s32.totalorder %s40, 1
      %p205 = por %p203, %p204
      %p207 = scmp.ne.s32.totalorder %s192, %s206
      %p208 = scmp.eq.s32.totalorder %s40, 0
      %p209 = por %p207, %p208
      %s211 = sadd.s32 %s210, 1
      %p214 = scmp.eq.s32.totalorder %s34, 1
      %p215 = scmp.ne.s32.totalorder %s210, %s212
      %p216 = scmp.eq.s32.totalorder %s34, 0
      %p217 = por %p215, %p216
      %p218 = scmp.ne.s32.totalorder %s210, %s212
      %p219 = scmp.eq.s32.totalorder %s39, 1
      %p220 = por %p218, %p219
      %p221 = scmp.ne.s32.totalorder %s212, %s213
      %p222 = scmp.eq.s32.totalorder %s39, 0
      %p223 = por %p221, %p222
      %p224 = scmp.ne.s32.totalorder %s212, %s213
      %p225 = scmp.eq.s32.totalorder %s40, 1
      %p226 = por %p224, %p225
      %p228 = scmp.ne.s32.totalorder %s213, %s227
      %p229 = scmp.eq.s32.totalorder %s40, 0
      %p230 = por %p228, %p229
      %s231 = ssub.s32 %s34, %s41
      %p232 = scmp.eq.s32.totalorder %s231, 0
      %s234 = sadd.s32 %s233, 1
      %s235 = scalar_select %p232, %s233, %s234
      %p238 = pneg %p232
      %p239 = scmp.eq.s32.totalorder %s34, 1
      %p240 = por %p238, %p239
      %p241 = scmp.ne.s32.totalorder %s233, %s236
      %p242 = scmp.eq.s32.totalorder %s34, 0
      %p243 = por %p241, %p242
      %p244 = scmp.ne.s32.totalorder %s233, %s236
      %p245 = scmp.eq.s32.totalorder %s39, 1
      %p246 = por %p244, %p245
      %p247 = scmp.ne.s32.totalorder %s236, %s237
      %p248 = scmp.eq.s32.totalorder %s39, 0
      %p249 = por %p247, %p248
      %p250 = scmp.ne.s32.totalorder %s236, %s237
      %p251 = scmp.eq.s32.totalorder %s40, 1
      %p252 = por %p250, %p251
      %p254 = scmp.ne.s32.totalorder %s237, %s253
      %p255 = scmp.eq.s32.totalorder %s40, 0
      %p256 = por %p254, %p255
      %s257 = ssub.s32 %s34, %s41
      %p258 = scmp.eq.s32.totalorder %s257, 0
      %s260 = sadd.s32 %s259, 1
      %s261 = scalar_select %p258, %s259, %s260
      %p264 = pneg %p258
      %p265 = scmp.eq.s32.totalorder %s34, 1
      %p266 = por %p264, %p265
      %p267 = scmp.ne.s32.totalorder %s259, %s262
      %p268 = scmp.eq.s32.totalorder %s34, 0
      %p269 = por %p267, %p268
      %p270 = scmp.ne.s32.totalorder %s259, %s262
      %p271 = scmp.eq.s32.totalorder %s39, 1
      %p272 = por %p270, %p271
      %p273 = scmp.ne.s32.totalorder %s262, %s263
      %p274 = scmp.eq.s32.totalorder %s39, 0
      %p275 = por %p273, %p274
      %p276 = scmp.ne.s32.totalorder %s262, %s263
      %p277 = scmp.eq.s32.totalorder %s40, 1
      %p278 = por %p276, %p277
      %p280 = scmp.ne.s32.totalorder %s263, %s279
      %p281 = scmp.eq.s32.totalorder %s40, 0
      %p282 = por %p280, %p281
      %s283 = ssub.s32 %s34, %s41
      %p284 = scmp.eq.s32.totalorder %s283, 0
      %s286 = sadd.s32 %s285, 1
      %s287 = scalar_select %p284, %s285, %s286
      %p290 = pneg %p284
      %p291 = scmp.eq.s32.totalorder %s34, 1
      %p292 = por %p290, %p291
      %p293 = scmp.ne.s32.totalorder %s285, %s288
      %p294 = scmp.eq.s32.totalorder %s34, 0
      %p295 = por %p293, %p294
      %p296 = scmp.ne.s32.totalorder %s285, %s288
      %p297 = scmp.eq.s32.totalorder %s39, 1
      %p298 = por %p296, %p297
      %p299 = scmp.ne.s32.totalorder %s288, %s289
      %p300 = scmp.eq.s32.totalorder %s39, 0
      %p301 = por %p299, %p300
      %p302 = scmp.ne.s32.totalorder %s288, %s289
      %p303 = scmp.eq.s32.totalorder %s40, 1
      %p304 = por %p302, %p303
      %p306 = scmp.ne.s32.totalorder %s289, %s305
      %p307 = scmp.eq.s32.totalorder %s40, 0
      %p308 = por %p306, %p307
      %s309 = ssub.s32 %s34, %s41
      %p310 = scmp.eq.s32.totalorder %s309, 0
      %s312 = sadd.s32 %s311, 1
      %s313 = scalar_select %p310, %s311, %s312
      %p316 = pneg %p310
      %p317 = scmp.eq.s32.totalorder %s34, 1
      %p318 = por %p316, %p317
      %p319 = scmp.ne.s32.totalorder %s311, %s314
      %p320 = scmp.eq.s32.totalorder %s34, 0
      %p321 = por %p319, %p320
      %p322 = scmp.ne.s32.totalorder %s311, %s314
      %p323 = scmp.eq.s32.totalorder %s39, 1
      %p324 = por %p322, %p323
      %p325 = scmp.ne.s32.totalorder %s314, %s315
      %p326 = scmp.eq.s32.totalorder %s39, 0
      %p327 = por %p325, %p326
      %p328 = scmp.ne.s32.totalorder %s314, %s315
      %p329 = scmp.eq.s32.totalorder %s40, 1
      %p330 = por %p328, %p329
      %p332 = scmp.ne.s32.totalorder %s315, %s331
      %p333 = scmp.eq.s32.totalorder %s40, 0
      %p334 = por %p332, %p333
      %s335 = ssub.s32 %s34, %s41
      %p336 = scmp.eq.s32.totalorder %s335, 0
      %s338 = sadd.s32 %s337, 1
      %s339 = scalar_select %p336, %s337, %s338
      %p342 = pneg %p336
      %p343 = scmp.eq.s32.totalorder %s34, 1
      %p344 = por %p342, %p343
      %p345 = scmp.ne.s32.totalorder %s337, %s340
      %p346 = scmp.eq.s32.totalorder %s34, 0
      %p347 = por %p345, %p346
      %p348 = scmp.ne.s32.totalorder %s337, %s340
      %p349 = scmp.eq.s32.totalorder %s39, 1
      %p350 = por %p348, %p349
      %p351 = scmp.ne.s32.totalorder %s340, %s341
      %p352 = scmp.eq.s32.totalorder %s39, 0
      %p353 = por %p351, %p352
      %p354 = scmp.ne.s32.totalorder %s340, %s341
      %p355 = scmp.eq.s32.totalorder %s40, 1
      %p356 = por %p354, %p355
      %p358 = scmp.ne.s32.totalorder %s341, %s357
      %p359 = scmp.eq.s32.totalorder %s40, 0
      %p360 = por %p358, %p359
      %s361 = ssub.s32 %s34, %s41
      %p362 = scmp.eq.s32.totalorder %s361, 0
      %s364 = sadd.s32 %s363, 1
      %s365 = scalar_select %p362, %s363, %s364
      %p368 = pneg %p362
      %p369 = scmp.eq.s32.totalorder %s34, 1
      %p370 = por %p368, %p369
      %p371 = scmp.ne.s32.totalorder %s363, %s366
      %p372 = scmp.eq.s32.totalorder %s34, 0
      %p373 = por %p371, %p372
      %p374 = scmp.ne.s32.totalorder %s363, %s366
      %p375 = scmp.eq.s32.totalorder %s39, 1
      %p376 = por %p374, %p375
      %p377 = scmp.ne.s32.totalorder %s366, %s367
      %p378 = scmp.eq.s32.totalorder %s39, 0
      %p379 = por %p377, %p378
      %p380 = scmp.ne.s32.totalorder %s366, %s367
      %p381 = scmp.eq.s32.totalorder %s40, 1
      %p382 = por %p380, %p381
      %p384 = scmp.ne.s32.totalorder %s367, %s383
      %p385 = scmp.eq.s32.totalorder %s40, 0
      %p386 = por %p384, %p385
      %s387 = ssub.s32 %s34, %s41
      %p388 = scmp.eq.s32.totalorder %s387, 0
      %s390 = sadd.s32 %s389, 1
      %s391 = scalar_select %p388, %s389, %s390
      %p394 = pneg %p388
      %p395 = scmp.eq.s32.totalorder %s34, 1
      %p396 = por %p394, %p395
      %p397 = scmp.ne.s32.totalorder %s389, %s392
      %p398 = scmp.eq.s32.totalorder %s34, 0
      %p399 = por %p397, %p398
      %p400 = scmp.ne.s32.totalorder %s389, %s392
      %p401 = scmp.eq.s32.totalorder %s39, 1
      %p402 = por %p400, %p401
      %p403 = scmp.ne.s32.totalorder %s392, %s393
      %p404 = scmp.eq.s32.totalorder %s39, 0
      %p405 = por %p403, %p404
      %p406 = scmp.ne.s32.totalorder %s392, %s393
      %p407 = scmp.eq.s32.totalorder %s40, 1
      %p408 = por %p406, %p407
      %p410 = scmp.ne.s32.totalorder %s393, %s409
      %p411 = scmp.eq.s32.totalorder %s40, 0
      %p412 = por %p410, %p411
      %s413 = ssub.s32 %s34, %s41
      %p414 = scmp.eq.s32.totalorder %s413, 0
      %s416 = sadd.s32 %s415, 1
      %s417 = scalar_select %p414, %s415, %s416
      %p420 = pneg %p414
      %p421 = scmp.eq.s32.totalorder %s34, 1
      %p422 = por %p420, %p421
      %p423 = scmp.ne.s32.totalorder %s415, %s418
      %p424 = scmp.eq.s32.totalorder %s34, 0
      %p425 = por %p423, %p424
      %p426 = scmp.ne.s32.totalorder %s415, %s418
      %p427 = scmp.eq.s32.totalorder %s39, 1
      %p428 = por %p426, %p427
      %p429 = scmp.ne.s32.totalorder %s418, %s419
      %p430 = scmp.eq.s32.totalorder %s39, 0
      %p431 = por %p429, %p430
      %p432 = scmp.ne.s32.totalorder %s418, %s419
      %p433 = scmp.eq.s32.totalorder %s40, 1
      %p434 = por %p432, %p433
      %p436 = scmp.ne.s32.totalorder %s419, %s435
      %p437 = scmp.eq.s32.totalorder %s40, 0
      %p438 = por %p436, %p437
      %s439 = ssub.s32 %s34, %s41
      %p440 = scmp.eq.s32.totalorder %s439, 0
      %s442 = sadd.s32 %s441, 1
      %s443 = scalar_select %p440, %s441, %s442
      %p446 = pneg %p440
      %p447 = scmp.eq.s32.totalorder %s34, 1
      %p448 = por %p446, %p447
      %p449 = scmp.ne.s32.totalorder %s441, %s444
      %p450 = scmp.eq.s32.totalorder %s34, 0
      %p451 = por %p449, %p450
      %p452 = scmp.ne.s32.totalorder %s441, %s444
      %p453 = scmp.eq.s32.totalorder %s39, 1
      %p454 = por %p452, %p453
      %p455 = scmp.ne.s32.totalorder %s444, %s445
      %p456 = scmp.eq.s32.totalorder %s39, 0
      %p457 = por %p455, %p456
      %p458 = scmp.ne.s32.totalorder %s444, %s445
      %p459 = scmp.eq.s32.totalorder %s40, 1
      %p460 = por %p458, %p459
      %p462 = scmp.ne.s32.totalorder %s445, %s461
      %p463 = scmp.eq.s32.totalorder %s40, 0
      %p464 = por %p462, %p463
      %s465 = ssub.s32 %s34, %s41
      %p466 = scmp.eq.s32.totalorder %s465, 0
      %s468 = sadd.s32 %s467, 1
      %s469 = scalar_select %p466, %s467, %s468
      %p472 = pneg %p466
      %p473 = scmp.eq.s32.totalorder %s34, 1
      %p474 = por %p472, %p473
      %p475 = scmp.ne.s32.totalorder %s467, %s470
      %p476 = scmp.eq.s32.totalorder %s34, 0
      %p477 = por %p475, %p476
      %p478 = scmp.ne.s32.totalorder %s467, %s470
      %p479 = scmp.eq.s32.totalorder %s39, 1
      %p480 = por %p478, %p479
      %p481 = scmp.ne.s32.totalorder %s470, %s471
      %p482 = scmp.eq.s32.totalorder %s39, 0
      %p483 = por %p481, %p482
      %p484 = scmp.ne.s32.totalorder %s470, %s471
      %p485 = scmp.eq.s32.totalorder %s40, 1
      %p486 = por %p484, %p485
      %p488 = scmp.ne.s32.totalorder %s471, %s487
      %p489 = scmp.eq.s32.totalorder %s40, 0
      %p490 = por %p488, %p489
      %s491 = ssub.s32 %s34, %s41
      %p492 = scmp.eq.s32.totalorder %s491, 0
      %s494 = sadd.s32 %s493, 1
      %s495 = scalar_select %p492, %s493, %s494
      %p498 = pneg %p492
      %p499 = scmp.eq.s32.totalorder %s34, 1
      %p500 = por %p498, %p499
      %p501 = scmp.ne.s32.totalorder %s493, %s496
      %p502 = scmp.eq.s32.totalorder %s34, 0
      %p503 = por %p501, %p502
      %p504 = scmp.ne.s32.totalorder %s493, %s496
      %p505 = scmp.eq.s32.totalorder %s39, 1
      %p506 = por %p504, %p505
      %p507 = scmp.ne.s32.totalorder %s496, %s497
      %p508 = scmp.eq.s32.totalorder %s39, 0
      %p509 = por %p507, %p508
      %p510 = scmp.ne.s32.totalorder %s496, %s497
      %p511 = scmp.eq.s32.totalorder %s40, 1
      %p512 = por %p510, %p511
      %p514 = scmp.ne.s32.totalorder %s497, %s513
      %p515 = scmp.eq.s32.totalorder %s40, 0
      %p516 = por %p514, %p515
      %s517 = ssub.s32 %s34, %s41
      %p518 = scmp.eq.s32.totalorder %s517, 0
      %s520 = sadd.s32 %s519, 1
      %s521 = scalar_select %p518, %s519, %s520
      %p524 = pneg %p518
      %p525 = scmp.eq.s32.totalorder %s34, 1
      %p526 = por %p524, %p525
      %p527 = scmp.ne.s32.totalorder %s519, %s522
      %p528 = scmp.eq.s32.totalorder %s34, 0
      %p529 = por %p527, %p528
      %p530 = scmp.ne.s32.totalorder %s519, %s522
      %p531 = scmp.eq.s32.totalorder %s39, 1
      %p532 = por %p530, %p531
      %p533 = scmp.ne.s32.totalorder %s522, %s523
      %p534 = scmp.eq.s32.totalorder %s39, 0
      %p535 = por %p533, %p534
      %p536 = scmp.ne.s32.totalorder %s522, %s523
      %p537 = scmp.eq.s32.totalorder %s40, 1
      %p538 = por %p536, %p537
      %p540 = scmp.ne.s32.totalorder %s523, %s539
      %p541 = scmp.eq.s32.totalorder %s40, 0
      %p542 = por %p540, %p541
      %s544 = sadd.s32 %s543, 1
      %p547 = scmp.eq.s32.totalorder %s34, 1
      %p548 = scmp.ne.s32.totalorder %s543, %s545
      %p549 = scmp.eq.s32.totalorder %s34, 0
      %p550 = por %p548, %p549
      %p551 = scmp.ne.s32.totalorder %s543, %s545
      %p552 = scmp.eq.s32.totalorder %s39, 1
      %p553 = por %p551, %p552
      %p554 = scmp.ne.s32.totalorder %s545, %s546
      %p555 = scmp.eq.s32.totalorder %s39, 0
      %p556 = por %p554, %p555
      %p557 = scmp.ne.s32.totalorder %s545, %s546
      %p558 = scmp.eq.s32.totalorder %s40, 1
      %p559 = por %p557, %p558
      %p561 = scmp.ne.s32.totalorder %s546, %s560
      %p562 = scmp.eq.s32.totalorder %s40, 0
      %p563 = por %p561, %p562
      %s565 = sadd.s32 %s564, 1
      %p568 = scmp.eq.s32.totalorder %s34, 1
      %p569 = scmp.ne.s32.totalorder %s564, %s566
      %p570 = scmp.eq.s32.totalorder %s34, 0
      %p571 = por %p569, %p570
      %p572 = scmp.ne.s32.totalorder %s564, %s566
      %p573 = scmp.eq.s32.totalorder %s39, 1
      %p574 = por %p572, %p573
      %p575 = scmp.ne.s32.totalorder %s566, %s567
      %p576 = scmp.eq.s32.totalorder %s39, 0
      %p577 = por %p575, %p576
      %p578 = scmp.ne.s32.totalorder %s566, %s567
      %p579 = scmp.eq.s32.totalorder %s40, 1
      %p580 = por %p578, %p579
      %p582 = scmp.ne.s32.totalorder %s567, %s581
      %p583 = scmp.eq.s32.totalorder %s40, 0
      %p584 = por %p582, %p583
      %s586 = sadd.s32 %s585, 1
      %p589 = scmp.eq.s32.totalorder %s34, 1
      %p590 = scmp.ne.s32.totalorder %s585, %s587
      %p591 = scmp.eq.s32.totalorder %s34, 0
      %p592 = por %p590, %p591
      %p593 = scmp.ne.s32.totalorder %s585, %s587
      %p594 = scmp.eq.s32.totalorder %s39, 1
      %p595 = por %p593, %p594
      %p596 = scmp.ne.s32.totalorder %s587, %s588
      %p597 = scmp.eq.s32.totalorder %s39, 0
      %p598 = por %p596, %p597
      %p599 = scmp.ne.s32.totalorder %s587, %s588
      %p600 = scmp.eq.s32.totalorder %s40, 1
      %p601 = por %p599, %p600
      %p603 = scmp.ne.s32.totalorder %s588, %s602
      %p604 = scmp.eq.s32.totalorder %s40, 0
      %p605 = por %p603, %p604
      %s607 = sadd.s32 %s606, 1
      %p610 = scmp.eq.s32.totalorder %s34, 1
      %p611 = scmp.ne.s32.totalorder %s606, %s608
      %p612 = scmp.eq.s32.totalorder %s34, 0
      %p613 = por %p611, %p612
      %p614 = scmp.ne.s32.totalorder %s606, %s608
      %p615 = scmp.eq.s32.totalorder %s39, 1
      %p616 = por %p614, %p615
      %p617 = scmp.ne.s32.totalorder %s608, %s609
      %p618 = scmp.eq.s32.totalorder %s39, 0
      %p619 = por %p617, %p618
      %p620 = scmp.ne.s32.totalorder %s608, %s609
      %p621 = scmp.eq.s32.totalorder %s40, 1
      %p622 = por %p620, %p621
      %p624 = scmp.ne.s32.totalorder %s609, %s623
      %p625 = scmp.eq.s32.totalorder %s40, 0
      %p626 = por %p624, %p625
      %s627 = ssub.s32 %s34, %s41
      %p628 = scmp.eq.s32.totalorder %s627, 0
      %s630 = sadd.s32 %s629, 1
      %s631 = scalar_select %p628, %s629, %s630
      %p634 = pneg %p628
      %p635 = scmp.eq.s32.totalorder %s34, 1
      %p636 = por %p634, %p635
      %p637 = scmp.ne.s32.totalorder %s629, %s632
      %p638 = scmp.eq.s32.totalorder %s34, 0
      %p639 = por %p637, %p638
      %p640 = scmp.ne.s32.totalorder %s629, %s632
      %p641 = scmp.eq.s32.totalorder %s39, 1
      %p642 = por %p640, %p641
      %p643 = scmp.ne.s32.totalorder %s632, %s633
      %p644 = scmp.eq.s32.totalorder %s39, 0
      %p645 = por %p643, %p644
      %p646 = scmp.ne.s32.totalorder %s632, %s633
      %p647 = scmp.eq.s32.totalorder %s40, 1
      %p648 = por %p646, %p647
      %p650 = scmp.ne.s32.totalorder %s633, %s649
      %p651 = scmp.eq.s32.totalorder %s40, 0
      %p652 = por %p650, %p651
      %s654 = sadd.s32 %s653, 1
      %p657 = scmp.eq.s32.totalorder %s34, 1
      %p658 = scmp.ne.s32.totalorder %s653, %s655
      %p659 = scmp.eq.s32.totalorder %s34, 0
      %p660 = por %p658, %p659
      %p661 = scmp.ne.s32.totalorder %s653, %s655
      %p662 = scmp.eq.s32.totalorder %s39, 1
      %p663 = por %p661, %p662
      %p664 = scmp.ne.s32.totalorder %s655, %s656
      %p665 = scmp.eq.s32.totalorder %s39, 0
      %p666 = por %p664, %p665
      %p667 = scmp.ne.s32.totalorder %s655, %s656
      %p668 = scmp.eq.s32.totalorder %s40, 1
      %p669 = por %p667, %p668
      %p671 = scmp.ne.s32.totalorder %s656, %s670
      %p672 = scmp.eq.s32.totalorder %s40, 0
      %p673 = por %p671, %p672
      %p674 = scmp.le.s32.totalorder 1, %s34
      %p675 = scmp.lt.s32.totalorder %s34, 3
      %p676 = pnand %p674, %p675
      %p677 = pneg %p676
      // Predicated region
      $region9: #{vit_forward.1} parent=5 // pred_check
        _
      $region10: #{vit_forward.1} parent=5 // pred_check_branch
        %679 = sbr.rel (%p676) target = $region12
      $region11: #{vit_forward.1} parent=5 // pred_region
        %s680 = ssub.s32 %s34, 1
        // Predicated region
        $region13: #{vit_forward.1} parent=11 // pred_check
          %p681 = pneg %p55
        $region14: #{vit_forward.1} parent=11 // pred_check_branch
          %683 = sbr.rel (%p681) target = $region16
        $region15: #{vit_forward.1} parent=11 // pred_region
          _
        $region16: #{vit_forward.1} parent=11 // pred_fallthru
          _
        // Predicated region
        $region17: #{vit_forward.1} parent=11 // pred_check
          %p684 = pneg %p76
        $region18: #{vit_forward.1} parent=11 // pred_check_branch
          %686 = sbr.rel (%p684) target = $region20
        $region19: #{vit_forward.1} parent=11 // pred_region
          _
        $region20: #{vit_forward.1} parent=11 // pred_fallthru
          _
        // Predicated region
        $region21: #{vit_forward.1} parent=11 // pred_check
          %p687 = pneg %p97
        $region22: #{vit_forward.1} parent=11 // pred_check_branch
          %689 = sbr.rel (%p687) target = $region24
        $region23: #{vit_forward.1} parent=11 // pred_region
          _
        $region24: #{vit_forward.1} parent=11 // pred_fallthru
          _
        // Predicated region
        $region25: #{vit_forward.1} parent=11 // pred_check
          %p690 = pneg %p118
        $region26: #{vit_forward.1} parent=11 // pred_check_branch
          %692 = sbr.rel (%p690) target = $region28
        $region27: #{vit_forward.1} parent=11 // pred_region
          _
        $region28: #{vit_forward.1} parent=11 // pred_fallthru
          _
        // Predicated region
        $region29: #{vit_forward.1} parent=11 // pred_check
          %p693 = pneg %p139
        $region30: #{vit_forward.1} parent=11 // pred_check_branch
          %695 = sbr.rel (%p693) target = $region32
        $region31: #{vit_forward.1} parent=11 // pred_region
          _
        $region32: #{vit_forward.1} parent=11 // pred_fallthru
          _
        // Predicated region
        $region33: #{vit_forward.1} parent=11 // pred_check
          %p696 = pneg %p160
        $region34: #{vit_forward.1} parent=11 // pred_check_branch
          %698 = sbr.rel (%p696) target = $region36
        $region35: #{vit_forward.1} parent=11 // pred_region
          _
        $region36: #{vit_forward.1} parent=11 // pred_fallthru
          _
        // Predicated region
        $region37: #{vit_forward.1} parent=11 // pred_check
          %p699 = pneg %p181
        $region38: #{vit_forward.1} parent=11 // pred_check_branch
          %701 = sbr.rel (%p699) target = $region40
        $region39: #{vit_forward.1} parent=11 // pred_region
          _
        $region40: #{vit_forward.1} parent=11 // pred_fallthru
          _
        // Predicated region
        $region41: #{vit_forward.1} parent=11 // pred_check
          %p702 = pneg %p202
        $region42: #{vit_forward.1} parent=11 // pred_check_branch
          %704 = sbr.rel (%p702) target = $region44
        $region43: #{vit_forward.1} parent=11 // pred_region
          _
        $region44: #{vit_forward.1} parent=11 // pred_fallthru
          _
        // Predicated region
        $region45: #{vit_forward.1} parent=11 // pred_check
          %p705 = pneg %p223
        $region46: #{vit_forward.1} parent=11 // pred_check_branch
          %707 = sbr.rel (%p705) target = $region48
        $region47: #{vit_forward.1} parent=11 // pred_region
          _
        $region48: #{vit_forward.1} parent=11 // pred_fallthru
          _
        // Predicated region
        $region49: #{vit_forward.1} parent=11 // pred_check
          %p708 = pneg %p556
        $region50: #{vit_forward.1} parent=11 // pred_check_branch
          %710 = sbr.rel (%p708) target = $region52
        $region51: #{vit_forward.1} parent=11 // pred_region
          _
        $region52: #{vit_forward.1} parent=11 // pred_fallthru
          _
        // Predicated region
        $region53: #{vit_forward.1} parent=11 // pred_check
          %p711 = pneg %p577
        $region54: #{vit_forward.1} parent=11 // pred_check_branch
          %713 = sbr.rel (%p711) target = $region56
        $region55: #{vit_forward.1} parent=11 // pred_region
          _
        $region56: #{vit_forward.1} parent=11 // pred_fallthru
          _
        // Predicated region
        $region57: #{vit_forward.1} parent=11 // pred_check
          %p714 = pneg %p598
        $region58: #{vit_forward.1} parent=11 // pred_check_branch
          %716 = sbr.rel (%p714) target = $region60
        $region59: #{vit_forward.1} parent=11 // pred_region
          _
        $region60: #{vit_forward.1} parent=11 // pred_fallthru
          _
        // Predicated region
        $region61: #{vit_forward.1} parent=11 // pred_check
          %p717 = pneg %p619
        $region62: #{vit_forward.1} parent=11 // pred_check_branch
          %719 = sbr.rel (%p717) target = $region64
        $region63: #{vit_forward.1} parent=11 // pred_region
          _
        $region64: #{vit_forward.1} parent=11 // pred_fallthru
          _
      $region12: #{vit_forward.1} parent=5 // pred_fallthru
        _
      %p720 = scmp.lt.s32.totalorder %s34, 2
      // Predicated region
      $region65: #{vit_forward.1} parent=5 // pred_check
        %p721 = pneg %p720
      $region66: #{vit_forward.1} parent=5 // pred_check_branch
        %723 = sbr.rel (%p721) target = $region68
      $region67: #{vit_forward.1} parent=5 // pred_region
        // Predicated region
        $region69: #{vit_forward.1} parent=67 // pred_check
          %p724 = pneg %p243
        $region70: #{vit_forward.1} parent=67 // pred_check_branch
          %726 = sbr.rel (%p724) target = $region72
        $region71: #{vit_forward.1} parent=67 // pred_region
          %p727 = scmp.lt.s32.totalorder %s34, 1
          %s728 = scalar_select %p727, %s34, 1
          %s729 = smul.addr %s728, 4
          %s730 = smul.addr %s729, 4
          %s731 = scalar_lea.vmem %s9, %s730
        $region72: #{vit_forward.1} parent=67 // pred_fallthru
          _
        // Predicated region
        $region73: #{vit_forward.1} parent=67 // pred_check
          %p732 = pneg %p269
        $region74: #{vit_forward.1} parent=67 // pred_check_branch
          %734 = sbr.rel (%p732) target = $region76
        $region75: #{vit_forward.1} parent=67 // pred_region
          %p735 = scmp.lt.s32.totalorder %s34, 1
          %s736 = scalar_select %p735, %s34, 1
          %s737 = scalar_lea.vmem %s10, %s736
        $region76: #{vit_forward.1} parent=67 // pred_fallthru
          _
        // Predicated region
        $region77: #{vit_forward.1} parent=67 // pred_check
          %p738 = pneg %p295
        $region78: #{vit_forward.1} parent=67 // pred_check_branch
          %740 = sbr.rel (%p738) target = $region80
        $region79: #{vit_forward.1} parent=67 // pred_region
          %p741 = scmp.lt.s32.totalorder %s34, 1
          %s742 = scalar_select %p741, %s34, 1
          %s743 = smul.addr %s742, 4
          %s744 = smul.addr %s743, 4
          %s745 = scalar_lea.vmem %s11, %s744
        $region80: #{vit_forward.1} parent=67 // pred_fallthru
          _
        // Predicated region
        $region81: #{vit_forward.1} parent=67 // pred_check
          %p746 = pneg %p321
        $region82: #{vit_forward.1} parent=67 // pred_check_branch
          %748 = sbr.rel (%p746) target = $region84
        $region83: #{vit_forward.1} parent=67 // pred_region
          %p749 = scmp.lt.s32.totalorder %s34, 1
          %s750 = scalar_select %p749, %s34, 1
          %s751 = scalar_lea.vmem %s12, %s750
        $region84: #{vit_forward.1} parent=67 // pred_fallthru
          _
        // Predicated region
        $region85: #{vit_forward.1} parent=67 // pred_check
          %p752 = pneg %p347
        $region86: #{vit_forward.1} parent=67 // pred_check_branch
          %754 = sbr.rel (%p752) target = $region88
        $region87: #{vit_forward.1} parent=67 // pred_region
          %p755 = scmp.lt.s32.totalorder %s34, 1
          %s756 = scalar_select %p755, %s34, 1
          %s757 = scalar_lea.vmem %s13, %s756
        $region88: #{vit_forward.1} parent=67 // pred_fallthru
          _
        // Predicated region
        $region89: #{vit_forward.1} parent=67 // pred_check
          %p758 = pneg %p373
        $region90: #{vit_forward.1} parent=67 // pred_check_branch
          %760 = sbr.rel (%p758) target = $region92
        $region91: #{vit_forward.1} parent=67 // pred_region
          %p761 = scmp.lt.s32.totalorder %s34, 1
          %s762 = scalar_select %p761, %s34, 1
          %s763 = scalar_lea.vmem %s14, %s762
        $region92: #{vit_forward.1} parent=67 // pred_fallthru
          _
        // Predicated region
        $region93: #{vit_forward.1} parent=67 // pred_check
          %p764 = pneg %p399
        $region94: #{vit_forward.1} parent=67 // pred_check_branch
          %766 = sbr.rel (%p764) target = $region96
        $region95: #{vit_forward.1} parent=67 // pred_region
          %p767 = scmp.lt.s32.totalorder %s34, 1
          %s768 = scalar_select %p767, %s34, 1
          %s769 = smul.addr %s768, 4
          %s770 = smul.addr %s769, 4
          %s771 = scalar_lea.vmem %s15, %s770
        $region96: #{vit_forward.1} parent=67 // pred_fallthru
          _
        // Predicated region
        $region97: #{vit_forward.1} parent=67 // pred_check
          %p772 = pneg %p425
        $region98: #{vit_forward.1} parent=67 // pred_check_branch
          %774 = sbr.rel (%p772) target = $region100
        $region99: #{vit_forward.1} parent=67 // pred_region
          %p775 = scmp.lt.s32.totalorder %s34, 1
          %s776 = scalar_select %p775, %s34, 1
          %s777 = scalar_lea.vmem %s16, %s776
        $region100: #{vit_forward.1} parent=67 // pred_fallthru
          _
        // Predicated region
        $region101: #{vit_forward.1} parent=67 // pred_check
          %p778 = pneg %p451
        $region102: #{vit_forward.1} parent=67 // pred_check_branch
          %780 = sbr.rel (%p778) target = $region104
        $region103: #{vit_forward.1} parent=67 // pred_region
          %p781 = scmp.lt.s32.totalorder %s34, 1
          %s782 = scalar_select %p781, %s34, 1
          %s783 = smul.addr %s782, 8
          %s784 = smul.addr %s783, 4
          %s785 = scalar_lea.vmem %s17, %s784
        $region104: #{vit_forward.1} parent=67 // pred_fallthru
          _
        // Predicated region
        $region105: #{vit_forward.1} parent=67 // pred_check
          %p786 = pneg %p477
        $region106: #{vit_forward.1} parent=67 // pred_check_branch
          %788 = sbr.rel (%p786) target = $region108
        $region107: #{vit_forward.1} parent=67 // pred_region
          %p789 = scmp.lt.s32.totalorder %s34, 1
          %s790 = scalar_select %p789, %s34, 1
          %s791 = scalar_lea.vmem %s18, %s790
        $region108: #{vit_forward.1} parent=67 // pred_fallthru
          _
        // Predicated region
        $region109: #{vit_forward.1} parent=67 // pred_check
          %p792 = pneg %p503
        $region110: #{vit_forward.1} parent=67 // pred_check_branch
          %794 = sbr.rel (%p792) target = $region112
        $region111: #{vit_forward.1} parent=67 // pred_region
          %p795 = scmp.lt.s32.totalorder %s34, 1
          %s796 = scalar_select %p795, %s34, 1
          %s797 = scalar_lea.vmem %s19, %s796
        $region112: #{vit_forward.1} parent=67 // pred_fallthru
          _
        // Predicated region
        $region113: #{vit_forward.1} parent=67 // pred_check
          %p798 = pneg %p529
        $region114: #{vit_forward.1} parent=67 // pred_check_branch
          %800 = sbr.rel (%p798) target = $region116
        $region115: #{vit_forward.1} parent=67 // pred_region
          %p801 = scmp.lt.s32.totalorder %s34, 1
          %s802 = scalar_select %p801, %s34, 1
          %s803 = scalar_lea.vmem %s20, %s802
        $region116: #{vit_forward.1} parent=67 // pred_fallthru
          _
      $region68: #{vit_forward.1} parent=5 // pred_fallthru
        _
      %p804 = scmp.le.s32.totalorder 1, %s34
      %p805 = scmp.lt.s32.totalorder %s34, 3
      %p806 = pnand %p804, %p805
      %p807 = pneg %p806
      // Predicated region
      $region117: #{vit_forward.1} parent=5 // pred_check
        _
      $region118: #{vit_forward.1} parent=5 // pred_check_branch
        %809 = sbr.rel (%p806) target = $region120
      $region119: #{vit_forward.1} parent=5 // pred_region
        %s810 = ssub.s32 %s34, 1
        %p811 = pneg %p55
        %p812 = pneg %p52
        %p813 = pneg %p76
        %p814 = pneg %p73
        %p815 = pneg %p97
        %p816 = pneg %p94
        %p817 = pneg %p118
        %p818 = pneg %p115
        %p819 = pneg %p139
        %p820 = pneg %p136
        %p821 = pneg %p160
        %p822 = pneg %p157
        %p823 = pneg %p181
        %p824 = pneg %p178
        %p825 = pneg %p202
        %p826 = pneg %p199
        %p827 = pneg %p223
        %p828 = pneg %p220
        %p829 = scmp.lt.s32.totalorder %s39, 1
        %s830 = scalar_select %p829, %s39, 1
        %s831 = smul.addr %s830, 4
        %s832 = smul.addr %s831, 4
        %s833 = scalar_lea.vmem %s9, %s832
        %p834 = pneg %p249
        %p835 = pneg %p246
        %p836 = scmp.lt.s32.totalorder %s39, 1
        %s837 = scalar_select %p836, %s39, 1
        %s838 = scalar_lea.vmem %s10, %s837
        %p839 = pneg %p275
        %p840 = pneg %p272
        %p841 = scmp.lt.s32.totalorder %s39, 1
        %s842 = scalar_select %p841, %s39, 1
        %s843 = smul.addr %s842, 4
        %s844 = smul.addr %s843, 4
        %s845 = scalar_lea.vmem %s11, %s844
        %p846 = pneg %p301
        %p847 = pneg %p298
        %p848 = scmp.lt.s32.totalorder %s39, 1
        %s849 = scalar_select %p848, %s39, 1
        %s850 = scalar_lea.vmem %s12, %s849
        %p851 = pneg %p327
        %p852 = pneg %p324
        %p853 = scmp.lt.s32.totalorder %s39, 1
        %s854 = scalar_select %p853, %s39, 1
        %s855 = scalar_lea.vmem %s13, %s854
        %p856 = pneg %p353
        %p857 = pneg %p350
        %p858 = scmp.lt.s32.totalorder %s39, 1
        %s859 = scalar_select %p858, %s39, 1
        %s860 = scalar_lea.vmem %s14, %s859
        %p861 = pneg %p379
        %p862 = pneg %p376
        %p863 = scmp.lt.s32.totalorder %s39, 1
        %s864 = scalar_select %p863, %s39, 1
        %s865 = smul.addr %s864, 4
        %s866 = smul.addr %s865, 4
        %s867 = scalar_lea.vmem %s15, %s866
        %p868 = pneg %p405
        %p869 = pneg %p402
        %p870 = scmp.lt.s32.totalorder %s39, 1
        %s871 = scalar_select %p870, %s39, 1
        %s872 = scalar_lea.vmem %s16, %s871
        %p873 = pneg %p431
        %p874 = pneg %p428
        %p875 = scmp.lt.s32.totalorder %s39, 1
        %s876 = scalar_select %p875, %s39, 1
        %s877 = smul.addr %s876, 8
        %s878 = smul.addr %s877, 4
        %s879 = scalar_lea.vmem %s17, %s878
        %p880 = pneg %p457
        %p881 = pneg %p454
        %p882 = scmp.lt.s32.totalorder %s39, 1
        %s883 = scalar_select %p882, %s39, 1
        %s884 = scalar_lea.vmem %s18, %s883
        %p885 = pneg %p483
        %p886 = pneg %p480
        %p887 = scmp.lt.s32.totalorder %s39, 1
        %s888 = scalar_select %p887, %s39, 1
        %s889 = scalar_lea.vmem %s19, %s888
        %p890 = pneg %p509
        %p891 = pneg %p506
        %p892 = scmp.lt.s32.totalorder %s39, 1
        %s893 = scalar_select %p892, %s39, 1
        %s894 = scalar_lea.vmem %s20, %s893
        %p895 = pneg %p535
        %p896 = pneg %p532
        %p897 = pneg %p556
        %p898 = pneg %p553
        %p899 = pneg %p577
        %p900 = pneg %p574
        %p901 = pneg %p598
        %p902 = pneg %p595
        %p903 = pneg %p619
        %p904 = pneg %p616
        %p905 = pneg %p645
        %p906 = pneg %p642
        %p907 = scmp.lt.s32.totalorder %s39, 1
        %s908 = scalar_select %p907, %s39, 1
        %s909 = smul.addr %s908, 3
        %s910 = smul.addr %s909, 4
        %s911 = scalar_lea.vmem %s25, %s910
        %p912 = pneg %p666
        %p913 = pneg %p663
        %p914 = scmp.lt.s32.totalorder %s39, 1
        %s915 = scalar_select %p914, %s39, 1
        %s916 = smul.addr %s915, 4
        %s917 = smul.addr %s916, 4
        %s918 = scalar_lea.vmem %s9, %s917
        %p919 = scmp.lt.s32.totalorder %s39, 1
        %s920 = scalar_select %p919, %s39, 1
        %s921 = scalar_lea.vmem %s10, %s920
        %p922 = scmp.lt.s32.totalorder %s39, 1
        %s923 = scalar_select %p922, %s39, 1
        %s924 = smul.addr %s923, 4
        %s925 = smul.addr %s924, 4
        %s926 = scalar_lea.vmem %s11, %s925
        %p927 = scmp.lt.s32.totalorder %s39, 1
        %s928 = scalar_select %p927, %s39, 1
        %s929 = scalar_lea.vmem %s12, %s928
        %p930 = scmp.lt.s32.totalorder %s39, 1
        %s931 = scalar_select %p930, %s39, 1
        %s932 = scalar_lea.vmem %s13, %s931
        %p933 = scmp.lt.s32.totalorder %s39, 1
        %s934 = scalar_select %p933, %s39, 1
        %s935 = scalar_lea.vmem %s14, %s934
        %p936 = scmp.lt.s32.totalorder %s39, 1
        %s937 = scalar_select %p936, %s39, 1
        %s938 = smul.addr %s937, 4
        %s939 = smul.addr %s938, 4
        %s940 = scalar_lea.vmem %s15, %s939
        %p941 = scmp.lt.s32.totalorder %s39, 1
        %s942 = scalar_select %p941, %s39, 1
        %s943 = scalar_lea.vmem %s16, %s942
        %p944 = scmp.lt.s32.totalorder %s39, 1
        %s945 = scalar_select %p944, %s39, 1
        %s946 = smul.addr %s945, 8
        %s947 = smul.addr %s946, 4
        %s948 = scalar_lea.vmem %s17, %s947
        %p949 = scmp.lt.s32.totalorder %s39, 1
        %s950 = scalar_select %p949, %s39, 1
        %s951 = scalar_lea.vmem %s18, %s950
        %p952 = scmp.lt.s32.totalorder %s39, 1
        %s953 = scalar_select %p952, %s39, 1
        %s954 = scalar_lea.vmem %s19, %s953
        %p955 = scmp.lt.s32.totalorder %s39, 1
        %s956 = scalar_select %p955, %s39, 1
        %s957 = scalar_lea.vmem %s20, %s956
        %p958 = scmp.lt.s32.totalorder %s39, 1
        %s959 = scalar_select %p958, %s39, 1
        %s960 = smul.addr %s959, 3
        %s961 = smul.addr %s960, 4
        %s962 = scalar_lea.vmem %s25, %s961
        %p964 = scmp.eq.s32.totalorder %s39, 0
        // Predicated region
        $region121: #{vit_forward.1} parent=119 // pred_check
          %p965 = pneg %p964
        $region122: #{vit_forward.1} parent=119 // pred_check_branch
          %967 = sbr.rel (%p965) target = $region124
        $region123: #{vit_forward.1} parent=119 // pred_region
          %v968 = vld [vmem:[%s0] sm:$0xff]
          %v969 = vld [vmem:[%s0 + $0x8] sm:$0xff]
          %v970 = vld [vmem:[%s0 + $0x10] sm:$0xff]
          %v971 = vld [vmem:[%s0 + $0x18] sm:$0xff]
          %v972 = vld [vmem:[%s0 + $0x20] sm:$0xff]
          %v973 = vld [vmem:[%s0 + $0x28] sm:$0xff]
          %v974 = vld [vmem:[%s0 + $0x30] sm:$0x3]
          %v975 = vld [vmem:[%s0 + $0x38] sm:$0x3]
          %v976 = vld [vmem:[%s0 + $0x40] sm:$0x3]
          %v977 = vld [vmem:[%s2] sm:$0x7]
          %v978 = vld [vmem:[%s3] sm:$0x7]
          %v979 = vadd.f32 %v968, %v969
          %v980 = vadd.f32 %v979, %v970
          %981 = vadd.xlane.f32.xlu0 %v980
          %v982 = vpop.xlane.xlu0 %981
          %v983 = vadd.f32 %v971, %v972
          %v984 = vadd.f32 %v983, %v973
          %985 = vadd.xlane.f32.xlu0 %v984
          %v986 = vpop.xlane.xlu0 %985
          %vm987 = vcmask 1041408
          %v988 = vsel %vm987, %v974, 0.0
          %v989 = vsel %vm987, %v975, 0.0
          %v990 = vadd.f32 %v988, %v989
          %v991 = vsel %vm987, %v976, 0.0
          %v992 = vadd.f32 %v990, %v991
          %993 = vadd.xlane.f32.xlu0 %v992
          %v994 = vpop.xlane.xlu0 %993
          %v995 = vrcp.pop 384.0
          %v996 = vmul.f32 %v982, %v995
          %v997 = vmul.f32 %v986, %v995
          %v998 = vmul.f32 %v994, %v995
          %v999 = vsub.f32 %v968, %v996
          %v1000 = vsub.f32 %v969, %v996
          %v1001 = vsub.f32 %v970, %v996
          %v1002 = vsub.f32 %v971, %v997
          %v1003 = vsub.f32 %v972, %v997
          %v1004 = vsub.f32 %v973, %v997
          %v1005 = vsub.f32 %v974, %v998
          %v1006 = vsub.f32 %v975, %v998
          %v1007 = vsub.f32 %v976, %v998
          %v1008 = vmul.f32 %v999, %v999
          %v1009 = vmul.f32 %v1000, %v1000
          %v1010 = vmul.f32 %v1001, %v1001
          %v1011 = vmul.f32 %v1002, %v1002
          %v1012 = vmul.f32 %v1003, %v1003
          %v1013 = vmul.f32 %v1004, %v1004
          %v1014 = vmul.f32 %v1005, %v1005
          %v1015 = vmul.f32 %v1006, %v1006
          %v1016 = vmul.f32 %v1007, %v1007
          %v1017 = vadd.f32 %v1008, %v1009
          %v1018 = vadd.f32 %v1017, %v1010
          %1019 = vadd.xlane.f32.xlu0 %v1018
          %v1020 = vpop.xlane.xlu0 %1019
          %v1021 = vadd.f32 %v1011, %v1012
          %v1022 = vadd.f32 %v1021, %v1013
          %1023 = vadd.xlane.f32.xlu0 %v1022
          %v1024 = vpop.xlane.xlu0 %1023
          %v1025 = vsel %vm987, %v1014, 0.0
          %v1026 = vsel %vm987, %v1015, 0.0
          %v1027 = vadd.f32 %v1025, %v1026
          %v1028 = vsel %vm987, %v1016, 0.0
          %v1029 = vadd.f32 %v1027, %v1028
          %1030 = vadd.xlane.f32.xlu0 %v1029
          %v1031 = vpop.xlane.xlu0 %1030
          %v1032 = vmul.f32 %v1020, %v995
          %v1033 = vmul.f32 %v1024, %v995
          %v1034 = vmul.f32 %v1031, %v995
          %v1035 = vadd.f32 %v1032, 1e-05
          %v1036 = vadd.f32 %v1033, 1e-05
          %v1037 = vadd.f32 %v1034, 1e-05
          %v1038 = vrsqrt.pop %v1035
          %v1039 = vrsqrt.pop %v1036
          %v1040 = vrsqrt.pop %v1037
          %v1041 = vmul.f32 %v999, %v1038
          %v1042 = vmul.f32 %v1000, %v1038
          %v1043 = vmul.f32 %v1001, %v1038
          %v1044 = vmul.f32 %v1002, %v1039
          %v1045 = vmul.f32 %v1003, %v1039
          %v1046 = vmul.f32 %v1004, %v1039
          %v1047 = vmul.f32 %v1005, %v1040
          %v1048 = vmul.f32 %v1006, %v1040
          %v1049 = vmul.f32 %v1007, %v1040
          %v1051 = vlaneseq
          %v1052 = vshrl.u32 %v1051, 7
          %v1053 = vsub.s32 0, %v1052
          %v1054 = vrot.slane %v977, %v1053
          %v1055 = vlaneseq
          %v1056 = vshrl.u32 %v1055, 7
          %v1057 = vsub.s32 1, %v1056
          %v1058 = vrot.slane %v977, %v1057
          %v1059 = vlaneseq
          %v1060 = vshrl.u32 %v1059, 7
          %v1061 = vsub.s32 2, %v1060
          %v1062 = vrot.slane %v977, %v1061
          %v1066 = vmul.f32 %v1041, %v1054
          %v1067 = vmul.f32 %v1042, %v1058
          %v1068 = vmul.f32 %v1043, %v1062
          %v1069 = vmul.f32 %v1044, %v1054
          %v1070 = vmul.f32 %v1045, %v1058
          %v1071 = vmul.f32 %v1046, %v1062
          %v1072 = vmul.f32 %v1047, %v1054
          %v1073 = vmul.f32 %v1048, %v1058
          %v1074 = vmul.f32 %v1049, %v1062
          %v1076 = vlaneseq
          %v1077 = vshrl.u32 %v1076, 7
          %v1078 = vsub.s32 0, %v1077
          %v1079 = vrot.slane %v978, %v1078
          %v1080 = vlaneseq
          %v1081 = vshrl.u32 %v1080, 7
          %v1082 = vsub.s32 1, %v1081
          %v1083 = vrot.slane %v978, %v1082
          %v1084 = vlaneseq
          %v1085 = vshrl.u32 %v1084, 7
          %v1086 = vsub.s32 2, %v1085
          %v1087 = vrot.slane %v978, %v1086
          %v1091 = vadd.f32 %v1066, %v1079
          %v1092 = vadd.f32 %v1067, %v1083
          %v1093 = vadd.f32 %v1068, %v1087
          %v1094 = vadd.f32 %v1069, %v1079
          %v1095 = vadd.f32 %v1070, %v1083
          %v1096 = vadd.f32 %v1071, %v1087
          %v1097 = vadd.f32 %v1072, %v1079
          %v1098 = vadd.f32 %v1073, %v1083
          %v1099 = vadd.f32 %v1074, %v1087
          %v1100 = vpack.c.bf16 %v1094, %v1091
          %v1101 = vpack.c.bf16 %v1095, %v1092
          %v1102 = vpack.c.bf16 %v1096, %v1093
          %v1103 = vpack.c.bf16 %v1097, %v1097
          %v1104 = vpack.c.bf16 %v1098, %v1098
          %v1105 = vpack.c.bf16 %v1099, %v1099
          %v1106 = vld [vmem:[%s4] sm:$0xf]
          %v1107 = vld [vmem:[%s4 + $0x4] sm:$0xf]
          %v1108 = vld [vmem:[%s4 + $0x8] sm:$0xf]
          %v1109 = vld [vmem:[%s4 + $0xc] sm:$0xf]
          %v1110 = vld [vmem:[%s4 + $0x10] sm:$0xf]
          %v1111 = vld [vmem:[%s4 + $0x14] sm:$0xf]
          %v1112 = vld [vmem:[%s4 + $0x18] sm:$0xf]
          %v1113 = vld [vmem:[%s4 + $0x1c] sm:$0xf]
          %v1114 = vld [vmem:[%s4 + $0x20] sm:$0xf]
          %v1115 = vld [vmem:[%s4 + $0x24] sm:$0xf]
          %v1116 = vld [vmem:[%s4 + $0x28] sm:$0xf]
          %v1117 = vld [vmem:[%s4 + $0x2c] sm:$0xf]
          %v1118 = vld [vmem:[%s4 + $0x30] sm:$0xf]
          %v1119 = vld [vmem:[%s4 + $0x34] sm:$0xf]
          %v1120 = vld [vmem:[%s4 + $0x38] sm:$0xf]
          %v1121 = vld [vmem:[%s4 + $0x3c] sm:$0xf]
          %v1122 = vld [vmem:[%s4 + $0x40] sm:$0xf]
          %v1123 = vld [vmem:[%s4 + $0x44] sm:$0xf]
          %v1124 = vld [vmem:[%s4 + $0x48] sm:$0xf]
          %v1125 = vld [vmem:[%s4 + $0x4c] sm:$0xf]
          %v1126 = vld [vmem:[%s4 + $0x50] sm:$0xf]
          %v1127 = vld [vmem:[%s4 + $0x54] sm:$0xf]
          %v1128 = vld [vmem:[%s4 + $0x58] sm:$0xf]
          %v1129 = vld [vmem:[%s4 + $0x5c] sm:$0xf]
          %v1130 = vld [vmem:[%s4 + $0x60] sm:$0xf]
          %v1131 = vld [vmem:[%s4 + $0x64] sm:$0xf]
          %v1132 = vld [vmem:[%s4 + $0x68] sm:$0xf]
          %v1133 = vld [vmem:[%s4 + $0x6c] sm:$0xf]
          %v1134 = vld [vmem:[%s4 + $0x70] sm:$0xf]
          %v1135 = vld [vmem:[%s4 + $0x74] sm:$0xf]
          %v1136 = vld [vmem:[%s4 + $0x78] sm:$0xf]
          %v1137 = vld [vmem:[%s4 + $0x7c] sm:$0xf]
          %v1138 = vld [vmem:[%s4 + $0x80] sm:$0xf]
          %v1139 = vld [vmem:[%s4 + $0x84] sm:$0xf]
          %v1140 = vld [vmem:[%s4 + $0x88] sm:$0xf]
          %v1141 = vld [vmem:[%s4 + $0x8c] sm:$0xf]
          %v1142 = vld [vmem:[%s4 + $0x90] sm:$0xf]
          %v1143 = vld [vmem:[%s4 + $0x94] sm:$0xf]
          %v1144 = vld [vmem:[%s4 + $0x98] sm:$0xf]
          %v1145 = vld [vmem:[%s4 + $0x9c] sm:$0xf]
          %v1146 = vld [vmem:[%s4 + $0xa0] sm:$0xf]
          %v1147 = vld [vmem:[%s4 + $0xa4] sm:$0xf]
          %v1148 = vld [vmem:[%s4 + $0xa8] sm:$0xf]
          %v1149 = vld [vmem:[%s4 + $0xac] sm:$0xf]
          %v1150 = vld [vmem:[%s4 + $0xb0] sm:$0xf]
          %v1151 = vld [vmem:[%s4 + $0xb4] sm:$0xf]
          %v1152 = vld [vmem:[%s4 + $0xb8] sm:$0xf]
          %v1153 = vld [vmem:[%s4 + $0xbc] sm:$0xf]
          %v1154 = vld [vmem:[%s5] sm:$0x1]
          %v1156 = vlaneseq
          %v1157 = vshrl.u32 %v1156, 7
          %v1158 = vsub.s32 0, %v1157
          %v1159 = vrot.slane %v1154, %v1158
          %v1209 = vunpack.c.l.b16 %v1106
          %v1210 = vunpack.c.l.b16 %v1107
          %v1211 = vunpack.c.l.b16 %v1108
          %v1212 = vunpack.c.l.b16 %v1109
          %v1213 = vunpack.c.l.b16 %v1110
          %v1214 = vunpack.c.l.b16 %v1111
          %v1215 = vunpack.c.l.b16 %v1112
          %v1216 = vunpack.c.l.b16 %v1113
          %v1217 = vunpack.c.l.b16 %v1114
          %v1218 = vunpack.c.l.b16 %v1115
          %v1219 = vunpack.c.l.b16 %v1116
          %v1220 = vunpack.c.l.b16 %v1117
          %v1221 = vunpack.c.l.b16 %v1118
          %v1222 = vunpack.c.l.b16 %v1119
          %v1223 = vunpack.c.l.b16 %v1120
          %v1224 = vunpack.c.l.b16 %v1121
          %v1225 = vunpack.c.l.b16 %v1122
          %v1226 = vunpack.c.l.b16 %v1123
          %v1227 = vunpack.c.l.b16 %v1124
          %v1228 = vunpack.c.l.b16 %v1125
          %v1229 = vunpack.c.l.b16 %v1126
          %v1230 = vunpack.c.l.b16 %v1127
          %v1231 = vunpack.c.l.b16 %v1128
          %v1232 = vunpack.c.l.b16 %v1129
          %v1233 = vunpack.c.l.b16 %v1130
          %v1234 = vunpack.c.l.b16 %v1131
          %v1235 = vunpack.c.l.b16 %v1132
          %v1236 = vunpack.c.l.b16 %v1133
          %v1237 = vunpack.c.l.b16 %v1134
          %v1238 = vunpack.c.l.b16 %v1135
          %v1239 = vunpack.c.l.b16 %v1136
          %v1240 = vunpack.c.l.b16 %v1137
          %v1241 = vunpack.c.l.b16 %v1138
          %v1242 = vunpack.c.l.b16 %v1139
          %v1243 = vunpack.c.l.b16 %v1140
          %v1244 = vunpack.c.l.b16 %v1141
          %v1245 = vunpack.c.l.b16 %v1142
          %v1246 = vunpack.c.l.b16 %v1143
          %v1247 = vunpack.c.l.b16 %v1144
          %v1248 = vunpack.c.l.b16 %v1145
          %v1249 = vunpack.c.l.b16 %v1146
          %v1250 = vunpack.c.l.b16 %v1147
          %v1251 = vunpack.c.l.b16 %v1148
          %v1252 = vunpack.c.l.b16 %v1149
          %v1253 = vunpack.c.l.b16 %v1150
          %v1254 = vunpack.c.l.b16 %v1151
          %v1255 = vunpack.c.l.b16 %v1152
          %v1256 = vunpack.c.l.b16 %v1153
          %v1257 = vpack.c.b16 %v1210, %v1209
          %v1258 = vpack.c.b16 %v1212, %v1211
          %v1259 = vpack.c.b16 %v1214, %v1213
          %v1260 = vpack.c.b16 %v1216, %v1215
          %v1261 = vpack.c.b16 %v1218, %v1217
          %v1262 = vpack.c.b16 %v1220, %v1219
          %v1263 = vpack.c.b16 %v1222, %v1221
          %v1264 = vpack.c.b16 %v1224, %v1223
          %v1265 = vpack.c.b16 %v1226, %v1225
          %v1266 = vpack.c.b16 %v1228, %v1227
          %v1267 = vpack.c.b16 %v1230, %v1229
          %v1268 = vpack.c.b16 %v1232, %v1231
          %v1269 = vpack.c.b16 %v1234, %v1233
          %v1270 = vpack.c.b16 %v1236, %v1235
          %v1271 = vpack.c.b16 %v1238, %v1237
          %v1272 = vpack.c.b16 %v1240, %v1239
          %v1273 = vpack.c.b16 %v1242, %v1241
          %v1274 = vpack.c.b16 %v1244, %v1243
          %v1275 = vpack.c.b16 %v1246, %v1245
          %v1276 = vpack.c.b16 %v1248, %v1247
          %v1277 = vpack.c.b16 %v1250, %v1249
          %v1278 = vpack.c.b16 %v1252, %v1251
          %v1279 = vpack.c.b16 %v1254, %v1253
          %v1280 = vpack.c.b16 %v1256, %v1255
          %1305 = vmatprep.subr.bf16.mxu0 0
          %1306 = vmatpush1.bf16.msra.mxu0 %v1264
          %1307 = vmatprep.subr.bf16.mxu0 0
          %1308 = vmatpush1.bf16.msra.mxu0 %v1263
          %1309 = vmatprep.subr.bf16.mxu0 0
          %1310 = vmatpush1.bf16.msra.mxu0 %v1262
          %1311 = vmatprep.subr.bf16.mxu0 0
          %1312 = vmatpush1.bf16.msra.mxu0 %v1261
          %1313 = vmatprep.subr.bf16.mxu0 0
          %1314 = vmatpush1.bf16.msra.mxu0 %v1260
          %1315 = vmatprep.subr.bf16.mxu0 0
          %1316 = vmatpush1.bf16.msra.mxu0 %v1259
          %1317 = vmatprep.subr.bf16.mxu0 0
          %1318 = vmatpush1.bf16.msra.mxu0 %v1258
          %1319 = vmatprep.subr.bf16.mxu0 0
          %1320 = vmatpush1.bf16.msra.mxu0 %v1257
          %1321 = vmatprep.subr.bf16.mxu0 0
          %1322 = vmatpush2.bf16.msra.mxu0 %v1272
          %1323 = vmatprep.subr.bf16.mxu0 0
          %1324 = vmatpush2.bf16.msra.mxu0 %v1271
          %1325 = vmatprep.subr.bf16.mxu0 0
          %1326 = vmatpush2.bf16.msra.mxu0 %v1270
          %1327 = vmatprep.subr.bf16.mxu0 0
          %1328 = vmatpush2.bf16.msra.mxu0 %v1269
          %1329 = vmatprep.subr.bf16.mxu0 0
          %1330 = vmatpush2.bf16.msra.mxu0 %v1268
          %1331 = vmatprep.subr.bf16.mxu0 0
          %1332 = vmatpush2.bf16.msra.mxu0 %v1267
          %1333 = vmatprep.subr.bf16.mxu0 0
          %1334 = vmatpush2.bf16.msra.mxu0 %v1266
          %1335 = vmatprep.subr.bf16.mxu0 0
          %1336 = vmatpush2.bf16.msra.mxu0 %v1265
          %1337 = vmatprep.mubr.bf16.mxu0 %v1101
          %1338 = vmatmul.mubr.bf16.gmra.mxu0 %v1100
          %v1339 = vpop.f32.mrf.mxu0
          %v1340 = vadd.f32 %v1159, %v1339
          %v1341 = vpop.f32.mrf.mxu0
          %v1342 = vpop.f32.mrf.mxu0
          %v1343 = vadd.f32 %v1159, %v1342
          %v1344 = vpop.f32.mrf.mxu0
          %1345 = vmatprep.mubr.bf16.mxu0 %v1104
          %1346 = vmatmul.mubr.bf16.gmra.mxu0 %v1103
          %v1347 = vpop.f32.mrf.mxu0
          %v1348 = vadd.f32 %v1159, %v1347
          %v1349 = vpop.f32.mrf.mxu0
          %v1350 = vpop.f32.mrf.mxu0
          %v1351 = vpop.f32.mrf.mxu0
          %1352 = vdwg.mxu0
          %1353 = vmatprep.subr.bf16.mxu0 0
          %1354 = vmatpush1.bf16.msra.mxu0 %v1280
          %1355 = vmatprep.subr.bf16.mxu0 0
          %1356 = vmatpush1.bf16.msra.mxu0 %v1279
          %1357 = vmatprep.subr.bf16.mxu0 0
          %1358 = vmatpush1.bf16.msra.mxu0 %v1278
          %1359 = vmatprep.subr.bf16.mxu0 0
          %1360 = vmatpush1.bf16.msra.mxu0 %v1277
          %1361 = vmatprep.subr.bf16.mxu0 0
          %1362 = vmatpush1.bf16.msra.mxu0 %v1276
          %1363 = vmatprep.subr.bf16.mxu0 0
          %1364 = vmatpush1.bf16.msra.mxu0 %v1275
          %1365 = vmatprep.subr.bf16.mxu0 0
          %1366 = vmatpush1.bf16.msra.mxu0 %v1274
          %1367 = vmatprep.subr.bf16.mxu0 0
          %1368 = vmatpush1.bf16.msra.mxu0 %v1273
          %1369 = vmatprep.subr.bf16.mxu0 0
          %1370 = vmatpush2.bf16.msra.mxu0 0
          %1371 = vmatprep.subr.bf16.mxu0 0
          %1372 = vmatpush2.bf16.msra.mxu0 0
          %1373 = vmatprep.subr.bf16.mxu0 0
          %1374 = vmatpush2.bf16.msra.mxu0 0
          %1375 = vmatprep.subr.bf16.mxu0 0
          %1376 = vmatpush2.bf16.msra.mxu0 0
          %1377 = vmatprep.subr.bf16.mxu0 0
          %1378 = vmatpush2.bf16.msra.mxu0 0
          %1379 = vmatprep.subr.bf16.mxu0 0
          %1380 = vmatpush2.bf16.msra.mxu0 0
          %1381 = vmatprep.subr.bf16.mxu0 0
          %1382 = vmatpush2.bf16.msra.mxu0 0
          %1383 = vmatprep.subr.bf16.mxu0 0
          %1384 = vmatpush2.bf16.msra.mxu0 0
          %1385 = vmatprep.mubr.bf16.mxu0 0
          %1386 = vmatmul.mubr.bf16.gmra.mxu0 %v1102
          %v1387 = vpop.f32.mrf.mxu0
          %v1388 = vadd.f32 %v1340, %v1387
          %v1389 = vpop.f32.mrf.mxu0
          %v1390 = vpop.f32.mrf.mxu0
          %v1391 = vadd.f32 %v1343, %v1390
          %v1392 = vpop.f32.mrf.mxu0
          %1393 = vmatprep.mubr.bf16.mxu0 0
          %1394 = vmatmul.mubr.bf16.gmra.mxu0 %v1105
          %v1395 = vpop.f32.mrf.mxu0
          %v1396 = vadd.f32 %v1348, %v1395
          %v1397 = vpop.f32.mrf.mxu0
          %v1398 = vpop.f32.mrf.mxu0
          %v1399 = vpop.f32.mrf.mxu0
          %1400 = vdwg.mxu0
          %v1401 = vld [vmem:[%s6] sm:$0x1]
          %v1402 = vld [vmem:[%s7] sm:$0x1]
          %vm1403 = vcmask 261120
          %v1404 = vsel %vm1403, %v1388, 0.0
          %1405 = vadd.xlane.f32.xlu0 %v1404
          %v1406 = vpop.xlane.xlu0 %1405
          %v1407 = vsel %vm1403, %v1391, 0.0
          %1408 = vadd.xlane.f32.xlu0 %v1407
          %v1409 = vpop.xlane.xlu0 %1408
          %vm1410 = vcmask 254976
          %v1411 = vsel %vm1410, %v1396, 0.0
          %1412 = vadd.xlane.f32.xlu0 %v1411
          %v1413 = vpop.xlane.xlu0 %1412
          %v1414 = vrcp.pop 32.0
          %v1415 = vmul.f32 %v1406, %v1414
          %v1416 = vmul.f32 %v1409, %v1414
          %v1417 = vmul.f32 %v1413, %v1414
          %v1418 = vsub.f32 %v1388, %v1415
          %v1419 = vsub.f32 %v1391, %v1416
          %v1420 = vsub.f32 %v1396, %v1417
          %v1421 = vmul.f32 %v1418, %v1418
          %v1422 = vmul.f32 %v1419, %v1419
          %v1423 = vmul.f32 %v1420, %v1420
          %v1424 = vsel %vm1403, %v1421, 0.0
          %1425 = vadd.xlane.f32.xlu0 %v1424
          %v1426 = vpop.xlane.xlu0 %1425
          %v1427 = vsel %vm1403, %v1422, 0.0
          %1428 = vadd.xlane.f32.xlu0 %v1427
          %v1429 = vpop.xlane.xlu0 %1428
          %v1430 = vsel %vm1410, %v1423, 0.0
          %1431 = vadd.xlane.f32.xlu0 %v1430
          %v1432 = vpop.xlane.xlu0 %1431
          %v1433 = vmul.f32 %v1426, %v1414
          %v1434 = vmul.f32 %v1429, %v1414
          %v1435 = vmul.f32 %v1432, %v1414
          %v1436 = vadd.f32 %v1433, 1e-05
          %v1437 = vadd.f32 %v1434, 1e-05
          %v1438 = vadd.f32 %v1435, 1e-05
          %v1439 = vrsqrt.pop %v1436
          %v1440 = vrsqrt.pop %v1437
          %v1441 = vrsqrt.pop %v1438
          %v1442 = vmul.f32 %v1418, %v1439
          %v1443 = vmul.f32 %v1419, %v1440
          %v1444 = vmul.f32 %v1420, %v1441
          %v1446 = vlaneseq
          %v1447 = vshrl.u32 %v1446, 7
          %v1448 = vsub.s32 0, %v1447
          %v1449 = vrot.slane %v1401, %v1448
          %v1451 = vmul.f32 %v1442, %v1449
          %v1452 = vmul.f32 %v1443, %v1449
          %v1453 = vmul.f32 %v1444, %v1449
          %v1455 = vlaneseq
          %v1456 = vshrl.u32 %v1455, 7
          %v1457 = vsub.s32 0, %v1456
          %v1458 = vrot.slane %v1402, %v1457
          %v1460 = vadd.f32 %v1451, %v1458
          %v1461 = vadd.f32 %v1452, %v1458
          %v1462 = vadd.f32 %v1453, %v1458
          %v1463 = vld [vmem:[%s8] sm:$0xff]
          %v1464 = vld [vmem:[%s8 + $0x8] sm:$0xff]
          %v1465 = vld [vmem:[%s8 + $0x10] sm:$0x3]
          %v1466 = vld [vmem:[%s1] sm:$0xff]
          %v1467 = vld [vmem:[%s1 + $0x8] sm:$0xff]
          %v1468 = vld [vmem:[%s1 + $0x10] sm:$0x3]
          %1470 = vset.pattern.permute.xlu0 0
          %1471 = vperm.xlu0 %1470, %v1466
          %v1472 = vpop.permute.xlu0 %1471
          %1475 = vset.pattern.permute.xlu0 0
          %1476 = vperm.xlu0 %1475, %v1467
          %v1477 = vpop.permute.xlu0 %1476
          %1480 = vset.pattern.permute.xlu0 0
          %1481 = vperm.xlu0 %1480, %v1468
          %v1482 = vpop.permute.xlu0 %1481
          %v1484 = vmul.f32 %v1460, %v1472
          %v1485 = vmul.f32 %v1461, %v1477
          %v1486 = vmul.f32 %v1462, %v1482
          %v1487 = vadd.f32 %v1463, %v1484
          %v1488 = vadd.f32 %v1464, %v1485
          %v1489 = vadd.f32 %v1465, %v1486
          %1490 = vst.msk [vmem:[#allocation2] sm:$0xff] %vm1403, %v1487
          %1491 = vst.msk [vmem:[#allocation2 + $0x8] sm:$0xff] %vm1403, %v1488
          %1492 = vst.msk [vmem:[#allocation2 + $0x10] sm:$0x3] %vm1410, %v1489
          %v1493 = vpack.c.bf16 %v1488, %v1487
          %v1494 = vpack.c.bf16 %v1489, %v1489
          %v1497 = vunpack.c.l.b16 %v1493
          %v1498 = vunpack.c.h.b16 %v1493
          %v1499 = vunpack.c.l.b16 %v1494
          %v1500 = vpack.c.b16 %v1497, %v1497
          %v1501 = vpack.c.b16 %v1498, %v1498
          %v1502 = vpack.c.b16 %v1499, %v1499
          %vm1506 = vcmask 257024
          %1507 = vst.msk [vmem:[#allocation3] sm:$0xf] %vm1506, %v1500
          %1508 = vst.msk [vmem:[#allocation3 + $0x4] sm:$0xf] %vm1506, %v1501
          %vm1509 = vcmask 253952
          %1510 = vst.msk [vmem:[#allocation3 + $0x8] sm:$0x1] %vm1509, %v1502
        $region124: #{vit_forward.1} parent=119 // pred_fallthru
          _
        %v1511 = vld [vmem:[#allocation2] sm:$0xff]
        %v1512 = vld [vmem:[#allocation2 + $0x8] sm:$0xff]
        %v1513 = vld [vmem:[#allocation2 + $0x10] sm:$0x3]
        %v1514 = vld [vmem:[#allocation3] sm:$0xf]
        %v1515 = vld [vmem:[#allocation3 + $0x4] sm:$0xf]
        %v1516 = vld [vmem:[#allocation3 + $0x8] sm:$0x1]
        %v1517 = vld [vmem:[%s918] sm:$0xf]
        %v1518 = vld [vmem:[%s918 + $0x4] sm:$0xf]
        %v1519 = vld [vmem:[%s918 + $0x8] sm:$0xf]
        %v1520 = vld [vmem:[%s918 + $0xc] sm:$0xf]
        %v1521 = vld [vmem:[%s921] sm:$0x1]
        %v1523 = vlaneseq
        %v1524 = vshrl.u32 %v1523, 7
        %v1525 = vsub.s32 0, %v1524
        %v1526 = vrot.slane %v1521, %v1525
        %v1531 = vunpack.c.l.b16 %v1514
        %v1532 = vunpack.c.l.b16 %v1515
        %v1533 = vunpack.c.l.b16 %v1516
        %v1534 = vpack.c.b16 %v1532, %v1531
        %v1535 = vpack.c.b16 %v1533, %v1533
        %v1540 = vunpack.c.l.b16 %v1517
        %v1541 = vunpack.c.l.b16 %v1518
        %v1542 = vunpack.c.l.b16 %v1519
        %v1543 = vunpack.c.l.b16 %v1520
        %v1544 = vpack.c.b16 %v1541, %v1540
        %v1545 = vpack.c.b16 %v1543, %v1542
        %vm1548 = vcmask 261120
        %v1550 = vsel %vm1548, %v1534, 0
        %v1553 = vsel %vm1548, %v1535, 0
        %1555 = vmatprep.subr.bf16.mxu0 0
        %1556 = vmatpush1.bf16.msra.mxu0 0
        %1557 = vmatprep.subr.bf16.mxu0 0
        %1558 = vmatpush1.bf16.msra.mxu0 0
        %1559 = vmatprep.subr.bf16.mxu0 0
        %1560 = vmatpush1.bf16.msra.mxu0 0
        %1561 = vmatprep.subr.bf16.mxu0 0
        %1562 = vmatpush1.bf16.msra.mxu0 0
        %1563 = vmatprep.subr.bf16.mxu0 0
        %1564 = vmatpush1.bf16.msra.mxu0 0
        %1565 = vmatprep.subr.bf16.mxu0 0
        %1566 = vmatpush1.bf16.msra.mxu0 0
        %1567 = vmatprep.subr.bf16.mxu0 0
        %1568 = vmatpush1.bf16.msra.mxu0 %v1545
        %1569 = vmatprep.subr.bf16.mxu0 0
        %1570 = vmatpush1.bf16.msra.mxu0 %v1544
        %1571 = vmatprep.subr.bf16.mxu0 0
        %1572 = vmatpush2.bf16.msra.mxu0 0
        %1573 = vmatprep.subr.bf16.mxu0 0
        %1574 = vmatpush2.bf16.msra.mxu0 0
        %1575 = vmatprep.subr.bf16.mxu0 0
        %1576 = vmatpush2.bf16.msra.mxu0 0
        %1577 = vmatprep.subr.bf16.mxu0 0
        %1578 = vmatpush2.bf16.msra.mxu0 0
        %1579 = vmatprep.subr.bf16.mxu0 0
        %1580 = vmatpush2.bf16.msra.mxu0 0
        %1581 = vmatprep.subr.bf16.mxu0 0
        %1582 = vmatpush2.bf16.msra.mxu0 0
        %1583 = vmatprep.subr.bf16.mxu0 0
        %1584 = vmatpush2.bf16.msra.mxu0 0
        %1585 = vmatprep.subr.bf16.mxu0 0
        %1586 = vmatpush2.bf16.msra.mxu0 0
        %1587 = vmatprep.mubr.bf16.mxu0 0
        %1588 = vmatmul.mubr.bf16.gmra.mxu0 %v1550
        %v1589 = vpop.f32.mrf.mxu0
        %v1590 = vadd.f32 %v1526, %v1589
        %v1591 = vpop.f32.mrf.mxu0
        %v1592 = vpop.f32.mrf.mxu0
        %v1593 = vadd.f32 %v1526, %v1592
        %v1594 = vpop.f32.mrf.mxu0
        %1595 = vmatprep.mubr.bf16.mxu0 0
        %1596 = vmatmul.mubr.bf16.gmra.mxu0 %v1553
        %v1597 = vpop.f32.mrf.mxu0
        %v1598 = vadd.f32 %v1526, %v1597
        %v1599 = vpop.f32.mrf.mxu0
        %v1600 = vpop.f32.mrf.mxu0
        %v1601 = vpop.f32.mrf.mxu0
        %1602 = vdwg.mxu0
        %v1603 = vpack.c.bf16 %v1593, %v1590
        %1605 = vrot.lane.b32.xlu0 %v1603, 96
        %v1606 = vpop.permute.xlu0 %1605
        %vm1607 = vcmask 64512
        %v1609 = vsel %vm1607, %v1603, 0
        %v1612 = vsel %vm1607, %v1606, 0
        %1614 = vmatprep.subr.bf16.mxu0 0
        %1615 = vmatpush1.bf16.xpose.msra.mxu0 0
        %1616 = vmatprep.subr.bf16.mxu0 0
        %1617 = vmatpush1.bf16.xpose.msra.mxu0 0
        %1618 = vmatprep.subr.bf16.mxu0 0
        %1619 = vmatpush1.bf16.xpose.msra.mxu0 0
        %1620 = vmatprep.subr.bf16.mxu0 0
        %1621 = vmatpush1.bf16.xpose.msra.mxu0 0
        %1622 = vmatprep.subr.bf16.mxu0 0
        %1623 = vmatpush1.bf16.xpose.msra.mxu0 0
        %1624 = vmatprep.subr.bf16.mxu0 0
        %1625 = vmatpush1.bf16.xpose.msra.mxu0 0
        %1626 = vmatprep.subr.bf16.mxu0 0
        %1627 = vmatpush1.bf16.xpose.msra.mxu0 0
        %1628 = vmatprep.subr.bf16.mxu0 0
        %1629 = vmatpush1.bf16.xpose.msra.mxu0 %v1612
        %1630 = vmatprep.subr.bf16.mxu0 0
        %1631 = vmatpush2.bf16.xpose.msra.mxu0 0
        %1632 = vmatprep.subr.bf16.mxu0 0
        %1633 = vmatpush2.bf16.xpose.msra.mxu0 0
        %1634 = vmatprep.subr.bf16.mxu0 0
        %1635 = vmatpush2.bf16.xpose.msra.mxu0 0
        %1636 = vmatprep.subr.bf16.mxu0 0
        %1637 = vmatpush2.bf16.xpose.msra.mxu0 0
        %1638 = vmatprep.subr.bf16.mxu0 0
        %1639 = vmatpush2.bf16.xpose.msra.mxu0 0
        %1640 = vmatprep.subr.bf16.mxu0 0
        %1641 = vmatpush2.bf16.xpose.msra.mxu0 0
        %1642 = vmatprep.subr.bf16.mxu0 0
        %1643 = vmatpush2.bf16.xpose.msra.mxu0 0
        %1644 = vmatprep.subr.bf16.mxu0 0
        %1645 = vmatpush2.bf16.xpose.msra.mxu0 0
        %1646 = vmatprep.mubr.bf16.mxu0 0
        %1647 = vmatmul.mubr.bf16.gmra.mxu0 %v1609
        %v1648 = vpop.f32.mrf.mxu0
        %v1649 = vadd.f32 0.0, %v1648
        %v1650 = vpop.f32.mrf.mxu0
        %v1651 = vpop.f32.mrf.mxu0
        %v1652 = vadd.f32 0.0, %v1651
        %v1653 = vpop.f32.mrf.mxu0
        %1654 = vdwg.mxu0
        %vm1655 = vcmask 72704
        %v1656 = vsel %vm1655, %v1649, -inf
        %1657 = vmax.xlane.f32.xlu0 %v1656
        %v1658 = vpop.xlane.xlu0 %1657
        %vm1659 = vcmask 65536
        %v1660 = vsel %vm1659, %v1652, -inf
        %1661 = vmax.xlane.f32.xlu0 %v1660
        %v1662 = vpop.xlane.xlu0 %1661
        %v1663 = vsub.f32 %v1649, %v1658
        %v1664 = vsub.f32 %v1652, %v1662
        %v1665 = vmul.f32 %v1663, 1.442695
        %v1666 = vpow.pop %v1665
        %v1667 = vmul.f32 %v1664, 1.442695
        %v1668 = vpow.pop %v1667
        %v1669 = vsel %vm1655, %v1666, 0.0
        %1670 = vadd.xlane.f32.xlu0 %v1669
        %v1671 = vpop.xlane.xlu0 %1670
        %v1672 = vsel %vm1659, %v1668, 0.0
        %1673 = vadd.xlane.f32.xlu0 %v1672
        %v1674 = vpop.xlane.xlu0 %1673
        %v1675 = vrcp.pop %v1671
        %v1676 = vrcp.pop %v1674
        %v1677 = vmul.f32 %v1666, %v1675
        %v1678 = vmul.f32 %v1668, %v1676
        %v1679 = vpack.c.bf16 %v1678, %v1677
        %1680 = vrot.lane.b32.xlu0 %v1603, 64
        %v1681 = vpop.permute.xlu0 %1680
        %v1683 = vsel %vm1655, %v1679, 0
        %vm1685 = vcmask 1043456
        %vm1686 = vcmask 1044480
        %v1687 = vsel %vm1685, 4294967295, 65535
        %v1688 = vsel %vm1686, %v1687, 0
        %v1690 = vand.u32 %v1681, %v1688
        %1692 = vmatprep.subr.bf16.mxu0 0
        %1693 = vmatpush1.bf16.msra.mxu0 0
        %1694 = vmatprep.subr.bf16.mxu0 0
        %1695 = vmatpush1.bf16.msra.mxu0 0
        %1696 = vmatprep.subr.bf16.mxu0 0
        %1697 = vmatpush1.bf16.msra.mxu0 0
        %1698 = vmatprep.subr.bf16.mxu0 0
        %1699 = vmatpush1.bf16.msra.mxu0 0
        %1700 = vmatprep.subr.bf16.mxu0 0
        %1701 = vmatpush1.bf16.msra.mxu0 0
        %1702 = vmatprep.subr.bf16.mxu0 0
        %1703 = vmatpush1.bf16.msra.mxu0 0
        %1704 = vmatprep.subr.bf16.mxu0 0
        %1705 = vmatpush1.bf16.msra.mxu0 0
        %1706 = vmatprep.subr.bf16.mxu0 0
        %1707 = vmatpush1.bf16.msra.mxu0 %v1690
        %1708 = vmatprep.subr.bf16.mxu0 0
        %1709 = vmatpush2.bf16.msra.mxu0 0
        %1710 = vmatprep.subr.bf16.mxu0 0
        %1711 = vmatpush2.bf16.msra.mxu0 0
        %1712 = vmatprep.subr.bf16.mxu0 0
        %1713 = vmatpush2.bf16.msra.mxu0 0
        %1714 = vmatprep.subr.bf16.mxu0 0
        %1715 = vmatpush2.bf16.msra.mxu0 0
        %1716 = vmatprep.subr.bf16.mxu0 0
        %1717 = vmatpush2.bf16.msra.mxu0 0
        %1718 = vmatprep.subr.bf16.mxu0 0
        %1719 = vmatpush2.bf16.msra.mxu0 0
        %1720 = vmatprep.subr.bf16.mxu0 0
        %1721 = vmatpush2.bf16.msra.mxu0 0
        %1722 = vmatprep.subr.bf16.mxu0 0
        %1723 = vmatpush2.bf16.msra.mxu0 0
        %1724 = vmatprep.mubr.bf16.mxu0 0
        %1725 = vmatmul.mubr.bf16.gmra.mxu0 %v1683
        %v1726 = vpop.f32.mrf.mxu0
        %v1727 = vadd.f32 0.0, %v1726
        %v1728 = vpop.f32.mrf.mxu0
        %v1729 = vpop.f32.mrf.mxu0
        %v1730 = vadd.f32 0.0, %v1729
        %v1731 = vpop.f32.mrf.mxu0
        %1732 = vdwg.mxu0
        %1733 = vst.msk [vmem:[#allocation4] sm:$0xff] %vm1607, %v1727
        %vm1734 = vcmask 57344
        %1735 = vst.msk [vmem:[#allocation4 + $0x8] sm:$0x1] %vm1734, %v1730
        %1736 = vrot.lane.b32.xlu0 %v1603, 120
        %v1737 = vpop.permute.xlu0 %1736
        %1738 = vrot.lane.b32.xlu0 %v1603, 88
        %v1739 = vpop.permute.xlu0 %1738
        %v1741 = vsel %vm1607, %v1737, 0
        %v1744 = vsel %vm1607, %v1739, 0
        %1746 = vmatprep.subr.bf16.mxu0 0
        %1747 = vmatpush1.bf16.xpose.msra.mxu0 0
        %1748 = vmatprep.subr.bf16.mxu0 0
        %1749 = vmatpush1.bf16.xpose.msra.mxu0 0
        %1750 = vmatprep.subr.bf16.mxu0 0
        %1751 = vmatpush1.bf16.xpose.msra.mxu0 0
        %1752 = vmatprep.subr.bf16.mxu0 0
        %1753 = vmatpush1.bf16.xpose.msra.mxu0 0
        %1754 = vmatprep.subr.bf16.mxu0 0
        %1755 = vmatpush1.bf16.xpose.msra.mxu0 0
        %1756 = vmatprep.subr.bf16.mxu0 0
        %1757 = vmatpush1.bf16.xpose.msra.mxu0 0
        %1758 = vmatprep.subr.bf16.mxu0 0
        %1759 = vmatpush1.bf16.xpose.msra.mxu0 0
        %1760 = vmatprep.subr.bf16.mxu0 0
        %1761 = vmatpush1.bf16.xpose.msra.mxu0 %v1744
        %1762 = vmatprep.subr.bf16.mxu0 0
        %1763 = vmatpush2.bf16.xpose.msra.mxu0 0
        %1764 = vmatprep.subr.bf16.mxu0 0
        %1765 = vmatpush2.bf16.xpose.msra.mxu0 0
        %1766 = vmatprep.subr.bf16.mxu0 0
        %1767 = vmatpush2.bf16.xpose.msra.mxu0 0
        %1768 = vmatprep.subr.bf16.mxu0 0
        %1769 = vmatpush2.bf16.xpose.msra.mxu0 0
        %1770 = vmatprep.subr.bf16.mxu0 0
        %1771 = vmatpush2.bf16.xpose.msra.mxu0 0
        %1772 = vmatprep.subr.bf16.mxu0 0
        %1773 = vmatpush2.bf16.xpose.msra.mxu0 0
        %1774 = vmatprep.subr.bf16.mxu0 0
        %1775 = vmatpush2.bf16.xpose.msra.mxu0 0
        %1776 = vmatprep.subr.bf16.mxu0 0
        %1777 = vmatpush2.bf16.xpose.msra.mxu0 0
        %1778 = vmatprep.mubr.bf16.mxu0 0
        %1779 = vmatmul.mubr.bf16.gmra.mxu0 %v1741
        %v1780 = vpop.f32.mrf.mxu0
        %v1781 = vadd.f32 0.0, %v1780
        %v1782 = vpop.f32.mrf.mxu0
        %v1783 = vpop.f32.mrf.mxu0
        %v1784 = vadd.f32 0.0, %v1783
        %v1785 = vpop.f32.mrf.mxu0
        %1786 = vdwg.mxu0
        %v1787 = vsel %vm1655, %v1781, -inf
        %1788 = vmax.xlane.f32.xlu0 %v1787
        %v1789 = vpop.xlane.xlu0 %1788
        %v1790 = vsel %vm1659, %v1784, -inf
        %1791 = vmax.xlane.f32.xlu0 %v1790
        %v1792 = vpop.xlane.xlu0 %1791
        %v1793 = vsub.f32 %v1781, %v1789
        %v1794 = vsub.f32 %v1784, %v1792
        %v1795 = vmul.f32 %v1793, 1.442695
        %v1796 = vpow.pop %v1795
        %v1797 = vmul.f32 %v1794, 1.442695
        %v1798 = vpow.pop %v1797
        %v1799 = vsel %vm1655, %v1796, 0.0
        %1800 = vadd.xlane.f32.xlu0 %v1799
        %v1801 = vpop.xlane.xlu0 %1800
        %v1802 = vsel %vm1659, %v1798, 0.0
        %1803 = vadd.xlane.f32.xlu0 %v1802
        %v1804 = vpop.xlane.xlu0 %1803
        %v1805 = vrcp.pop %v1801
        %v1806 = vrcp.pop %v1804
        %v1807 = vmul.f32 %v1796, %v1805
        %v1808 = vmul.f32 %v1798, %v1806
        %v1809 = vpack.c.bf16 %v1808, %v1807
        %1810 = vrot.lane.b32.xlu0 %v1603, 56
        %v1811 = vpop.permute.xlu0 %1810
        %v1813 = vsel %vm1655, %v1809, 0
        %v1816 = vand.u32 %v1811, %v1688
        %1818 = vmatprep.subr.bf16.mxu0 0
        %1819 = vmatpush1.bf16.msra.mxu0 0
        %1820 = vmatprep.subr.bf16.mxu0 0
        %1821 = vmatpush1.bf16.msra.mxu0 0
        %1822 = vmatprep.subr.bf16.mxu0 0
        %1823 = vmatpush1.bf16.msra.mxu0 0
        %1824 = vmatprep.subr.bf16.mxu0 0
        %1825 = vmatpush1.bf16.msra.mxu0 0
        %1826 = vmatprep.subr.bf16.mxu0 0
        %1827 = vmatpush1.bf16.msra.mxu0 0
        %1828 = vmatprep.subr.bf16.mxu0 0
        %1829 = vmatpush1.bf16.msra.mxu0 0
        %1830 = vmatprep.subr.bf16.mxu0 0
        %1831 = vmatpush1.bf16.msra.mxu0 0
        %1832 = vmatprep.subr.bf16.mxu0 0
        %1833 = vmatpush1.bf16.msra.mxu0 %v1816
        %1834 = vmatprep.subr.bf16.mxu0 0
        %1835 = vmatpush2.bf16.msra.mxu0 0
        %1836 = vmatprep.subr.bf16.mxu0 0
        %1837 = vmatpush2.bf16.msra.mxu0 0
        %1838 = vmatprep.subr.bf16.mxu0 0
        %1839 = vmatpush2.bf16.msra.mxu0 0
        %1840 = vmatprep.subr.bf16.mxu0 0
        %1841 = vmatpush2.bf16.msra.mxu0 0
        %1842 = vmatprep.subr.bf16.mxu0 0
        %1843 = vmatpush2.bf16.msra.mxu0 0
        %1844 = vmatprep.subr.bf16.mxu0 0
        %1845 = vmatpush2.bf16.msra.mxu0 0
        %1846 = vmatprep.subr.bf16.mxu0 0
        %1847 = vmatpush2.bf16.msra.mxu0 0
        %1848 = vmatprep.subr.bf16.mxu0 0
        %1849 = vmatpush2.bf16.msra.mxu0 0
        %1850 = vmatprep.mubr.bf16.mxu0 0
        %1851 = vmatmul.mubr.bf16.gmra.mxu0 %v1813
        %v1852 = vpop.f32.mrf.mxu0
        %v1853 = vadd.f32 0.0, %v1852
        %v1854 = vpop.f32.mrf.mxu0
        %v1855 = vpop.f32.mrf.mxu0
        %v1856 = vadd.f32 0.0, %v1855
        %v1857 = vpop.f32.mrf.mxu0
        %1858 = vdwg.mxu0
        %1861 = vrot.lane.b32.xlu0 %v1853, 8
        %v1862 = vpop.permute.xlu0 %1861
        %1863 = vrot.lane.b32.xlu0 %v1856, 8
        %v1864 = vpop.permute.xlu0 %1863
        %vm1867 = vcmask 130112
        %1868 = vst.msk [vmem:[#allocation4] sm:$0xff] %vm1867, %v1862
        %vm1869 = vcmask 122944
        %1870 = vst.msk [vmem:[#allocation4 + $0x8] sm:$0x1] %vm1869, %v1864
        %1871 = vrot.lane.b32.xlu0 %v1603, 112
        %v1872 = vpop.permute.xlu0 %1871
        %1873 = vrot.lane.b32.xlu0 %v1603, 80
        %v1874 = vpop.permute.xlu0 %1873
        %v1876 = vsel %vm1607, %v1872, 0
        %v1879 = vsel %vm1607, %v1874, 0
        %1881 = vmatprep.subr.bf16.mxu0 0
        %1882 = vmatpush1.bf16.xpose.msra.mxu0 0
        %1883 = vmatprep.subr.bf16.mxu0 0
        %1884 = vmatpush1.bf16.xpose.msra.mxu0 0
        %1885 = vmatprep.subr.bf16.mxu0 0
        %1886 = vmatpush1.bf16.xpose.msra.mxu0 0
        %1887 = vmatprep.subr.bf16.mxu0 0
        %1888 = vmatpush1.bf16.xpose.msra.mxu0 0
        %1889 = vmatprep.subr.bf16.mxu0 0
        %1890 = vmatpush1.bf16.xpose.msra.mxu0 0
        %1891 = vmatprep.subr.bf16.mxu0 0
        %1892 = vmatpush1.bf16.xpose.msra.mxu0 0
        %1893 = vmatprep.subr.bf16.mxu0 0
        %1894 = vmatpush1.bf16.xpose.msra.mxu0 0
        %1895 = vmatprep.subr.bf16.mxu0 0
        %1896 = vmatpush1.bf16.xpose.msra.mxu0 %v1879
        %1897 = vmatprep.subr.bf16.mxu0 0
        %1898 = vmatpush2.bf16.xpose.msra.mxu0 0
        %1899 = vmatprep.subr.bf16.mxu0 0
        %1900 = vmatpush2.bf16.xpose.msra.mxu0 0
        %1901 = vmatprep.subr.bf16.mxu0 0
        %1902 = vmatpush2.bf16.xpose.msra.mxu0 0
        %1903 = vmatprep.subr.bf16.mxu0 0
        %1904 = vmatpush2.bf16.xpose.msra.mxu0 0
        %1905 = vmatprep.subr.bf16.mxu0 0
        %1906 = vmatpush2.bf16.xpose.msra.mxu0 0
        %1907 = vmatprep.subr.bf16.mxu0 0
        %1908 = vmatpush2.bf16.xpose.msra.mxu0 0
        %1909 = vmatprep.subr.bf16.mxu0 0
        %1910 = vmatpush2.bf16.xpose.msra.mxu0 0
        %1911 = vmatprep.subr.bf16.mxu0 0
        %1912 = vmatpush2.bf16.xpose.msra.mxu0 0
        %1913 = vmatprep.mubr.bf16.mxu0 0
        %1914 = vmatmul.mubr.bf16.gmra.mxu0 %v1876
        %v1915 = vpop.f32.mrf.mxu0
        %v1916 = vadd.f32 0.0, %v1915
        %v1917 = vpop.f32.mrf.mxu0
        %v1918 = vpop.f32.mrf.mxu0
        %v1919 = vadd.f32 0.0, %v1918
        %v1920 = vpop.f32.mrf.mxu0
        %1921 = vdwg.mxu0
        %v1922 = vsel %vm1655, %v1916, -inf
        %1923 = vmax.xlane.f32.xlu0 %v1922
        %v1924 = vpop.xlane.xlu0 %1923
        %v1925 = vsel %vm1659, %v1919, -inf
        %1926 = vmax.xlane.f32.xlu0 %v1925
        %v1927 = vpop.xlane.xlu0 %1926
        %v1928 = vsub.f32 %v1916, %v1924
        %v1929 = vsub.f32 %v1919, %v1927
        %v1930 = vmul.f32 %v1928, 1.442695
        %v1931 = vpow.pop %v1930
        %v1932 = vmul.f32 %v1929, 1.442695
        %v1933 = vpow.pop %v1932
        %v1934 = vsel %vm1655, %v1931, 0.0
        %1935 = vadd.xlane.f32.xlu0 %v1934
        %v1936 = vpop.xlane.xlu0 %1935
        %v1937 = vsel %vm1659, %v1933, 0.0
        %1938 = vadd.xlane.f32.xlu0 %v1937
        %v1939 = vpop.xlane.xlu0 %1938
        %v1940 = vrcp.pop %v1936
        %v1941 = vrcp.pop %v1939
        %v1942 = vmul.f32 %v1931, %v1940
        %v1943 = vmul.f32 %v1933, %v1941
        %v1944 = vpack.c.bf16 %v1943, %v1942
        %1945 = vrot.lane.b32.xlu0 %v1603, 48
        %v1946 = vpop.permute.xlu0 %1945
        %v1948 = vsel %vm1655, %v1944, 0
        %v1951 = vand.u32 %v1946, %v1688
        %1953 = vmatprep.subr.bf16.mxu0 0
        %1954 = vmatpush1.bf16.msra.mxu0 0
        %1955 = vmatprep.subr.bf16.mxu0 0
        %1956 = vmatpush1.bf16.msra.mxu0 0
        %1957 = vmatprep.subr.bf16.mxu0 0
        %1958 = vmatpush1.bf16.msra.mxu0 0
        %1959 = vmatprep.subr.bf16.mxu0 0
        %1960 = vmatpush1.bf16.msra.mxu0 0
        %1961 = vmatprep.subr.bf16.mxu0 0
        %1962 = vmatpush1.bf16.msra.mxu0 0
        %1963 = vmatprep.subr.bf16.mxu0 0
        %1964 = vmatpush1.bf16.msra.mxu0 0
        %1965 = vmatprep.subr.bf16.mxu0 0
        %1966 = vmatpush1.bf16.msra.mxu0 0
        %1967 = vmatprep.subr.bf16.mxu0 0
        %1968 = vmatpush1.bf16.msra.mxu0 %v1951
        %1969 = vmatprep.subr.bf16.mxu0 0
        %1970 = vmatpush2.bf16.msra.mxu0 0
        %1971 = vmatprep.subr.bf16.mxu0 0
        %1972 = vmatpush2.bf16.msra.mxu0 0
        %1973 = vmatprep.subr.bf16.mxu0 0
        %1974 = vmatpush2.bf16.msra.mxu0 0
        %1975 = vmatprep.subr.bf16.mxu0 0
        %1976 = vmatpush2.bf16.msra.mxu0 0
        %1977 = vmatprep.subr.bf16.mxu0 0
        %1978 = vmatpush2.bf16.msra.mxu0 0
        %1979 = vmatprep.subr.bf16.mxu0 0
        %1980 = vmatpush2.bf16.msra.mxu0 0
        %1981 = vmatprep.subr.bf16.mxu0 0
        %1982 = vmatpush2.bf16.msra.mxu0 0
        %1983 = vmatprep.subr.bf16.mxu0 0
        %1984 = vmatpush2.bf16.msra.mxu0 0
        %1985 = vmatprep.mubr.bf16.mxu0 0
        %1986 = vmatmul.mubr.bf16.gmra.mxu0 %v1948
        %v1987 = vpop.f32.mrf.mxu0
        %v1988 = vadd.f32 0.0, %v1987
        %v1989 = vpop.f32.mrf.mxu0
        %v1990 = vpop.f32.mrf.mxu0
        %v1991 = vadd.f32 0.0, %v1990
        %v1992 = vpop.f32.mrf.mxu0
        %1993 = vdwg.mxu0
        %1996 = vrot.lane.b32.xlu0 %v1988, 16
        %v1997 = vpop.permute.xlu0 %1996
        %1998 = vrot.lane.b32.xlu0 %v1991, 16
        %v1999 = vpop.permute.xlu0 %1998
        %vm2002 = vcmask 195712
        %2003 = vst.msk [vmem:[#allocation4] sm:$0xff] %vm2002, %v1997
        %vm2004 = vcmask 188544
        %2005 = vst.msk [vmem:[#allocation4 + $0x8] sm:$0x1] %vm2004, %v1999
        %2006 = vrot.lane.b32.xlu0 %v1603, 104
        %v2007 = vpop.permute.xlu0 %2006
        %2008 = vrot.lane.b32.xlu0 %v1603, 72
        %v2009 = vpop.permute.xlu0 %2008
        %v2011 = vsel %vm1607, %v2007, 0
        %v2014 = vsel %vm1607, %v2009, 0
        %2016 = vmatprep.subr.bf16.mxu0 0
        %2017 = vmatpush1.bf16.xpose.msra.mxu0 0
        %2018 = vmatprep.subr.bf16.mxu0 0
        %2019 = vmatpush1.bf16.xpose.msra.mxu0 0
        %2020 = vmatprep.subr.bf16.mxu0 0
        %2021 = vmatpush1.bf16.xpose.msra.mxu0 0
        %2022 = vmatprep.subr.bf16.mxu0 0
        %2023 = vmatpush1.bf16.xpose.msra.mxu0 0
        %2024 = vmatprep.subr.bf16.mxu0 0
        %2025 = vmatpush1.bf16.xpose.msra.mxu0 0
        %2026 = vmatprep.subr.bf16.mxu0 0
        %2027 = vmatpush1.bf16.xpose.msra.mxu0 0
        %2028 = vmatprep.subr.bf16.mxu0 0
        %2029 = vmatpush1.bf16.xpose.msra.mxu0 0
        %2030 = vmatprep.subr.bf16.mxu0 0
        %2031 = vmatpush1.bf16.xpose.msra.mxu0 %v2014
        %2032 = vmatprep.subr.bf16.mxu0 0
        %2033 = vmatpush2.bf16.xpose.msra.mxu0 0
        %2034 = vmatprep.subr.bf16.mxu0 0
        %2035 = vmatpush2.bf16.xpose.msra.mxu0 0
        %2036 = vmatprep.subr.bf16.mxu0 0
        %2037 = vmatpush2.bf16.xpose.msra.mxu0 0
        %2038 = vmatprep.subr.bf16.mxu0 0
        %2039 = vmatpush2.bf16.xpose.msra.mxu0 0
        %2040 = vmatprep.subr.bf16.mxu0 0
        %2041 = vmatpush2.bf16.xpose.msra.mxu0 0
        %2042 = vmatprep.subr.bf16.mxu0 0
        %2043 = vmatpush2.bf16.xpose.msra.mxu0 0
        %2044 = vmatprep.subr.bf16.mxu0 0
        %2045 = vmatpush2.bf16.xpose.msra.mxu0 0
        %2046 = vmatprep.subr.bf16.mxu0 0
        %2047 = vmatpush2.bf16.xpose.msra.mxu0 0
        %2048 = vmatprep.mubr.bf16.mxu0 0
        %2049 = vmatmul.mubr.bf16.gmra.mxu0 %v2011
        %v2050 = vpop.f32.mrf.mxu0
        %v2051 = vadd.f32 0.0, %v2050
        %v2052 = vpop.f32.mrf.mxu0
        %v2053 = vpop.f32.mrf.mxu0
        %v2054 = vadd.f32 0.0, %v2053
        %v2055 = vpop.f32.mrf.mxu0
        %2056 = vdwg.mxu0
        %v2057 = vsel %vm1655, %v2051, -inf
        %2058 = vmax.xlane.f32.xlu0 %v2057
        %v2059 = vpop.xlane.xlu0 %2058
        %v2060 = vsel %vm1659, %v2054, -inf
        %2061 = vmax.xlane.f32.xlu0 %v2060
        %v2062 = vpop.xlane.xlu0 %2061
        %v2063 = vsub.f32 %v2051, %v2059
        %v2064 = vsub.f32 %v2054, %v2062
        %v2065 = vmul.f32 %v2063, 1.442695
        %v2066 = vpow.pop %v2065
        %v2067 = vmul.f32 %v2064, 1.442695
        %v2068 = vpow.pop %v2067
        %v2069 = vsel %vm1655, %v2066, 0.0
        %2070 = vadd.xlane.f32.xlu0 %v2069
        %v2071 = vpop.xlane.xlu0 %2070
        %v2072 = vsel %vm1659, %v2068, 0.0
        %2073 = vadd.xlane.f32.xlu0 %v2072
        %v2074 = vpop.xlane.xlu0 %2073
        %v2075 = vrcp.pop %v2071
        %v2076 = vrcp.pop %v2074
        %v2077 = vmul.f32 %v2066, %v2075
        %v2078 = vmul.f32 %v2068, %v2076
        %v2079 = vpack.c.bf16 %v2078, %v2077
        %2080 = vrot.lane.b32.xlu0 %v1603, 40
        %v2081 = vpop.permute.xlu0 %2080
        %v2083 = vsel %vm1655, %v2079, 0
        %v2086 = vand.u32 %v2081, %v1688
        %2088 = vmatprep.subr.bf16.mxu0 0
        %2089 = vmatpush1.bf16.msra.mxu0 0
        %2090 = vmatprep.subr.bf16.mxu0 0
        %2091 = vmatpush1.bf16.msra.mxu0 0
        %2092 = vmatprep.subr.bf16.mxu0 0
        %2093 = vmatpush1.bf16.msra.mxu0 0
        %2094 = vmatprep.subr.bf16.mxu0 0
        %2095 = vmatpush1.bf16.msra.mxu0 0
        %2096 = vmatprep.subr.bf16.mxu0 0
        %2097 = vmatpush1.bf16.msra.mxu0 0
        %2098 = vmatprep.subr.bf16.mxu0 0
        %2099 = vmatpush1.bf16.msra.mxu0 0
        %2100 = vmatprep.subr.bf16.mxu0 0
        %2101 = vmatpush1.bf16.msra.mxu0 0
        %2102 = vmatprep.subr.bf16.mxu0 0
        %2103 = vmatpush1.bf16.msra.mxu0 %v2086
        %2104 = vmatprep.subr.bf16.mxu0 0
        %2105 = vmatpush2.bf16.msra.mxu0 0
        %2106 = vmatprep.subr.bf16.mxu0 0
        %2107 = vmatpush2.bf16.msra.mxu0 0
        %2108 = vmatprep.subr.bf16.mxu0 0
        %2109 = vmatpush2.bf16.msra.mxu0 0
        %2110 = vmatprep.subr.bf16.mxu0 0
        %2111 = vmatpush2.bf16.msra.mxu0 0
        %2112 = vmatprep.subr.bf16.mxu0 0
        %2113 = vmatpush2.bf16.msra.mxu0 0
        %2114 = vmatprep.subr.bf16.mxu0 0
        %2115 = vmatpush2.bf16.msra.mxu0 0
        %2116 = vmatprep.subr.bf16.mxu0 0
        %2117 = vmatpush2.bf16.msra.mxu0 0
        %2118 = vmatprep.subr.bf16.mxu0 0
        %2119 = vmatpush2.bf16.msra.mxu0 0
        %2120 = vmatprep.mubr.bf16.mxu0 0
        %2121 = vmatmul.mubr.bf16.gmra.mxu0 %v2083
        %v2122 = vpop.f32.mrf.mxu0
        %v2123 = vadd.f32 0.0, %v2122
        %v2124 = vpop.f32.mrf.mxu0
        %v2125 = vpop.f32.mrf.mxu0
        %v2126 = vadd.f32 0.0, %v2125
        %v2127 = vpop.f32.mrf.mxu0
        %2128 = vdwg.mxu0
        %2131 = vrot.lane.b32.xlu0 %v2123, 24
        %v2132 = vpop.permute.xlu0 %2131
        %2133 = vrot.lane.b32.xlu0 %v2126, 24
        %v2134 = vpop.permute.xlu0 %2133
        %vm2137 = vcmask 261312
        %2138 = vst.msk [vmem:[#allocation4] sm:$0xff] %vm2137, %v2132
        %vm2139 = vcmask 254144
        %2140 = vst.msk [vmem:[#allocation4 + $0x8] sm:$0x1] %vm2139, %v2134
        %v2141 = vpack.c.bf16 %v1598, %v1593
        %v2143 = vshrl.u32 %v2141, 16
        %v2145 = vshll.u32 %v2141, 16
        %v2147 = vrot.slane %v2145, 1
        %v2148 = vor.u32 %v2143, %v2147
        %2149 = vrot.lane.b32.xlu0 %v2148, 96
        %v2150 = vpop.permute.xlu0 %2149
        %v2152 = vsel %vm1607, %v2148, 0
        %v2155 = vsel %vm1607, %v2150, 0
        %2157 = vmatprep.subr.bf16.mxu0 0
        %2158 = vmatpush1.bf16.xpose.msra.mxu0 0
        %2159 = vmatprep.subr.bf16.mxu0 0
        %2160 = vmatpush1.bf16.xpose.msra.mxu0 0
        %2161 = vmatprep.subr.bf16.mxu0 0
        %2162 = vmatpush1.bf16.xpose.msra.mxu0 0
        %2163 = vmatprep.subr.bf16.mxu0 0
        %2164 = vmatpush1.bf16.xpose.msra.mxu0 0
        %2165 = vmatprep.subr.bf16.mxu0 0
        %2166 = vmatpush1.bf16.xpose.msra.mxu0 0
        %2167 = vmatprep.subr.bf16.mxu0 0
        %2168 = vmatpush1.bf16.xpose.msra.mxu0 0
        %2169 = vmatprep.subr.bf16.mxu0 0
        %2170 = vmatpush1.bf16.xpose.msra.mxu0 0
        %2171 = vmatprep.subr.bf16.mxu0 0
        %2172 = vmatpush1.bf16.xpose.msra.mxu0 %v2155
        %2173 = vmatprep.subr.bf16.mxu0 0
        %2174 = vmatpush2.bf16.xpose.msra.mxu0 0
        %2175 = vmatprep.subr.bf16.mxu0 0
        %2176 = vmatpush2.bf16.xpose.msra.mxu0 0
        %2177 = vmatprep.subr.bf16.mxu0 0
        %2178 = vmatpush2.bf16.xpose.msra.mxu0 0
        %2179 = vmatprep.subr.bf16.mxu0 0
        %2180 = vmatpush2.bf16.xpose.msra.mxu0 0
        %2181 = vmatprep.subr.bf16.mxu0 0
        %2182 = vmatpush2.bf16.xpose.msra.mxu0 0
        %2183 = vmatprep.subr.bf16.mxu0 0
        %2184 = vmatpush2.bf16.xpose.msra.mxu0 0
        %2185 = vmatprep.subr.bf16.mxu0 0
        %2186 = vmatpush2.bf16.xpose.msra.mxu0 0
        %2187 = vmatprep.subr.bf16.mxu0 0
        %2188 = vmatpush2.bf16.xpose.msra.mxu0 0
        %2189 = vmatprep.mubr.bf16.mxu0 0
        %2190 = vmatmul.mubr.bf16.gmra.mxu0 %v2152
        %v2191 = vpop.f32.mrf.mxu0
        %v2192 = vadd.f32 0.0, %v2191
        %v2193 = vpop.f32.mrf.mxu0
        %v2194 = vpop.f32.mrf.mxu0
        %v2195 = vadd.f32 0.0, %v2194
        %v2196 = vpop.f32.mrf.mxu0
        %2197 = vdwg.mxu0
        %v2198 = vsel %vm1655, %v2192, -inf
        %2199 = vmax.xlane.f32.xlu0 %v2198
        %v2200 = vpop.xlane.xlu0 %2199
        %v2201 = vsel %vm1659, %v2195, -inf
        %2202 = vmax.xlane.f32.xlu0 %v2201
        %v2203 = vpop.xlane.xlu0 %2202
        %v2204 = vsub.f32 %v2192, %v2200
        %v2205 = vsub.f32 %v2195, %v2203
        %v2206 = vmul.f32 %v2204, 1.442695
        %v2207 = vpow.pop %v2206
        %v2208 = vmul.f32 %v2205, 1.442695
        %v2209 = vpow.pop %v2208
        %v2210 = vsel %vm1655, %v2207, 0.0
        %2211 = vadd.xlane.f32.xlu0 %v2210
        %v2212 = vpop.xlane.xlu0 %2211
        %v2213 = vsel %vm1659, %v2209, 0.0
        %2214 = vadd.xlane.f32.xlu0 %v2213
        %v2215 = vpop.xlane.xlu0 %2214
        %v2216 = vrcp.pop %v2212
        %v2217 = vrcp.pop %v2215
        %v2218 = vmul.f32 %v2207, %v2216
        %v2219 = vmul.f32 %v2209, %v2217
        %v2220 = vpack.c.bf16 %v2219, %v2218
        %2221 = vrot.lane.b32.xlu0 %v2148, 64
        %v2222 = vpop.permute.xlu0 %2221
        %v2224 = vsel %vm1655, %v2220, 0
        %v2227 = vand.u32 %v2222, %v1688
        %2229 = vmatprep.subr.bf16.mxu0 0
        %2230 = vmatpush1.bf16.msra.mxu0 0
        %2231 = vmatprep.subr.bf16.mxu0 0
        %2232 = vmatpush1.bf16.msra.mxu0 0
        %2233 = vmatprep.subr.bf16.mxu0 0
        %2234 = vmatpush1.bf16.msra.mxu0 0
        %2235 = vmatprep.subr.bf16.mxu0 0
        %2236 = vmatpush1.bf16.msra.mxu0 0
        %2237 = vmatprep.subr.bf16.mxu0 0
        %2238 = vmatpush1.bf16.msra.mxu0 0
        %2239 = vmatprep.subr.bf16.mxu0 0
        %2240 = vmatpush1.bf16.msra.mxu0 0
        %2241 = vmatprep.subr.bf16.mxu0 0
        %2242 = vmatpush1.bf16.msra.mxu0 0
        %2243 = vmatprep.subr.bf16.mxu0 0
        %2244 = vmatpush1.bf16.msra.mxu0 %v2227
        %2245 = vmatprep.subr.bf16.mxu0 0
        %2246 = vmatpush2.bf16.msra.mxu0 0
        %2247 = vmatprep.subr.bf16.mxu0 0
        %2248 = vmatpush2.bf16.msra.mxu0 0
        %2249 = vmatprep.subr.bf16.mxu0 0
        %2250 = vmatpush2.bf16.msra.mxu0 0
        %2251 = vmatprep.subr.bf16.mxu0 0
        %2252 = vmatpush2.bf16.msra.mxu0 0
        %2253 = vmatprep.subr.bf16.mxu0 0
        %2254 = vmatpush2.bf16.msra.mxu0 0
        %2255 = vmatprep.subr.bf16.mxu0 0
        %2256 = vmatpush2.bf16.msra.mxu0 0
        %2257 = vmatprep.subr.bf16.mxu0 0
        %2258 = vmatpush2.bf16.msra.mxu0 0
        %2259 = vmatprep.subr.bf16.mxu0 0
        %2260 = vmatpush2.bf16.msra.mxu0 0
        %2261 = vmatprep.mubr.bf16.mxu0 0
        %2262 = vmatmul.mubr.bf16.gmra.mxu0 %v2224
        %v2263 = vpop.f32.mrf.mxu0
        %v2264 = vadd.f32 0.0, %v2263
        %v2265 = vpop.f32.mrf.mxu0
        %v2266 = vpop.f32.mrf.mxu0
        %v2267 = vadd.f32 0.0, %v2266
        %v2268 = vpop.f32.mrf.mxu0
        %2269 = vdwg.mxu0
        %2270 = vst.msk [vmem:[#allocation4 + $0x9] sm:$0xff] %vm1607, %v2264
        %2271 = vst.msk [vmem:[#allocation4 + $0x11] sm:$0x1] %vm1734, %v2267
        %2272 = vrot.lane.b32.xlu0 %v2148, 120
        %v2273 = vpop.permute.xlu0 %2272
        %2274 = vrot.lane.b32.xlu0 %v2148, 88
        %v2275 = vpop.permute.xlu0 %2274
        %v2277 = vsel %vm1607, %v2273, 0
        %v2280 = vsel %vm1607, %v2275, 0
        %2282 = vmatprep.subr.bf16.mxu0 0
        %2283 = vmatpush1.bf16.xpose.msra.mxu0 0
        %2284 = vmatprep.subr.bf16.mxu0 0
        %2285 = vmatpush1.bf16.xpose.msra.mxu0 0
        %2286 = vmatprep.subr.bf16.mxu0 0
        %2287 = vmatpush1.bf16.xpose.msra.mxu0 0
        %2288 = vmatprep.subr.bf16.mxu0 0
        %2289 = vmatpush1.bf16.xpose.msra.mxu0 0
        %2290 = vmatprep.subr.bf16.mxu0 0
        %2291 = vmatpush1.bf16.xpose.msra.mxu0 0
        %2292 = vmatprep.subr.bf16.mxu0 0
        %2293 = vmatpush1.bf16.xpose.msra.mxu0 0
        %2294 = vmatprep.subr.bf16.mxu0 0
        %2295 = vmatpush1.bf16.xpose.msra.mxu0 0
        %2296 = vmatprep.subr.bf16.mxu0 0
        %2297 = vmatpush1.bf16.xpose.msra.mxu0 %v2280
        %2298 = vmatprep.subr.bf16.mxu0 0
        %2299 = vmatpush2.bf16.xpose.msra.mxu0 0
        %2300 = vmatprep.subr.bf16.mxu0 0
        %2301 = vmatpush2.bf16.xpose.msra.mxu0 0
        %2302 = vmatprep.subr.bf16.mxu0 0
        %2303 = vmatpush2.bf16.xpose.msra.mxu0 0
        %2304 = vmatprep.subr.bf16.mxu0 0
        %2305 = vmatpush2.bf16.xpose.msra.mxu0 0
        %2306 = vmatprep.subr.bf16.mxu0 0
        %2307 = vmatpush2.bf16.xpose.msra.mxu0 0
        %2308 = vmatprep.subr.bf16.mxu0 0
        %2309 = vmatpush2.bf16.xpose.msra.mxu0 0
        %2310 = vmatprep.subr.bf16.mxu0 0
        %2311 = vmatpush2.bf16.xpose.msra.mxu0 0
        %2312 = vmatprep.subr.bf16.mxu0 0
        %2313 = vmatpush2.bf16.xpose.msra.mxu0 0
        %2314 = vmatprep.mubr.bf16.mxu0 0
        %2315 = vmatmul.mubr.bf16.gmra.mxu0 %v2277
        %v2316 = vpop.f32.mrf.mxu0
        %v2317 = vadd.f32 0.0, %v2316
        %v2318 = vpop.f32.mrf.mxu0
        %v2319 = vpop.f32.mrf.mxu0
        %v2320 = vadd.f32 0.0, %v2319
        %v2321 = vpop.f32.mrf.mxu0
        %2322 = vdwg.mxu0
        %v2323 = vsel %vm1655, %v2317, -inf
        %2324 = vmax.xlane.f32.xlu0 %v2323
        %v2325 = vpop.xlane.xlu0 %2324
        %v2326 = vsel %vm1659, %v2320, -inf
        %2327 = vmax.xlane.f32.xlu0 %v2326
        %v2328 = vpop.xlane.xlu0 %2327
        %v2329 = vsub.f32 %v2317, %v2325
        %v2330 = vsub.f32 %v2320, %v2328
        %v2331 = vmul.f32 %v2329, 1.442695
        %v2332 = vpow.pop %v2331
        %v2333 = vmul.f32 %v2330, 1.442695
        %v2334 = vpow.pop %v2333
        %v2335 = vsel %vm1655, %v2332, 0.0
        %2336 = vadd.xlane.f32.xlu0 %v2335
        %v2337 = vpop.xlane.xlu0 %2336
        %v2338 = vsel %vm1659, %v2334, 0.0
        %2339 = vadd.xlane.f32.xlu0 %v2338
        %v2340 = vpop.xlane.xlu0 %2339
        %v2341 = vrcp.pop %v2337
        %v2342 = vrcp.pop %v2340
        %v2343 = vmul.f32 %v2332, %v2341
        %v2344 = vmul.f32 %v2334, %v2342
        %v2345 = vpack.c.bf16 %v2344, %v2343
        %2346 = vrot.lane.b32.xlu0 %v2148, 56
        %v2347 = vpop.permute.xlu0 %2346
        %v2349 = vsel %vm1655, %v2345, 0
        %v2352 = vand.u32 %v2347, %v1688
        %2354 = vmatprep.subr.bf16.mxu0 0
        %2355 = vmatpush1.bf16.msra.mxu0 0
        %2356 = vmatprep.subr.bf16.mxu0 0
        %2357 = vmatpush1.bf16.msra.mxu0 0
        %2358 = vmatprep.subr.bf16.mxu0 0
        %2359 = vmatpush1.bf16.msra.mxu0 0
        %2360 = vmatprep.subr.bf16.mxu0 0
        %2361 = vmatpush1.bf16.msra.mxu0 0
        %2362 = vmatprep.subr.bf16.mxu0 0
        %2363 = vmatpush1.bf16.msra.mxu0 0
        %2364 = vmatprep.subr.bf16.mxu0 0
        %2365 = vmatpush1.bf16.msra.mxu0 0
        %2366 = vmatprep.subr.bf16.mxu0 0
        %2367 = vmatpush1.bf16.msra.mxu0 0
        %2368 = vmatprep.subr.bf16.mxu0 0
        %2369 = vmatpush1.bf16.msra.mxu0 %v2352
        %2370 = vmatprep.subr.bf16.mxu0 0
        %2371 = vmatpush2.bf16.msra.mxu0 0
        %2372 = vmatprep.subr.bf16.mxu0 0
        %2373 = vmatpush2.bf16.msra.mxu0 0
        %2374 = vmatprep.subr.bf16.mxu0 0
        %2375 = vmatpush2.bf16.msra.mxu0 0
        %2376 = vmatprep.subr.bf16.mxu0 0
        %2377 = vmatpush2.bf16.msra.mxu0 0
        %2378 = vmatprep.subr.bf16.mxu0 0
        %2379 = vmatpush2.bf16.msra.mxu0 0
        %2380 = vmatprep.subr.bf16.mxu0 0
        %2381 = vmatpush2.bf16.msra.mxu0 0
        %2382 = vmatprep.subr.bf16.mxu0 0
        %2383 = vmatpush2.bf16.msra.mxu0 0
        %2384 = vmatprep.subr.bf16.mxu0 0
        %2385 = vmatpush2.bf16.msra.mxu0 0
        %2386 = vmatprep.mubr.bf16.mxu0 0
        %2387 = vmatmul.mubr.bf16.gmra.mxu0 %v2349
        %v2388 = vpop.f32.mrf.mxu0
        %v2389 = vadd.f32 0.0, %v2388
        %v2390 = vpop.f32.mrf.mxu0
        %v2391 = vpop.f32.mrf.mxu0
        %v2392 = vadd.f32 0.0, %v2391
        %v2393 = vpop.f32.mrf.mxu0
        %2394 = vdwg.mxu0
        %2397 = vrot.lane.b32.xlu0 %v2389, 8
        %v2398 = vpop.permute.xlu0 %2397
        %2399 = vrot.lane.b32.xlu0 %v2392, 8
        %v2400 = vpop.permute.xlu0 %2399
        %2403 = vst.msk [vmem:[#allocation4 + $0x9] sm:$0xff] %vm1867, %v2398
        %2404 = vst.msk [vmem:[#allocation4 + $0x11] sm:$0x1] %vm1869, %v2400
        %2405 = vrot.lane.b32.xlu0 %v2148, 112
        %v2406 = vpop.permute.xlu0 %2405
        %2407 = vrot.lane.b32.xlu0 %v2148, 80
        %v2408 = vpop.permute.xlu0 %2407
        %v2410 = vsel %vm1607, %v2406, 0
        %v2413 = vsel %vm1607, %v2408, 0
        %2415 = vmatprep.subr.bf16.mxu0 0
        %2416 = vmatpush1.bf16.xpose.msra.mxu0 0
        %2417 = vmatprep.subr.bf16.mxu0 0
        %2418 = vmatpush1.bf16.xpose.msra.mxu0 0
        %2419 = vmatprep.subr.bf16.mxu0 0
        %2420 = vmatpush1.bf16.xpose.msra.mxu0 0
        %2421 = vmatprep.subr.bf16.mxu0 0
        %2422 = vmatpush1.bf16.xpose.msra.mxu0 0
        %2423 = vmatprep.subr.bf16.mxu0 0
        %2424 = vmatpush1.bf16.xpose.msra.mxu0 0
        %2425 = vmatprep.subr.bf16.mxu0 0
        %2426 = vmatpush1.bf16.xpose.msra.mxu0 0
        %2427 = vmatprep.subr.bf16.mxu0 0
        %2428 = vmatpush1.bf16.xpose.msra.mxu0 0
        %2429 = vmatprep.subr.bf16.mxu0 0
        %2430 = vmatpush1.bf16.xpose.msra.mxu0 %v2413
        %2431 = vmatprep.subr.bf16.mxu0 0
        %2432 = vmatpush2.bf16.xpose.msra.mxu0 0
        %2433 = vmatprep.subr.bf16.mxu0 0
        %2434 = vmatpush2.bf16.xpose.msra.mxu0 0
        %2435 = vmatprep.subr.bf16.mxu0 0
        %2436 = vmatpush2.bf16.xpose.msra.mxu0 0
        %2437 = vmatprep.subr.bf16.mxu0 0
        %2438 = vmatpush2.bf16.xpose.msra.mxu0 0
        %2439 = vmatprep.subr.bf16.mxu0 0
        %2440 = vmatpush2.bf16.xpose.msra.mxu0 0
        %2441 = vmatprep.subr.bf16.mxu0 0
        %2442 = vmatpush2.bf16.xpose.msra.mxu0 0
        %2443 = vmatprep.subr.bf16.mxu0 0
        %2444 = vmatpush2.bf16.xpose.msra.mxu0 0
        %2445 = vmatprep.subr.bf16.mxu0 0
        %2446 = vmatpush2.bf16.xpose.msra.mxu0 0
        %2447 = vmatprep.mubr.bf16.mxu0 0
        %2448 = vmatmul.mubr.bf16.gmra.mxu0 %v2410
        %v2449 = vpop.f32.mrf.mxu0
        %v2450 = vadd.f32 0.0, %v2449
        %v2451 = vpop.f32.mrf.mxu0
        %v2452 = vpop.f32.mrf.mxu0
        %v2453 = vadd.f32 0.0, %v2452
        %v2454 = vpop.f32.mrf.mxu0
        %2455 = vdwg.mxu0
        %v2456 = vsel %vm1655, %v2450, -inf
        %2457 = vmax.xlane.f32.xlu0 %v2456
        %v2458 = vpop.xlane.xlu0 %2457
        %v2459 = vsel %vm1659, %v2453, -inf
        %2460 = vmax.xlane.f32.xlu0 %v2459
        %v2461 = vpop.xlane.xlu0 %2460
        %v2462 = vsub.f32 %v2450, %v2458
        %v2463 = vsub.f32 %v2453, %v2461
        %v2464 = vmul.f32 %v2462, 1.442695
        %v2465 = vpow.pop %v2464
        %v2466 = vmul.f32 %v2463, 1.442695
        %v2467 = vpow.pop %v2466
        %v2468 = vsel %vm1655, %v2465, 0.0
        %2469 = vadd.xlane.f32.xlu0 %v2468
        %v2470 = vpop.xlane.xlu0 %2469
        %v2471 = vsel %vm1659, %v2467, 0.0
        %2472 = vadd.xlane.f32.xlu0 %v2471
        %v2473 = vpop.xlane.xlu0 %2472
        %v2474 = vrcp.pop %v2470
        %v2475 = vrcp.pop %v2473
        %v2476 = vmul.f32 %v2465, %v2474
        %v2477 = vmul.f32 %v2467, %v2475
        %v2478 = vpack.c.bf16 %v2477, %v2476
        %2479 = vrot.lane.b32.xlu0 %v2148, 48
        %v2480 = vpop.permute.xlu0 %2479
        %v2482 = vsel %vm1655, %v2478, 0
        %v2485 = vand.u32 %v2480, %v1688
        %2487 = vmatprep.subr.bf16.mxu0 0
        %2488 = vmatpush1.bf16.msra.mxu0 0
        %2489 = vmatprep.subr.bf16.mxu0 0
        %2490 = vmatpush1.bf16.msra.mxu0 0
        %2491 = vmatprep.subr.bf16.mxu0 0
        %2492 = vmatpush1.bf16.msra.mxu0 0
        %2493 = vmatprep.subr.bf16.mxu0 0
        %2494 = vmatpush1.bf16.msra.mxu0 0
        %2495 = vmatprep.subr.bf16.mxu0 0
        %2496 = vmatpush1.bf16.msra.mxu0 0
        %2497 = vmatprep.subr.bf16.mxu0 0
        %2498 = vmatpush1.bf16.msra.mxu0 0
        %2499 = vmatprep.subr.bf16.mxu0 0
        %2500 = vmatpush1.bf16.msra.mxu0 0
        %2501 = vmatprep.subr.bf16.mxu0 0
        %2502 = vmatpush1.bf16.msra.mxu0 %v2485
        %2503 = vmatprep.subr.bf16.mxu0 0
        %2504 = vmatpush2.bf16.msra.mxu0 0
        %2505 = vmatprep.subr.bf16.mxu0 0
        %2506 = vmatpush2.bf16.msra.mxu0 0
        %2507 = vmatprep.subr.bf16.mxu0 0
        %2508 = vmatpush2.bf16.msra.mxu0 0
        %2509 = vmatprep.subr.bf16.mxu0 0
        %2510 = vmatpush2.bf16.msra.mxu0 0
        %2511 = vmatprep.subr.bf16.mxu0 0
        %2512 = vmatpush2.bf16.msra.mxu0 0
        %2513 = vmatprep.subr.bf16.mxu0 0
        %2514 = vmatpush2.bf16.msra.mxu0 0
        %2515 = vmatprep.subr.bf16.mxu0 0
        %2516 = vmatpush2.bf16.msra.mxu0 0
        %2517 = vmatprep.subr.bf16.mxu0 0
        %2518 = vmatpush2.bf16.msra.mxu0 0
        %2519 = vmatprep.mubr.bf16.mxu0 0
        %2520 = vmatmul.mubr.bf16.gmra.mxu0 %v2482
        %v2521 = vpop.f32.mrf.mxu0
        %v2522 = vadd.f32 0.0, %v2521
        %v2523 = vpop.f32.mrf.mxu0
        %v2524 = vpop.f32.mrf.mxu0
        %v2525 = vadd.f32 0.0, %v2524
        %v2526 = vpop.f32.mrf.mxu0
        %2527 = vdwg.mxu0
        %2530 = vrot.lane.b32.xlu0 %v2522, 16
        %v2531 = vpop.permute.xlu0 %2530
        %2532 = vrot.lane.b32.xlu0 %v2525, 16
        %v2533 = vpop.permute.xlu0 %2532
        %2536 = vst.msk [vmem:[#allocation4 + $0x9] sm:$0xff] %vm2002, %v2531
        %2537 = vst.msk [vmem:[#allocation4 + $0x11] sm:$0x1] %vm2004, %v2533
        %2538 = vrot.lane.b32.xlu0 %v2148, 104
        %v2539 = vpop.permute.xlu0 %2538
        %2540 = vrot.lane.b32.xlu0 %v2148, 72
        %v2541 = vpop.permute.xlu0 %2540
        %v2543 = vsel %vm1607, %v2539, 0
        %v2546 = vsel %vm1607, %v2541, 0
        %2548 = vmatprep.subr.bf16.mxu0 0
        %2549 = vmatpush1.bf16.xpose.msra.mxu0 0
        %2550 = vmatprep.subr.bf16.mxu0 0
        %2551 = vmatpush1.bf16.xpose.msra.mxu0 0
        %2552 = vmatprep.subr.bf16.mxu0 0
        %2553 = vmatpush1.bf16.xpose.msra.mxu0 0
        %2554 = vmatprep.subr.bf16.mxu0 0
        %2555 = vmatpush1.bf16.xpose.msra.mxu0 0
        %2556 = vmatprep.subr.bf16.mxu0 0
        %2557 = vmatpush1.bf16.xpose.msra.mxu0 0
        %2558 = vmatprep.subr.bf16.mxu0 0
        %2559 = vmatpush1.bf16.xpose.msra.mxu0 0
        %2560 = vmatprep.subr.bf16.mxu0 0
        %2561 = vmatpush1.bf16.xpose.msra.mxu0 0
        %2562 = vmatprep.subr.bf16.mxu0 0
        %2563 = vmatpush1.bf16.xpose.msra.mxu0 %v2546
        %2564 = vmatprep.subr.bf16.mxu0 0
        %2565 = vmatpush2.bf16.xpose.msra.mxu0 0
        %2566 = vmatprep.subr.bf16.mxu0 0
        %2567 = vmatpush2.bf16.xpose.msra.mxu0 0
        %2568 = vmatprep.subr.bf16.mxu0 0
        %2569 = vmatpush2.bf16.xpose.msra.mxu0 0
        %2570 = vmatprep.subr.bf16.mxu0 0
        %2571 = vmatpush2.bf16.xpose.msra.mxu0 0
        %2572 = vmatprep.subr.bf16.mxu0 0
        %2573 = vmatpush2.bf16.xpose.msra.mxu0 0
        %2574 = vmatprep.subr.bf16.mxu0 0
        %2575 = vmatpush2.bf16.xpose.msra.mxu0 0
        %2576 = vmatprep.subr.bf16.mxu0 0
        %2577 = vmatpush2.bf16.xpose.msra.mxu0 0
        %2578 = vmatprep.subr.bf16.mxu0 0
        %2579 = vmatpush2.bf16.xpose.msra.mxu0 0
        %2580 = vmatprep.mubr.bf16.mxu0 0
        %2581 = vmatmul.mubr.bf16.gmra.mxu0 %v2543
        %v2582 = vpop.f32.mrf.mxu0
        %v2583 = vadd.f32 0.0, %v2582
        %v2584 = vpop.f32.mrf.mxu0
        %v2585 = vpop.f32.mrf.mxu0
        %v2586 = vadd.f32 0.0, %v2585
        %v2587 = vpop.f32.mrf.mxu0
        %2588 = vdwg.mxu0
        %v2589 = vsel %vm1655, %v2583, -inf
        %2590 = vmax.xlane.f32.xlu0 %v2589
        %v2591 = vpop.xlane.xlu0 %2590
        %v2592 = vsel %vm1659, %v2586, -inf
        %2593 = vmax.xlane.f32.xlu0 %v2592
        %v2594 = vpop.xlane.xlu0 %2593
        %v2595 = vsub.f32 %v2583, %v2591
        %v2596 = vsub.f32 %v2586, %v2594
        %v2597 = vmul.f32 %v2595, 1.442695
        %v2598 = vpow.pop %v2597
        %v2599 = vmul.f32 %v2596, 1.442695
        %v2600 = vpow.pop %v2599
        %v2601 = vsel %vm1655, %v2598, 0.0
        %2602 = vadd.xlane.f32.xlu0 %v2601
        %v2603 = vpop.xlane.xlu0 %2602
        %v2604 = vsel %vm1659, %v2600, 0.0
        %2605 = vadd.xlane.f32.xlu0 %v2604
        %v2606 = vpop.xlane.xlu0 %2605
        %v2607 = vrcp.pop %v2603
        %v2608 = vrcp.pop %v2606
        %v2609 = vmul.f32 %v2598, %v2607
        %v2610 = vmul.f32 %v2600, %v2608
        %v2611 = vpack.c.bf16 %v2610, %v2609
        %2612 = vrot.lane.b32.xlu0 %v2148, 40
        %v2613 = vpop.permute.xlu0 %2612
        %v2615 = vsel %vm1655, %v2611, 0
        %v2618 = vand.u32 %v2613, %v1688
        %2620 = vmatprep.subr.bf16.mxu0 0
        %2621 = vmatpush1.bf16.msra.mxu0 0
        %2622 = vmatprep.subr.bf16.mxu0 0
        %2623 = vmatpush1.bf16.msra.mxu0 0
        %2624 = vmatprep.subr.bf16.mxu0 0
        %2625 = vmatpush1.bf16.msra.mxu0 0
        %2626 = vmatprep.subr.bf16.mxu0 0
        %2627 = vmatpush1.bf16.msra.mxu0 0
        %2628 = vmatprep.subr.bf16.mxu0 0
        %2629 = vmatpush1.bf16.msra.mxu0 0
        %2630 = vmatprep.subr.bf16.mxu0 0
        %2631 = vmatpush1.bf16.msra.mxu0 0
        %2632 = vmatprep.subr.bf16.mxu0 0
        %2633 = vmatpush1.bf16.msra.mxu0 0
        %2634 = vmatprep.subr.bf16.mxu0 0
        %2635 = vmatpush1.bf16.msra.mxu0 %v2618
        %2636 = vmatprep.subr.bf16.mxu0 0
        %2637 = vmatpush2.bf16.msra.mxu0 0
        %2638 = vmatprep.subr.bf16.mxu0 0
        %2639 = vmatpush2.bf16.msra.mxu0 0
        %2640 = vmatprep.subr.bf16.mxu0 0
        %2641 = vmatpush2.bf16.msra.mxu0 0
        %2642 = vmatprep.subr.bf16.mxu0 0
        %2643 = vmatpush2.bf16.msra.mxu0 0
        %2644 = vmatprep.subr.bf16.mxu0 0
        %2645 = vmatpush2.bf16.msra.mxu0 0
        %2646 = vmatprep.subr.bf16.mxu0 0
        %2647 = vmatpush2.bf16.msra.mxu0 0
        %2648 = vmatprep.subr.bf16.mxu0 0
        %2649 = vmatpush2.bf16.msra.mxu0 0
        %2650 = vmatprep.subr.bf16.mxu0 0
        %2651 = vmatpush2.bf16.msra.mxu0 0
        %2652 = vmatprep.mubr.bf16.mxu0 0
        %2653 = vmatmul.mubr.bf16.gmra.mxu0 %v2615
        %v2654 = vpop.f32.mrf.mxu0
        %v2655 = vadd.f32 0.0, %v2654
        %v2656 = vpop.f32.mrf.mxu0
        %v2657 = vpop.f32.mrf.mxu0
        %v2658 = vadd.f32 0.0, %v2657
        %v2659 = vpop.f32.mrf.mxu0
        %2660 = vdwg.mxu0
        %2663 = vrot.lane.b32.xlu0 %v2655, 24
        %v2664 = vpop.permute.xlu0 %2663
        %2665 = vrot.lane.b32.xlu0 %v2658, 24
        %v2666 = vpop.permute.xlu0 %2665
        %2669 = vst.msk [vmem:[#allocation4 + $0x9] sm:$0xff] %vm2137, %v2664
        %2670 = vst.msk [vmem:[#allocation4 + $0x11] sm:$0x1] %vm2139, %v2666
        %v2671 = vld [vmem:[#allocation4] sm:$0xff]
        %v2672 = vld [vmem:[#allocation4 + $0x8] sm:$0xff]
        %v2673 = vld [vmem:[#allocation4 + $0x10] sm:$0x3]
        %v2674 = vpack.c.bf16 %v2672, %v2671
        %v2675 = vpack.c.bf16 %v2673, %v2673
        %v2676 = vld [vmem:[%s926] sm:$0xf]
        %v2677 = vld [vmem:[%s926 + $0x4] sm:$0xf]
        %v2678 = vld [vmem:[%s926 + $0x8] sm:$0xf]
        %v2679 = vld [vmem:[%s926 + $0xc] sm:$0xf]
        %v2680 = vld [vmem:[%s929] sm:$0x1]
        %v2682 = vlaneseq
        %v2683 = vshrl.u32 %v2682, 7
        %v2684 = vsub.s32 0, %v2683
        %v2685 = vrot.slane %v2680, %v2684
        %v2691 = vunpack.c.l.b16 %v2676
        %v2692 = vunpack.c.l.b16 %v2677
        %v2693 = vunpack.c.l.b16 %v2678
        %v2694 = vunpack.c.l.b16 %v2679
        %v2695 = vpack.c.b16 %v2692, %v2691
        %v2696 = vpack.c.b16 %v2694, %v2693
        %v2700 = vsel %vm1548, %v2674, 0
        %v2703 = vsel %vm1548, %v2675, 0
        %2705 = vmatprep.subr.bf16.mxu0 0
        %2706 = vmatpush1.bf16.msra.mxu0 0
        %2707 = vmatprep.subr.bf16.mxu0 0
        %2708 = vmatpush1.bf16.msra.mxu0 0
        %2709 = vmatprep.subr.bf16.mxu0 0
        %2710 = vmatpush1.bf16.msra.mxu0 0
        %2711 = vmatprep.subr.bf16.mxu0 0
        %2712 = vmatpush1.bf16.msra.mxu0 0
        %2713 = vmatprep.subr.bf16.mxu0 0
        %2714 = vmatpush1.bf16.msra.mxu0 0
        %2715 = vmatprep.subr.bf16.mxu0 0
        %2716 = vmatpush1.bf16.msra.mxu0 0
        %2717 = vmatprep.subr.bf16.mxu0 0
        %2718 = vmatpush1.bf16.msra.mxu0 %v2696
        %2719 = vmatprep.subr.bf16.mxu0 0
        %2720 = vmatpush1.bf16.msra.mxu0 %v2695
        %2721 = vmatprep.subr.bf16.mxu0 0
        %2722 = vmatpush2.bf16.msra.mxu0 0
        %2723 = vmatprep.subr.bf16.mxu0 0
        %2724 = vmatpush2.bf16.msra.mxu0 0
        %2725 = vmatprep.subr.bf16.mxu0 0
        %2726 = vmatpush2.bf16.msra.mxu0 0
        %2727 = vmatprep.subr.bf16.mxu0 0
        %2728 = vmatpush2.bf16.msra.mxu0 0
        %2729 = vmatprep.subr.bf16.mxu0 0
        %2730 = vmatpush2.bf16.msra.mxu0 0
        %2731 = vmatprep.subr.bf16.mxu0 0
        %2732 = vmatpush2.bf16.msra.mxu0 0
        %2733 = vmatprep.subr.bf16.mxu0 0
        %2734 = vmatpush2.bf16.msra.mxu0 0
        %2735 = vmatprep.subr.bf16.mxu0 0
        %2736 = vmatpush2.bf16.msra.mxu0 0
        %2737 = vmatprep.mubr.bf16.mxu0 0
        %2738 = vmatmul.mubr.bf16.gmra.mxu0 %v2700
        %v2739 = vpop.f32.mrf.mxu0
        %v2740 = vadd.f32 %v2685, %v2739
        %v2741 = vpop.f32.mrf.mxu0
        %v2742 = vpop.f32.mrf.mxu0
        %v2743 = vadd.f32 %v2685, %v2742
        %v2744 = vpop.f32.mrf.mxu0
        %2745 = vmatprep.mubr.bf16.mxu0 0
        %2746 = vmatmul.mubr.bf16.gmra.mxu0 %v2703
        %v2747 = vpop.f32.mrf.mxu0
        %v2748 = vadd.f32 %v2685, %v2747
        %v2749 = vpop.f32.mrf.mxu0
        %v2750 = vpop.f32.mrf.mxu0
        %v2751 = vpop.f32.mrf.mxu0
        %2752 = vdwg.mxu0
        %v2753 = vadd.f32 %v1511, %v2740
        %v2754 = vadd.f32 %v1512, %v2743
        %v2755 = vadd.f32 %v1513, %v2748
        %v2756 = vld [vmem:[%s932] sm:$0x1]
        %v2757 = vld [vmem:[%s935] sm:$0x1]
        %v2758 = vsel %vm1548, %v2753, 0.0
        %2759 = vadd.xlane.f32.xlu0 %v2758
        %v2760 = vpop.xlane.xlu0 %2759
        %v2761 = vsel %vm1548, %v2754, 0.0
        %2762 = vadd.xlane.f32.xlu0 %v2761
        %v2763 = vpop.xlane.xlu0 %2762
        %vm2764 = vcmask 254976
        %v2765 = vsel %vm2764, %v2755, 0.0
        %2766 = vadd.xlane.f32.xlu0 %v2765
        %v2767 = vpop.xlane.xlu0 %2766
        %v2768 = vrcp.pop 32.0
        %v2769 = vmul.f32 %v2760, %v2768
        %v2770 = vmul.f32 %v2763, %v2768
        %v2771 = vmul.f32 %v2767, %v2768
        %v2772 = vsub.f32 %v2753, %v2769
        %v2773 = vsub.f32 %v2754, %v2770
        %v2774 = vsub.f32 %v2755, %v2771
        %v2775 = vmul.f32 %v2772, %v2772
        %v2776 = vmul.f32 %v2773, %v2773
        %v2777 = vmul.f32 %v2774, %v2774
        %v2778 = vsel %vm1548, %v2775, 0.0
        %2779 = vadd.xlane.f32.xlu0 %v2778
        %v2780 = vpop.xlane.xlu0 %2779
        %v2781 = vsel %vm1548, %v2776, 0.0
        %2782 = vadd.xlane.f32.xlu0 %v2781
        %v2783 = vpop.xlane.xlu0 %2782
        %v2784 = vsel %vm2764, %v2777, 0.0
        %2785 = vadd.xlane.f32.xlu0 %v2784
        %v2786 = vpop.xlane.xlu0 %2785
        %v2787 = vmul.f32 %v2780, %v2768
        %v2788 = vmul.f32 %v2783, %v2768
        %v2789 = vmul.f32 %v2786, %v2768
        %v2790 = vadd.f32 %v2787, 1e-05
        %v2791 = vadd.f32 %v2788, 1e-05
        %v2792 = vadd.f32 %v2789, 1e-05
        %v2793 = vrsqrt.pop %v2790
        %v2794 = vrsqrt.pop %v2791
        %v2795 = vrsqrt.pop %v2792
        %v2796 = vmul.f32 %v2772, %v2793
        %v2797 = vmul.f32 %v2773, %v2794
        %v2798 = vmul.f32 %v2774, %v2795
        %v2800 = vlaneseq
        %v2801 = vshrl.u32 %v2800, 7
        %v2802 = vsub.s32 0, %v2801
        %v2803 = vrot.slane %v2756, %v2802
        %v2805 = vmul.f32 %v2796, %v2803
        %v2806 = vmul.f32 %v2797, %v2803
        %v2807 = vmul.f32 %v2798, %v2803
        %v2809 = vlaneseq
        %v2810 = vshrl.u32 %v2809, 7
        %v2811 = vsub.s32 0, %v2810
        %v2812 = vrot.slane %v2757, %v2811
        %v2814 = vadd.f32 %v2805, %v2812
        %v2815 = vadd.f32 %v2806, %v2812
        %v2816 = vadd.f32 %v2807, %v2812
        %v2817 = vpack.c.bf16 %v2815, %v2814
        %v2818 = vpack.c.bf16 %v2816, %v2816
        %v2819 = vld [vmem:[%s940] sm:$0xf]
        %v2820 = vld [vmem:[%s940 + $0x4] sm:$0xf]
        %v2821 = vld [vmem:[%s940 + $0x8] sm:$0xf]
        %v2822 = vld [vmem:[%s940 + $0xc] sm:$0xf]
        %v2823 = vld [vmem:[%s943] sm:$0x1]
        %v2825 = vlaneseq
        %v2826 = vshrl.u32 %v2825, 7
        %v2827 = vsub.s32 0, %v2826
        %v2828 = vrot.slane %v2823, %v2827
        %v2834 = vunpack.c.l.b16 %v2819
        %v2835 = vunpack.c.l.b16 %v2820
        %v2836 = vunpack.c.l.b16 %v2821
        %v2837 = vunpack.c.l.b16 %v2822
        %v2838 = vpack.c.b16 %v2835, %v2834
        %v2839 = vpack.c.b16 %v2837, %v2836
        %v2843 = vsel %vm1548, %v2817, 0
        %v2846 = vsel %vm1548, %v2818, 0
        %2848 = vmatprep.subr.bf16.mxu0 0
        %2849 = vmatpush1.bf16.msra.mxu0 0
        %2850 = vmatprep.subr.bf16.mxu0 0
        %2851 = vmatpush1.bf16.msra.mxu0 0
        %2852 = vmatprep.subr.bf16.mxu0 0
        %2853 = vmatpush1.bf16.msra.mxu0 0
        %2854 = vmatprep.subr.bf16.mxu0 0
        %2855 = vmatpush1.bf16.msra.mxu0 0
        %2856 = vmatprep.subr.bf16.mxu0 0
        %2857 = vmatpush1.bf16.msra.mxu0 0
        %2858 = vmatprep.subr.bf16.mxu0 0
        %2859 = vmatpush1.bf16.msra.mxu0 0
        %2860 = vmatprep.subr.bf16.mxu0 0
        %2861 = vmatpush1.bf16.msra.mxu0 %v2839
        %2862 = vmatprep.subr.bf16.mxu0 0
        %2863 = vmatpush1.bf16.msra.mxu0 %v2838
        %2864 = vmatprep.subr.bf16.mxu0 0
        %2865 = vmatpush2.bf16.msra.mxu0 0
        %2866 = vmatprep.subr.bf16.mxu0 0
        %2867 = vmatpush2.bf16.msra.mxu0 0
        %2868 = vmatprep.subr.bf16.mxu0 0
        %2869 = vmatpush2.bf16.msra.mxu0 0
        %2870 = vmatprep.subr.bf16.mxu0 0
        %2871 = vmatpush2.bf16.msra.mxu0 0
        %2872 = vmatprep.subr.bf16.mxu0 0
        %2873 = vmatpush2.bf16.msra.mxu0 0
        %2874 = vmatprep.subr.bf16.mxu0 0
        %2875 = vmatpush2.bf16.msra.mxu0 0
        %2876 = vmatprep.subr.bf16.mxu0 0
        %2877 = vmatpush2.bf16.msra.mxu0 0
        %2878 = vmatprep.subr.bf16.mxu0 0
        %2879 = vmatpush2.bf16.msra.mxu0 0
        %2880 = vmatprep.mubr.bf16.mxu0 0
        %2881 = vmatmul.mubr.bf16.gmra.mxu0 %v2843
        %v2882 = vpop.f32.mrf.mxu0
        %v2883 = vadd.f32 %v2828, %v2882
        %v2884 = vpop.f32.mrf.mxu0
        %v2885 = vpop.f32.mrf.mxu0
        %v2886 = vadd.f32 %v2828, %v2885
        %v2887 = vpop.f32.mrf.mxu0
        %2888 = vmatprep.mubr.bf16.mxu0 0
        %2889 = vmatmul.mubr.bf16.gmra.mxu0 %v2846
        %v2890 = vpop.f32.mrf.mxu0
        %v2891 = vadd.f32 %v2828, %v2890
        %v2892 = vpop.f32.mrf.mxu0
        %v2893 = vpop.f32.mrf.mxu0
        %v2894 = vpop.f32.mrf.mxu0
        %2895 = vdwg.mxu0
        %v2896 = vmax.f32 %v2883, 0.0
        %v2897 = vmax.f32 %v2886, 0.0
        %v2898 = vmax.f32 %v2891, 0.0
        %v2899 = vpack.c.bf16 %v2897, %v2896
        %v2900 = vpack.c.bf16 %v2898, %v2898
        %v2901 = vld [vmem:[%s948] sm:$0xf]
        %v2902 = vld [vmem:[%s948 + $0x4] sm:$0xf]
        %v2903 = vld [vmem:[%s948 + $0x8] sm:$0xf]
        %v2904 = vld [vmem:[%s948 + $0xc] sm:$0xf]
        %v2905 = vld [vmem:[%s948 + $0x10] sm:$0xf]
        %v2906 = vld [vmem:[%s948 + $0x14] sm:$0xf]
        %v2907 = vld [vmem:[%s948 + $0x18] sm:$0xf]
        %v2908 = vld [vmem:[%s948 + $0x1c] sm:$0xf]
        %v2909 = vld [vmem:[%s951] sm:$0x1]
        %v2911 = vlaneseq
        %v2912 = vshrl.u32 %v2911, 7
        %v2913 = vsub.s32 0, %v2912
        %v2914 = vrot.slane %v2909, %v2913
        %v2924 = vunpack.c.l.b16 %v2901
        %v2925 = vunpack.c.l.b16 %v2902
        %v2926 = vunpack.c.l.b16 %v2903
        %v2927 = vunpack.c.l.b16 %v2904
        %v2928 = vunpack.c.l.b16 %v2905
        %v2929 = vunpack.c.l.b16 %v2906
        %v2930 = vunpack.c.l.b16 %v2907
        %v2931 = vunpack.c.l.b16 %v2908
        %v2932 = vpack.c.b16 %v2925, %v2924
        %v2933 = vpack.c.b16 %v2927, %v2926
        %v2934 = vpack.c.b16 %v2929, %v2928
        %v2935 = vpack.c.b16 %v2931, %v2930
        %vm2940 = vcmask 523264
        %v2942 = vsel %vm2940, %v2899, 0
        %v2945 = vsel %vm2940, %v2900, 0
        %2947 = vmatprep.subr.bf16.mxu0 0
        %2948 = vmatpush1.bf16.msra.mxu0 0
        %2949 = vmatprep.subr.bf16.mxu0 0
        %2950 = vmatpush1.bf16.msra.mxu0 0
        %2951 = vmatprep.subr.bf16.mxu0 0
        %2952 = vmatpush1.bf16.msra.mxu0 0
        %2953 = vmatprep.subr.bf16.mxu0 0
        %2954 = vmatpush1.bf16.msra.mxu0 0
        %2955 = vmatprep.subr.bf16.mxu0 0
        %2956 = vmatpush1.bf16.msra.mxu0 %v2935
        %2957 = vmatprep.subr.bf16.mxu0 0
        %2958 = vmatpush1.bf16.msra.mxu0 %v2934
        %2959 = vmatprep.subr.bf16.mxu0 0
        %2960 = vmatpush1.bf16.msra.mxu0 %v2933
        %2961 = vmatprep.subr.bf16.mxu0 0
        %2962 = vmatpush1.bf16.msra.mxu0 %v2932
        %2963 = vmatprep.subr.bf16.mxu0 0
        %2964 = vmatpush2.bf16.msra.mxu0 0
        %2965 = vmatprep.subr.bf16.mxu0 0
        %2966 = vmatpush2.bf16.msra.mxu0 0
        %2967 = vmatprep.subr.bf16.mxu0 0
        %2968 = vmatpush2.bf16.msra.mxu0 0
        %2969 = vmatprep.subr.bf16.mxu0 0
        %2970 = vmatpush2.bf16.msra.mxu0 0
        %2971 = vmatprep.subr.bf16.mxu0 0
        %2972 = vmatpush2.bf16.msra.mxu0 0
        %2973 = vmatprep.subr.bf16.mxu0 0
        %2974 = vmatpush2.bf16.msra.mxu0 0
        %2975 = vmatprep.subr.bf16.mxu0 0
        %2976 = vmatpush2.bf16.msra.mxu0 0
        %2977 = vmatprep.subr.bf16.mxu0 0
        %2978 = vmatpush2.bf16.msra.mxu0 0
        %2979 = vmatprep.mubr.bf16.mxu0 0
        %2980 = vmatmul.mubr.bf16.gmra.mxu0 %v2942
        %v2981 = vpop.f32.mrf.mxu0
        %v2982 = vadd.f32 %v2914, %v2981
        %v2983 = vpop.f32.mrf.mxu0
        %v2984 = vpop.f32.mrf.mxu0
        %v2985 = vadd.f32 %v2914, %v2984
        %v2986 = vpop.f32.mrf.mxu0
        %2987 = vmatprep.mubr.bf16.mxu0 0
        %2988 = vmatmul.mubr.bf16.gmra.mxu0 %v2945
        %v2989 = vpop.f32.mrf.mxu0
        %v2990 = vadd.f32 %v2914, %v2989
        %v2991 = vpop.f32.mrf.mxu0
        %v2992 = vpop.f32.mrf.mxu0
        %v2993 = vpop.f32.mrf.mxu0
        %2994 = vdwg.mxu0
        %v2995 = vadd.f32 %v2814, %v2982
        %v2996 = vadd.f32 %v2815, %v2985
        %v2997 = vadd.f32 %v2816, %v2990
        %v2998 = vld [vmem:[%s954] sm:$0x1]
        %v2999 = vld [vmem:[%s957] sm:$0x1]
        %v3000 = vsel %vm1548, %v2995, 0.0
        %3001 = vadd.xlane.f32.xlu0 %v3000
        %v3002 = vpop.xlane.xlu0 %3001
        %v3003 = vsel %vm1548, %v2996, 0.0
        %3004 = vadd.xlane.f32.xlu0 %v3003
        %v3005 = vpop.xlane.xlu0 %3004
        %v3006 = vsel %vm2764, %v2997, 0.0
        %3007 = vadd.xlane.f32.xlu0 %v3006
        %v3008 = vpop.xlane.xlu0 %3007
        %v3009 = vmul.f32 %v3002, %v2768
        %v3010 = vmul.f32 %v3005, %v2768
        %v3011 = vmul.f32 %v3008, %v2768
        %v3012 = vsub.f32 %v2995, %v3009
        %v3013 = vsub.f32 %v2996, %v3010
        %v3014 = vsub.f32 %v2997, %v3011
        %v3015 = vmul.f32 %v3012, %v3012
        %v3016 = vmul.f32 %v3013, %v3013
        %v3017 = vmul.f32 %v3014, %v3014
        %v3018 = vsel %vm1548, %v3015, 0.0
        %3019 = vadd.xlane.f32.xlu0 %v3018
        %v3020 = vpop.xlane.xlu0 %3019
        %v3021 = vsel %vm1548, %v3016, 0.0
        %3022 = vadd.xlane.f32.xlu0 %v3021
        %v3023 = vpop.xlane.xlu0 %3022
        %v3024 = vsel %vm2764, %v3017, 0.0
        %3025 = vadd.xlane.f32.xlu0 %v3024
        %v3026 = vpop.xlane.xlu0 %3025
        %v3027 = vmul.f32 %v3020, %v2768
        %v3028 = vmul.f32 %v3023, %v2768
        %v3029 = vmul.f32 %v3026, %v2768
        %v3030 = vadd.f32 %v3027, 1e-05
        %v3031 = vadd.f32 %v3028, 1e-05
        %v3032 = vadd.f32 %v3029, 1e-05
        %v3033 = vrsqrt.pop %v3030
        %v3034 = vrsqrt.pop %v3031
        %v3035 = vrsqrt.pop %v3032
        %v3036 = vmul.f32 %v3012, %v3033
        %v3037 = vmul.f32 %v3013, %v3034
        %v3038 = vmul.f32 %v3014, %v3035
        %v3040 = vlaneseq
        %v3041 = vshrl.u32 %v3040, 7
        %v3042 = vsub.s32 0, %v3041
        %v3043 = vrot.slane %v2998, %v3042
        %v3045 = vmul.f32 %v3036, %v3043
        %v3046 = vmul.f32 %v3037, %v3043
        %v3047 = vmul.f32 %v3038, %v3043
        %v3049 = vlaneseq
        %v3050 = vshrl.u32 %v3049, 7
        %v3051 = vsub.s32 0, %v3050
        %v3052 = vrot.slane %v2999, %v3051
        %v3054 = vadd.f32 %v3045, %v3052
        %v3055 = vadd.f32 %v3046, %v3052
        %v3056 = vadd.f32 %v3047, %v3052
        %v3057 = vpack.c.bf16 %v3055, %v3054
        %v3058 = vpack.c.bf16 %v3056, %v3056
        %3059 = vst.msk [vmem:[#allocation2] sm:$0xff] %vm1548, %v3054
        %3060 = vst.msk [vmem:[#allocation2 + $0x8] sm:$0xff] %vm1548, %v3055
        %3061 = vst.msk [vmem:[#allocation2 + $0x10] sm:$0x3] %vm2764, %v3056
        %v3064 = vunpack.c.l.b16 %v3057
        %v3065 = vunpack.c.h.b16 %v3057
        %v3066 = vunpack.c.l.b16 %v3058
        %v3067 = vpack.c.b16 %v3064, %v3064
        %v3068 = vpack.c.b16 %v3065, %v3065
        %v3069 = vpack.c.b16 %v3066, %v3066
        %vm3073 = vcmask 257024
        %3074 = vst.msk [vmem:[#allocation3] sm:$0xf] %vm3073, %v3067
        %3075 = vst.msk [vmem:[#allocation3 + $0x4] sm:$0xf] %vm3073, %v3068
        %vm3076 = vcmask 253952
        %3077 = vst.msk [vmem:[#allocation3 + $0x8] sm:$0x1] %vm3076, %v3069
        %3078 = vst.msk [vmem:[%s962] sm:$0xf] %vm3073, %v3067
        %3079 = vst.msk [vmem:[%s962 + $0x4] sm:$0xf] %vm3073, %v3068
        %3080 = vst.msk [vmem:[%s962 + $0x8] sm:$0x1] %vm3076, %v3069
        %p3081 = scmp.eq.s32.totalorder %s39, 1
        // Predicated region
        $region125: #{vit_forward.1} parent=119 // pred_check
          %p3082 = pneg %p3081
        $region126: #{vit_forward.1} parent=119 // pred_check_branch
          %3084 = sbr.rel (%p3082) target = $region128
        $region127: #{vit_forward.1} parent=119 // pred_region
          %vm3085 = vcmask 1040384
          %v3086 = vsel %vm3085, %v3054, %v3055
          %v3087 = vld [vmem:[%s21] sm:$0x1]
          %v3088 = vld [vmem:[%s22] sm:$0x1]
          %v3089 = vsel %vm2764, %v3086, 0.0
          %3090 = vadd.xlane.f32.xlu0 %v3089
          %v3091 = vpop.xlane.xlu0 %3090
          %v3092 = vmul.f32 %v3091, %v2768
          %v3093 = vsub.f32 %v3086, %v3092
          %v3094 = vmul.f32 %v3093, %v3093
          %v3095 = vsel %vm2764, %v3094, 0.0
          %3096 = vadd.xlane.f32.xlu0 %v3095
          %v3097 = vpop.xlane.xlu0 %3096
          %v3098 = vmul.f32 %v3097, %v2768
          %v3099 = vadd.f32 %v3098, 1e-05
          %v3100 = vrsqrt.pop %v3099
          %v3101 = vmul.f32 %v3093, %v3100
          %v3103 = vlaneseq
          %v3104 = vshrl.u32 %v3103, 7
          %v3105 = vsub.s32 0, %v3104
          %v3106 = vrot.slane %v3087, %v3105
          %v3108 = vmul.f32 %v3101, %v3106
          %v3110 = vlaneseq
          %v3111 = vshrl.u32 %v3110, 7
          %v3112 = vsub.s32 0, %v3111
          %v3113 = vrot.slane %v3088, %v3112
          %v3115 = vadd.f32 %v3108, %v3113
          %v3116 = vpack.c.bf16 %v3115, %v3115
          %v3117 = vld [vmem:[%s23] sm:$0xf]
          %v3118 = vld [vmem:[%s23 + $0x4] sm:$0xf]
          %v3119 = vld [vmem:[%s23 + $0x8] sm:$0xf]
          %v3120 = vld [vmem:[%s23 + $0xc] sm:$0xf]
          %v3121 = vld [vmem:[%s24] sm:$0x1]
          %v3123 = vlaneseq
          %v3124 = vshrl.u32 %v3123, 7
          %v3125 = vsub.s32 0, %v3124
          %v3126 = vrot.slane %v3121, %v3125
          %v3132 = vunpack.c.l.b16 %v3117
          %v3133 = vunpack.c.l.b16 %v3118
          %v3134 = vunpack.c.l.b16 %v3119
          %v3135 = vunpack.c.l.b16 %v3120
          %v3136 = vpack.c.b16 %v3133, %v3132
          %v3137 = vpack.c.b16 %v3135, %v3134
          %v3141 = vsel %vm1548, %v3116, 0
          %3143 = vmatprep.subr.bf16.mxu0 0
          %3144 = vmatpush1.bf16.msra.mxu0 0
          %3145 = vmatprep.subr.bf16.mxu0 0
          %3146 = vmatpush1.bf16.msra.mxu0 0
          %3147 = vmatprep.subr.bf16.mxu0 0
          %3148 = vmatpush1.bf16.msra.mxu0 0
          %3149 = vmatprep.subr.bf16.mxu0 0
          %3150 = vmatpush1.bf16.msra.mxu0 0
          %3151 = vmatprep.subr.bf16.mxu0 0
          %3152 = vmatpush1.bf16.msra.mxu0 0
          %3153 = vmatprep.subr.bf16.mxu0 0
          %3154 = vmatpush1.bf16.msra.mxu0 0
          %3155 = vmatprep.subr.bf16.mxu0 0
          %3156 = vmatpush1.bf16.msra.mxu0 %v3137
          %3157 = vmatprep.subr.bf16.mxu0 0
          %3158 = vmatpush1.bf16.msra.mxu0 %v3136
          %3159 = vmatprep.subr.bf16.mxu0 0
          %3160 = vmatpush2.bf16.msra.mxu0 0
          %3161 = vmatprep.subr.bf16.mxu0 0
          %3162 = vmatpush2.bf16.msra.mxu0 0
          %3163 = vmatprep.subr.bf16.mxu0 0
          %3164 = vmatpush2.bf16.msra.mxu0 0
          %3165 = vmatprep.subr.bf16.mxu0 0
          %3166 = vmatpush2.bf16.msra.mxu0 0
          %3167 = vmatprep.subr.bf16.mxu0 0
          %3168 = vmatpush2.bf16.msra.mxu0 0
          %3169 = vmatprep.subr.bf16.mxu0 0
          %3170 = vmatpush2.bf16.msra.mxu0 0
          %3171 = vmatprep.subr.bf16.mxu0 0
          %3172 = vmatpush2.bf16.msra.mxu0 0
          %3173 = vmatprep.subr.bf16.mxu0 0
          %3174 = vmatpush2.bf16.msra.mxu0 0
          %3175 = vmatprep.mubr.bf16.mxu0 0
          %3176 = vmatmul.mubr.bf16.gmra.mxu0 %v3141
          %v3177 = vpop.f32.mrf.mxu0
          %v3178 = vadd.f32 %v3126, %v3177
          %v3179 = vpop.f32.mrf.mxu0
          %v3180 = vpop.f32.mrf.mxu0
          %v3181 = vpop.f32.mrf.mxu0
          %3182 = vdwg.mxu0
          %vm3183 = vcmask 33792
          %3184 = vst.msk [vmem:[#allocation5] sm:$0x3] %vm3183, %v3178
        $region128: #{vit_forward.1} parent=119 // pred_fallthru
          _
        %p3185 = scmp.lt.s32.totalorder %s39, 1
        %s3186 = scalar_select %p3185, %s39, 1
        %s3187 = smul.addr %s3186, 3
        %s3188 = smul.addr %s3187, 4
        %s3189 = scalar_lea.vmem %s25, %s3188
        // Predicated region
        $region129: #{vit_forward.1} parent=119 // pred_check
          %p3190 = pneg %p642
        $region130: #{vit_forward.1} parent=119 // pred_check_branch
          %3192 = sbr.rel (%p3190) target = $region132
        $region131: #{vit_forward.1} parent=119 // pred_region
          _
        $region132: #{vit_forward.1} parent=119 // pred_fallthru
          _
        // Predicated region
        $region133: #{vit_forward.1} parent=119 // pred_check
          %p3193 = pneg %p663
        $region134: #{vit_forward.1} parent=119 // pred_check_branch
          %3195 = sbr.rel (%p3193) target = $region136
        $region135: #{vit_forward.1} parent=119 // pred_region
          %s3197 = ssub.s32 32, 32
          %3198 = vsyncadd [#allocation6], %s3197
          %s3200 = sshll.u32 [#allocation5], 4
          %s3201 = int_to_ptr.vmem [resolvable:$true] %s3200
          %3203 = dma.vmem_to_hbm [thread:$0]  %s3201, 32, %s26, [#allocation6]
        $region136: #{vit_forward.1} parent=119 // pred_fallthru
          _
        // Predicated region
        $region137: #{vit_forward.1} parent=119 // pred_check
          %p3204 = pneg %p663
        $region138: #{vit_forward.1} parent=119 // pred_check_branch
          %3206 = sbr.rel (%p3204) target = $region140
        $region139: #{vit_forward.1} parent=119 // pred_region
          %3207 = dma.done [#allocation6], 32
        $region140: #{vit_forward.1} parent=119 // pred_fallthru
          _
      $region120: #{vit_forward.1} parent=5 // pred_fallthru
        _
      %p3208 = scmp.le.s32.totalorder 2, %s34
      // Predicated region
      $region141: #{vit_forward.1} parent=5 // pred_check
        %p3209 = pneg %p3208
      $region142: #{vit_forward.1} parent=5 // pred_check_branch
        %3211 = sbr.rel (%p3209) target = $region144
      $region143: #{vit_forward.1} parent=5 // pred_region
        %s3212 = ssub.s32 %s34, 2
        // Predicated region
        $region145: #{vit_forward.1} parent=143 // pred_check
          %p3213 = pneg %p648
        $region146: #{vit_forward.1} parent=143 // pred_check_branch
          %3215 = sbr.rel (%p3213) target = $region148
        $region147: #{vit_forward.1} parent=143 // pred_region
          %p3216 = scmp.lt.s32.totalorder %s40, 1
          %s3217 = scalar_select %p3216, %s40, 1
          %s3218 = smul.addr %s3217, 3
          %s3219 = smul.addr %s3218, 4
          %s3220 = scalar_lea.vmem %s25, %s3219
        $region148: #{vit_forward.1} parent=143 // pred_fallthru
          _
      $region144: #{vit_forward.1} parent=5 // pred_fallthru
        _
    $region6: #{vit_forward.1} parent=1 // loop_footer
      %s38 = sadd.s32 1, %s34
    $region7: #{vit_forward.1} parent=1 // loop_footer_branch
      %33 = sbr.rel target = $region3
    $region8: #{vit_forward.1} parent=1 // loop_exit
      _
    %3221 = vsyncpa [#allocation6], 1
    %s3222 = scalar_lea.sflag [#allocation6], 1
    %3223 = vsyncpa %s3222, 1

</llo_original>
